<compile_context>
chip_gen: v7x
topology: tpu7x:2x2x1
jax: 0.10.0
libtpu: 0.0.40
codegen_flags: <defaults>
</compile_context>

<pallas_src>
import jax
import jax.numpy as jnp
from jax import lax
from jax.experimental import pallas as pl
from jax.experimental.pallas import tpu as pltpu

N_EULER_STEPS = 16


def _state_predictor_kernel(state_ref, action_ref,
                            w1_ref, b1_ref, w2_ref, b2_ref,
                            w3_ref, b3_ref, w4_ref, b4_ref,
                            out_ref):
    B, S = state_ref.shape
    H = w2_ref.shape[1]

    state = state_ref[...]                                # (B, S) f32 Euler carry
    action = action_ref[...].astype(jnp.bfloat16)         # (B, A)

    # ---- one-time setup (executed once per grid step, off the serial chain) ----
    # Weights are loaded & cast to bf16 once; even at H=128 the bf16 weights are
    # only ~20 vregs, so holding them live across the unrolled loop does not spill.
    w1 = w1_ref[...]
    w1_s = w1[:S, :].astype(jnp.bfloat16)                 # layer-1 rows hit by state
    w1_a = w1[S:, :].astype(jnp.bfloat16)                 # layer-1 rows hit by action
    w2 = w2_ref[...].astype(jnp.bfloat16)
    w3 = w3_ref[...].astype(jnp.bfloat16)
    step = jnp.float32(1.0 / N_EULER_STEPS)
    w4s = (step * w4_ref[...]).astype(jnp.bfloat16)       # fold Euler step size

    # Loop-invariant action contribution to layer-1 pre-activation (includes b1).
    act_const = (jnp.dot(action, w1_a, preferred_element_type=jnp.float32)
                 + b1_ref[...])                            # (B, H) f32
    # Pre-broadcast remaining biases once.
    b2b = jnp.broadcast_to(b2_ref[...], (B, H))
    b3b = jnp.broadcast_to(b3_ref[...], (B, H))
    b4b = jnp.broadcast_to(step * b4_ref[...], (B, S))

    def body(_, next_state):
        # bf16 MXU inputs, f32 accumulation; tanh stays in f32.
        x = next_state.astype(jnp.bfloat16)
        h = jnp.tanh(jnp.dot(x, w1_s, preferred_element_type=jnp.float32)
                     + act_const)
        h = jnp.tanh(jnp.dot(h.astype(jnp.bfloat16), w2,
                             preferred_element_type=jnp.float32) + b2b)
        h = jnp.tanh(jnp.dot(h.astype(jnp.bfloat16), w3,
                             preferred_element_type=jnp.float32) + b3b)
        return (jnp.dot(h.astype(jnp.bfloat16), w4s,
                        preferred_element_type=jnp.float32) + b4b + next_state)

    next_state = lax.fori_loop(0, N_EULER_STEPS, body, state, unroll=True)
    out_ref[...] = next_state.astype(out_ref.dtype)


def state_predictor_forward(state, action, params, *, batch_tile=256):
    """state: (B, state_dim), action: (B, action_dim). Returns (B, state_dim)."""
    B, S = state.shape
    A = action.shape[1]

    # Batch-tiled parallel grid: lets the v7x megacore shard big batches across
    # both TensorCores and keeps per-step VMEM bounded. Small batches -> grid of 1.
    tb = batch_tile if (B > batch_tile and B % batch_tile == 0) else B
    grid = (B // tb,)

    batch_map = lambda i: (i, 0)
    rep_map = lambda i: (0, 0)   # weights/biases replicated to every batch tile

    in_specs = [
        pl.BlockSpec((tb, S), batch_map),
        pl.BlockSpec((tb, A), batch_map),
    ] + [pl.BlockSpec(p.shape, rep_map) for p in params]

    return pl.pallas_call(
        _state_predictor_kernel,
        out_shape=jax.ShapeDtypeStruct((B, S), jnp.float32),
        grid=grid,
        in_specs=in_specs,
        out_specs=pl.BlockSpec((tb, S), batch_map),
        compiler_params=pltpu.CompilerParams(
            dimension_semantics=("parallel",)),
    )(state, action, *params)


def init_params(key, state_dim, action_dim, hidden_dim=128):
    """Deterministic init matching the nn.Linear shapes; weights are (in, out)."""
    dims = [(state_dim + action_dim, hidden_dim),
            (hidden_dim, hidden_dim),
            (hidden_dim, hidden_dim),
            (hidden_dim, state_dim)]
    params = []
    for i, (fan_in, fan_out) in enumerate(dims):
        kw, kb, key = jax.random.split(jax.random.fold_in(key, i), 3)
        bound = 1.0 / jnp.sqrt(fan_in)
        w = jax.random.uniform(kw, (fan_in, fan_out), jnp.float32, -bound, bound)
        b = jax.random.uniform(kb, (1, fan_out), jnp.float32, -bound, bound)
        params += [w, b]
    return tuple(params)


def reference_forward(state, action, params):
    """Plain-JAX f32 reference mirroring the PyTorch forward."""
    w1, b1, w2, b2, w3, b3, w4, b4 = params
    step_size = 1.0 / N_EULER_STEPS

    def mlp(sa):
        h = jnp.tanh(sa @ w1 + b1)
        h = jnp.tanh(h @ w2 + b2)
        h = jnp.tanh(h @ w3 + b3)
        return h @ w4 + b4

    next_state = state
    sa = jnp.concatenate([state, action], axis=-1)
    for _ in range(N_EULER_STEPS):
        next_state = step_size * mlp(sa) + next_state
        sa = jnp.concatenate([next_state, action], axis=-1)
    return next_state


if __name__ == "__main__":
    batch = 8
    state_dim = 12
    action_dim = 4
    hidden_dim = 32

    key = jax.random.PRNGKey(0)
    ks, ka, kp = jax.random.split(key, 3)
    state = jax.random.normal(ks, (batch, state_dim), jnp.float32)
    action = jax.random.normal(ka, (batch, action_dim), jnp.float32)
    params = init_params(kp, state_dim, action_dim, hidden_dim)

    out = state_predictor_forward(state, action, params)
    out = jax.block_until_ready(out)

    ref = reference_forward(state, action, params)
    assert out.shape == (batch, state_dim)
    # Tolerance accounts for bf16 matmul inputs (f32 accumulation) compounding
    # over 16 chained Euler steps; typical deviation is ~1e-2.
    assert jnp.allclose(out, ref, atol=5e-2, rtol=5e-2), "mismatch vs reference"

    print("KERNEL_OK")
</pallas_src>

<mosaic_0001>
module attributes {stable_mosaic.version = 11 : i64} {
  func.func @_state_predictor_kernel(%arg0: i32, %arg1: memref<8x12xf32, #tpu.memory_space<vmem>>, %arg2: memref<8x4xf32, #tpu.memory_space<vmem>>, %arg3: memref<16x32xf32, #tpu.memory_space<vmem>>, %arg4: memref<1x32xf32, #tpu.memory_space<vmem>>, %arg5: memref<32x32xf32, #tpu.memory_space<vmem>>, %arg6: memref<1x32xf32, #tpu.memory_space<vmem>>, %arg7: memref<32x32xf32, #tpu.memory_space<vmem>>, %arg8: memref<1x32xf32, #tpu.memory_space<vmem>>, %arg9: memref<32x12xf32, #tpu.memory_space<vmem>>, %arg10: memref<1x12xf32, #tpu.memory_space<vmem>>, %arg11: memref<8x12xf32, #tpu.memory_space<vmem>>) attributes {dimension_semantics = [#tpu.dimension_semantics<parallel>], iteration_bounds = array<i64: 1>, scalar_prefetch = 0 : i64, scratch_operands = 0 : i64, tpu.core_type = #tpu.core_type<tc>, window_params = [{transform_indices = @transform_0, window_bounds = array<i64: 8, 12>}, {transform_indices = @transform_1, window_bounds = array<i64: 8, 4>}, {pipeline_mode = #tpu.pipeline_mode<synchronous>, transform_indices = @transform_2, window_bounds = array<i64: 16, 32>}, {pipeline_mode = #tpu.pipeline_mode<synchronous>, transform_indices = @transform_3, window_bounds = array<i64: 1, 32>}, {pipeline_mode = #tpu.pipeline_mode<synchronous>, transform_indices = @transform_4, window_bounds = array<i64: 32, 32>}, {pipeline_mode = #tpu.pipeline_mode<synchronous>, transform_indices = @transform_5, window_bounds = array<i64: 1, 32>}, {pipeline_mode = #tpu.pipeline_mode<synchronous>, transform_indices = @transform_6, window_bounds = array<i64: 32, 32>}, {pipeline_mode = #tpu.pipeline_mode<synchronous>, transform_indices = @transform_7, window_bounds = array<i64: 1, 32>}, {pipeline_mode = #tpu.pipeline_mode<synchronous>, transform_indices = @transform_8, window_bounds = array<i64: 32, 12>}, {pipeline_mode = #tpu.pipeline_mode<synchronous>, transform_indices = @transform_9, window_bounds = array<i64: 1, 12>}, {transform_indices = @transform_10, window_bounds = array<i64: 8, 12>}]} {
    %c0 = arith.constant 0 : index
    %c0_0 = arith.constant 0 : index
    %0 = vector.load %arg1[%c0, %c0_0] : memref<8x12xf32, #tpu.memory_space<vmem>>, vector<8x12xf32>
    %c0_1 = arith.constant 0 : index
    %c0_2 = arith.constant 0 : index
    %1 = vector.load %arg2[%c0_1, %c0_2] : memref<8x4xf32, #tpu.memory_space<vmem>>, vector<8x4xf32>
    %2 = arith.truncf %1 : vector<8x4xf32> to vector<8x4xbf16>
    %c0_3 = arith.constant 0 : index
    %c0_4 = arith.constant 0 : index
    %3 = vector.load %arg3[%c0_3, %c0_4] : memref<16x32xf32, #tpu.memory_space<vmem>>, vector<16x32xf32>
    %4 = vector.extract_strided_slice %3 {offsets = [0, 0], sizes = [12, 32], strides = [1, 1]} : vector<16x32xf32> to vector<12x32xf32>
    %5 = arith.truncf %4 : vector<12x32xf32> to vector<12x32xbf16>
    %6 = vector.extract_strided_slice %3 {offsets = [12, 0], sizes = [4, 32], strides = [1, 1]} : vector<16x32xf32> to vector<4x32xf32>
    %7 = arith.truncf %6 : vector<4x32xf32> to vector<4x32xbf16>
    %c0_5 = arith.constant 0 : index
    %c0_6 = arith.constant 0 : index
    %8 = vector.load %arg5[%c0_5, %c0_6] : memref<32x32xf32, #tpu.memory_space<vmem>>, vector<32x32xf32>
    %9 = arith.truncf %8 : vector<32x32xf32> to vector<32x32xbf16>
    %c0_7 = arith.constant 0 : index
    %c0_8 = arith.constant 0 : index
    %10 = vector.load %arg7[%c0_7, %c0_8] : memref<32x32xf32, #tpu.memory_space<vmem>>, vector<32x32xf32>
    %11 = arith.truncf %10 : vector<32x32xf32> to vector<32x32xbf16>
    %c0_9 = arith.constant 0 : index
    %c0_10 = arith.constant 0 : index
    %12 = vector.load %arg9[%c0_9, %c0_10] : memref<32x12xf32, #tpu.memory_space<vmem>>, vector<32x12xf32>
    %cst = arith.constant 6.250000e-02 : f32
    %13 = vector.broadcast %cst : f32 to vector<32x12xf32>
    %14 = arith.mulf %13, %12 : vector<32x12xf32>
    %15 = arith.truncf %14 : vector<32x12xf32> to vector<32x12xbf16>
    %cst_11 = arith.constant dense<0.000000e+00> : vector<8x32xf32>
    %16 = tpu.matmul %2, %7, %cst_11 {dimension_numbers = #tpu.dot_dimension_numbers<[1], [0], [0], [1], [0, 0, 1, 1], [], []>} : vector<8x4xbf16>, vector<4x32xbf16>, vector<8x32xf32> -> vector<8x32xf32>
    %c0_12 = arith.constant 0 : index
    %c0_13 = arith.constant 0 : index
    %17 = vector.load %arg4[%c0_12, %c0_13] : memref<1x32xf32, #tpu.memory_space<vmem>>, vector<1x32xf32>
    %18 = vector.broadcast %17 : vector<1x32xf32> to vector<8x32xf32>
    %19 = arith.addf %16, %18 : vector<8x32xf32>
    %c0_14 = arith.constant 0 : index
    %c0_15 = arith.constant 0 : index
    %20 = vector.load %arg6[%c0_14, %c0_15] : memref<1x32xf32, #tpu.memory_space<vmem>>, vector<1x32xf32>
    %21 = vector.shape_cast %20 : vector<1x32xf32> to vector<1x32xf32>
    %22 = vector.broadcast %21 : vector<1x32xf32> to vector<8x32xf32>
    %c0_16 = arith.constant 0 : index
    %c0_17 = arith.constant 0 : index
    %23 = vector.load %arg8[%c0_16, %c0_17] : memref<1x32xf32, #tpu.memory_space<vmem>>, vector<1x32xf32>
    %24 = vector.shape_cast %23 : vector<1x32xf32> to vector<1x32xf32>
    %25 = vector.broadcast %24 : vector<1x32xf32> to vector<8x32xf32>
    %c0_18 = arith.constant 0 : index
    %c0_19 = arith.constant 0 : index
    %26 = vector.load %arg10[%c0_18, %c0_19] : memref<1x12xf32, #tpu.memory_space<vmem>>, vector<1x12xf32>
    %cst_20 = arith.constant 6.250000e-02 : f32
    %27 = vector.broadcast %cst_20 : f32 to vector<1x12xf32>
    %28 = arith.mulf %27, %26 : vector<1x12xf32>
    %29 = vector.shape_cast %28 : vector<1x12xf32> to vector<1x12xf32>
    %30 = vector.broadcast %29 : vector<1x12xf32> to vector<8x12xf32>
    %c0_i32 = arith.constant 0 : i32
    %31 = arith.truncf %0 : vector<8x12xf32> to vector<8x12xbf16>
    %cst_21 = arith.constant dense<0.000000e+00> : vector<8x32xf32>
    %32 = tpu.matmul %31, %5, %cst_21 {dimension_numbers = #tpu.dot_dimension_numbers<[1], [0], [0], [1], [0, 0, 1, 1], [], []>} : vector<8x12xbf16>, vector<12x32xbf16>, vector<8x32xf32> -> vector<8x32xf32>
    %33 = arith.addf %32, %19 : vector<8x32xf32>
    %34 = math.tanh %33 : vector<8x32xf32>
    %35 = arith.truncf %34 : vector<8x32xf32> to vector<8x32xbf16>
    %cst_22 = arith.constant dense<0.000000e+00> : vector<8x32xf32>
    %36 = tpu.matmul %35, %9, %cst_22 {dimension_numbers = #tpu.dot_dimension_numbers<[1], [0], [0], [1], [0, 0, 1, 1], [], []>} : vector<8x32xbf16>, vector<32x32xbf16>, vector<8x32xf32> -> vector<8x32xf32>
    %37 = arith.addf %36, %22 : vector<8x32xf32>
    %38 = math.tanh %37 : vector<8x32xf32>
    %39 = arith.truncf %38 : vector<8x32xf32> to vector<8x32xbf16>
    %cst_23 = arith.constant dense<0.000000e+00> : vector<8x32xf32>
    %40 = tpu.matmul %39, %11, %cst_23 {dimension_numbers = #tpu.dot_dimension_numbers<[1], [0], [0], [1], [0, 0, 1, 1], [], []>} : vector<8x32xbf16>, vector<32x32xbf16>, vector<8x32xf32> -> vector<8x32xf32>
    %41 = arith.addf %40, %25 : vector<8x32xf32>
    %42 = math.tanh %41 : vector<8x32xf32>
    %43 = arith.truncf %42 : vector<8x32xf32> to vector<8x32xbf16>
    %cst_24 = arith.constant dense<0.000000e+00> : vector<8x12xf32>
    %44 = tpu.matmul %43, %15, %cst_24 {dimension_numbers = #tpu.dot_dimension_numbers<[1], [0], [0], [1], [0, 0, 1, 1], [], []>} : vector<8x32xbf16>, vector<32x12xbf16>, vector<8x12xf32> -> vector<8x12xf32>
    %45 = arith.addf %44, %30 : vector<8x12xf32>
    %46 = arith.addf %45, %0 : vector<8x12xf32>
    %c1_i32 = arith.constant 1 : i32
    %47 = arith.truncf %46 : vector<8x12xf32> to vector<8x12xbf16>
    %cst_25 = arith.constant dense<0.000000e+00> : vector<8x32xf32>
    %48 = tpu.matmul %47, %5, %cst_25 {dimension_numbers = #tpu.dot_dimension_numbers<[1], [0], [0], [1], [0, 0, 1, 1], [], []>} : vector<8x12xbf16>, vector<12x32xbf16>, vector<8x32xf32> -> vector<8x32xf32>
    %49 = arith.addf %48, %19 : vector<8x32xf32>
    %50 = math.tanh %49 : vector<8x32xf32>
    %51 = arith.truncf %50 : vector<8x32xf32> to vector<8x32xbf16>
    %cst_26 = arith.constant dense<0.000000e+00> : vector<8x32xf32>
    %52 = tpu.matmul %51, %9, %cst_26 {dimension_numbers = #tpu.dot_dimension_numbers<[1], [0], [0], [1], [0, 0, 1, 1], [], []>} : vector<8x32xbf16>, vector<32x32xbf16>, vector<8x32xf32> -> vector<8x32xf32>
    %53 = arith.addf %52, %22 : vector<8x32xf32>
    %54 = math.tanh %53 : vector<8x32xf32>
    %55 = arith.truncf %54 : vector<8x32xf32> to vector<8x32xbf16>
    %cst_27 = arith.constant dense<0.000000e+00> : vector<8x32xf32>
    %56 = tpu.matmul %55, %11, %cst_27 {dimension_numbers = #tpu.dot_dimension_numbers<[1], [0], [0], [1], [0, 0, 1, 1], [], []>} : vector<8x32xbf16>, vector<32x32xbf16>, vector<8x32xf32> -> vector<8x32xf32>
    %57 = arith.addf %56, %25 : vector<8x32xf32>
    %58 = math.tanh %57 : vector<8x32xf32>
    %59 = arith.truncf %58 : vector<8x32xf32> to vector<8x32xbf16>
    %cst_28 = arith.constant dense<0.000000e+00> : vector<8x12xf32>
    %60 = tpu.matmul %59, %15, %cst_28 {dimension_numbers = #tpu.dot_dimension_numbers<[1], [0], [0], [1], [0, 0, 1, 1], [], []>} : vector<8x32xbf16>, vector<32x12xbf16>, vector<8x12xf32> -> vector<8x12xf32>
    %61 = arith.addf %60, %30 : vector<8x12xf32>
    %62 = arith.addf %61, %46 : vector<8x12xf32>
    %c2_i32 = arith.constant 2 : i32
    %63 = arith.truncf %62 : vector<8x12xf32> to vector<8x12xbf16>
    %cst_29 = arith.constant dense<0.000000e+00> : vector<8x32xf32>
    %64 = tpu.matmul %63, %5, %cst_29 {dimension_numbers = #tpu.dot_dimension_numbers<[1], [0], [0], [1], [0, 0, 1, 1], [], []>} : vector<8x12xbf16>, vector<12x32xbf16>, vector<8x32xf32> -> vector<8x32xf32>
    %65 = arith.addf %64, %19 : vector<8x32xf32>
    %66 = math.tanh %65 : vector<8x32xf32>
    %67 = arith.truncf %66 : vector<8x32xf32> to vector<8x32xbf16>
    %cst_30 = arith.constant dense<0.000000e+00> : vector<8x32xf32>
    %68 = tpu.matmul %67, %9, %cst_30 {dimension_numbers = #tpu.dot_dimension_numbers<[1], [0], [0], [1], [0, 0, 1, 1], [], []>} : vector<8x32xbf16>, vector<32x32xbf16>, vector<8x32xf32> -> vector<8x32xf32>
    %69 = arith.addf %68, %22 : vector<8x32xf32>
    %70 = math.tanh %69 : vector<8x32xf32>
    %71 = arith.truncf %70 : vector<8x32xf32> to vector<8x32xbf16>
    %cst_31 = arith.constant dense<0.000000e+00> : vector<8x32xf32>
    %72 = tpu.matmul %71, %11, %cst_31 {dimension_numbers = #tpu.dot_dimension_numbers<[1], [0], [0], [1], [0, 0, 1, 1], [], []>} : vector<8x32xbf16>, vector<32x32xbf16>, vector<8x32xf32> -> vector<8x32xf32>
    %73 = arith.addf %72, %25 : vector<8x32xf32>
    %74 = math.tanh %73 : vector<8x32xf32>
    %75 = arith.truncf %74 : vector<8x32xf32> to vector<8x32xbf16>
    %cst_32 = arith.constant dense<0.000000e+00> : vector<8x12xf32>
    %76 = tpu.matmul %75, %15, %cst_32 {dimension_numbers = #tpu.dot_dimension_numbers<[1], [0], [0], [1], [0, 0, 1, 1], [], []>} : vector<8x32xbf16>, vector<32x12xbf16>, vector<8x12xf32> -> vector<8x12xf32>
    %77 = arith.addf %76, %30 : vector<8x12xf32>
    %78 = arith.addf %77, %62 : vector<8x12xf32>
    %c3_i32 = arith.constant 3 : i32
    %79 = arith.truncf %78 : vector<8x12xf32> to vector<8x12xbf16>
    %cst_33 = arith.constant dense<0.000000e+00> : vector<8x32xf32>
    %80 = tpu.matmul %79, %5, %cst_33 {dimension_numbers = #tpu.dot_dimension_numbers<[1], [0], [0], [1], [0, 0, 1, 1], [], []>} : vector<8x12xbf16>, vector<12x32xbf16>, vector<8x32xf32> -> vector<8x32xf32>
    %81 = arith.addf %80, %19 : vector<8x32xf32>
    %82 = math.tanh %81 : vector<8x32xf32>
    %83 = arith.truncf %82 : vector<8x32xf32> to vector<8x32xbf16>
    %cst_34 = arith.constant dense<0.000000e+00> : vector<8x32xf32>
    %84 = tpu.matmul %83, %9, %cst_34 {dimension_numbers = #tpu.dot_dimension_numbers<[1], [0], [0], [1], [0, 0, 1, 1], [], []>} : vector<8x32xbf16>, vector<32x32xbf16>, vector<8x32xf32> -> vector<8x32xf32>
    %85 = arith.addf %84, %22 : vector<8x32xf32>
    %86 = math.tanh %85 : vector<8x32xf32>
    %87 = arith.truncf %86 : vector<8x32xf32> to vector<8x32xbf16>
    %cst_35 = arith.constant dense<0.000000e+00> : vector<8x32xf32>
    %88 = tpu.matmul %87, %11, %cst_35 {dimension_numbers = #tpu.dot_dimension_numbers<[1], [0], [0], [1], [0, 0, 1, 1], [], []>} : vector<8x32xbf16>, vector<32x32xbf16>, vector<8x32xf32> -> vector<8x32xf32>
    %89 = arith.addf %88, %25 : vector<8x32xf32>
    %90 = math.tanh %89 : vector<8x32xf32>
    %91 = arith.truncf %90 : vector<8x32xf32> to vector<8x32xbf16>
    %cst_36 = arith.constant dense<0.000000e+00> : vector<8x12xf32>
    %92 = tpu.matmul %91, %15, %cst_36 {dimension_numbers = #tpu.dot_dimension_numbers<[1], [0], [0], [1], [0, 0, 1, 1], [], []>} : vector<8x32xbf16>, vector<32x12xbf16>, vector<8x12xf32> -> vector<8x12xf32>
    %93 = arith.addf %92, %30 : vector<8x12xf32>
    %94 = arith.addf %93, %78 : vector<8x12xf32>
    %c4_i32 = arith.constant 4 : i32
    %95 = arith.truncf %94 : vector<8x12xf32> to vector<8x12xbf16>
    %cst_37 = arith.constant dense<0.000000e+00> : vector<8x32xf32>
    %96 = tpu.matmul %95, %5, %cst_37 {dimension_numbers = #tpu.dot_dimension_numbers<[1], [0], [0], [1], [0, 0, 1, 1], [], []>} : vector<8x12xbf16>, vector<12x32xbf16>, vector<8x32xf32> -> vector<8x32xf32>
    %97 = arith.addf %96, %19 : vector<8x32xf32>
    %98 = math.tanh %97 : vector<8x32xf32>
    %99 = arith.truncf %98 : vector<8x32xf32> to vector<8x32xbf16>
    %cst_38 = arith.constant dense<0.000000e+00> : vector<8x32xf32>
    %100 = tpu.matmul %99, %9, %cst_38 {dimension_numbers = #tpu.dot_dimension_numbers<[1], [0], [0], [1], [0, 0, 1, 1], [], []>} : vector<8x32xbf16>, vector<32x32xbf16>, vector<8x32xf32> -> vector<8x32xf32>
    %101 = arith.addf %100, %22 : vector<8x32xf32>
    %102 = math.tanh %101 : vector<8x32xf32>
    %103 = arith.truncf %102 : vector<8x32xf32> to vector<8x32xbf16>
    %cst_39 = arith.constant dense<0.000000e+00> : vector<8x32xf32>
    %104 = tpu.matmul %103, %11, %cst_39 {dimension_numbers = #tpu.dot_dimension_numbers<[1], [0], [0], [1], [0, 0, 1, 1], [], []>} : vector<8x32xbf16>, vector<32x32xbf16>, vector<8x32xf32> -> vector<8x32xf32>
    %105 = arith.addf %104, %25 : vector<8x32xf32>
    %106 = math.tanh %105 : vector<8x32xf32>
    %107 = arith.truncf %106 : vector<8x32xf32> to vector<8x32xbf16>
    %cst_40 = arith.constant dense<0.000000e+00> : vector<8x12xf32>
    %108 = tpu.matmul %107, %15, %cst_40 {dimension_numbers = #tpu.dot_dimension_numbers<[1], [0], [0], [1], [0, 0, 1, 1], [], []>} : vector<8x32xbf16>, vector<32x12xbf16>, vector<8x12xf32> -> vector<8x12xf32>
    %109 = arith.addf %108, %30 : vector<8x12xf32>
    %110 = arith.addf %109, %94 : vector<8x12xf32>
    %c5_i32 = arith.constant 5 : i32
    %111 = arith.truncf %110 : vector<8x12xf32> to vector<8x12xbf16>
    %cst_41 = arith.constant dense<0.000000e+00> : vector<8x32xf32>
    %112 = tpu.matmul %111, %5, %cst_41 {dimension_numbers = #tpu.dot_dimension_numbers<[1], [0], [0], [1], [0, 0, 1, 1], [], []>} : vector<8x12xbf16>, vector<12x32xbf16>, vector<8x32xf32> -> vector<8x32xf32>
    %113 = arith.addf %112, %19 : vector<8x32xf32>
    %114 = math.tanh %113 : vector<8x32xf32>
    %115 = arith.truncf %114 : vector<8x32xf32> to vector<8x32xbf16>
    %cst_42 = arith.constant dense<0.000000e+00> : vector<8x32xf32>
    %116 = tpu.matmul %115, %9, %cst_42 {dimension_numbers = #tpu.dot_dimension_numbers<[1], [0], [0], [1], [0, 0, 1, 1], [], []>} : vector<8x32xbf16>, vector<32x32xbf16>, vector<8x32xf32> -> vector<8x32xf32>
    %117 = arith.addf %116, %22 : vector<8x32xf32>
    %118 = math.tanh %117 : vector<8x32xf32>
    %119 = arith.truncf %118 : vector<8x32xf32> to vector<8x32xbf16>
    %cst_43 = arith.constant dense<0.000000e+00> : vector<8x32xf32>
    %120 = tpu.matmul %119, %11, %cst_43 {dimension_numbers = #tpu.dot_dimension_numbers<[1], [0], [0], [1], [0, 0, 1, 1], [], []>} : vector<8x32xbf16>, vector<32x32xbf16>, vector<8x32xf32> -> vector<8x32xf32>
    %121 = arith.addf %120, %25 : vector<8x32xf32>
    %122 = math.tanh %121 : vector<8x32xf32>
    %123 = arith.truncf %122 : vector<8x32xf32> to vector<8x32xbf16>
    %cst_44 = arith.constant dense<0.000000e+00> : vector<8x12xf32>
    %124 = tpu.matmul %123, %15, %cst_44 {dimension_numbers = #tpu.dot_dimension_numbers<[1], [0], [0], [1], [0, 0, 1, 1], [], []>} : vector<8x32xbf16>, vector<32x12xbf16>, vector<8x12xf32> -> vector<8x12xf32>
    %125 = arith.addf %124, %30 : vector<8x12xf32>
    %126 = arith.addf %125, %110 : vector<8x12xf32>
    %c6_i32 = arith.constant 6 : i32
    %127 = arith.truncf %126 : vector<8x12xf32> to vector<8x12xbf16>
    %cst_45 = arith.constant dense<0.000000e+00> : vector<8x32xf32>
    %128 = tpu.matmul %127, %5, %cst_45 {dimension_numbers = #tpu.dot_dimension_numbers<[1], [0], [0], [1], [0, 0, 1, 1], [], []>} : vector<8x12xbf16>, vector<12x32xbf16>, vector<8x32xf32> -> vector<8x32xf32>
    %129 = arith.addf %128, %19 : vector<8x32xf32>
    %130 = math.tanh %129 : vector<8x32xf32>
    %131 = arith.truncf %130 : vector<8x32xf32> to vector<8x32xbf16>
    %cst_46 = arith.constant dense<0.000000e+00> : vector<8x32xf32>
    %132 = tpu.matmul %131, %9, %cst_46 {dimension_numbers = #tpu.dot_dimension_numbers<[1], [0], [0], [1], [0, 0, 1, 1], [], []>} : vector<8x32xbf16>, vector<32x32xbf16>, vector<8x32xf32> -> vector<8x32xf32>
    %133 = arith.addf %132, %22 : vector<8x32xf32>
    %134 = math.tanh %133 : vector<8x32xf32>
    %135 = arith.truncf %134 : vector<8x32xf32> to vector<8x32xbf16>
    %cst_47 = arith.constant dense<0.000000e+00> : vector<8x32xf32>
    %136 = tpu.matmul %135, %11, %cst_47 {dimension_numbers = #tpu.dot_dimension_numbers<[1], [0], [0], [1], [0, 0, 1, 1], [], []>} : vector<8x32xbf16>, vector<32x32xbf16>, vector<8x32xf32> -> vector<8x32xf32>
    %137 = arith.addf %136, %25 : vector<8x32xf32>
    %138 = math.tanh %137 : vector<8x32xf32>
    %139 = arith.truncf %138 : vector<8x32xf32> to vector<8x32xbf16>
    %cst_48 = arith.constant dense<0.000000e+00> : vector<8x12xf32>
    %140 = tpu.matmul %139, %15, %cst_48 {dimension_numbers = #tpu.dot_dimension_numbers<[1], [0], [0], [1], [0, 0, 1, 1], [], []>} : vector<8x32xbf16>, vector<32x12xbf16>, vector<8x12xf32> -> vector<8x12xf32>
    %141 = arith.addf %140, %30 : vector<8x12xf32>
    %142 = arith.addf %141, %126 : vector<8x12xf32>
    %c7_i32 = arith.constant 7 : i32
    %143 = arith.truncf %142 : vector<8x12xf32> to vector<8x12xbf16>
    %cst_49 = arith.constant dense<0.000000e+00> : vector<8x32xf32>
    %144 = tpu.matmul %143, %5, %cst_49 {dimension_numbers = #tpu.dot_dimension_numbers<[1], [0], [0], [1], [0, 0, 1, 1], [], []>} : vector<8x12xbf16>, vector<12x32xbf16>, vector<8x32xf32> -> vector<8x32xf32>
    %145 = arith.addf %144, %19 : vector<8x32xf32>
    %146 = math.tanh %145 : vector<8x32xf32>
    %147 = arith.truncf %146 : vector<8x32xf32> to vector<8x32xbf16>
    %cst_50 = arith.constant dense<0.000000e+00> : vector<8x32xf32>
    %148 = tpu.matmul %147, %9, %cst_50 {dimension_numbers = #tpu.dot_dimension_numbers<[1], [0], [0], [1], [0, 0, 1, 1], [], []>} : vector<8x32xbf16>, vector<32x32xbf16>, vector<8x32xf32> -> vector<8x32xf32>
    %149 = arith.addf %148, %22 : vector<8x32xf32>
    %150 = math.tanh %149 : vector<8x32xf32>
    %151 = arith.truncf %150 : vector<8x32xf32> to vector<8x32xbf16>
    %cst_51 = arith.constant dense<0.000000e+00> : vector<8x32xf32>
    %152 = tpu.matmul %151, %11, %cst_51 {dimension_numbers = #tpu.dot_dimension_numbers<[1], [0], [0], [1], [0, 0, 1, 1], [], []>} : vector<8x32xbf16>, vector<32x32xbf16>, vector<8x32xf32> -> vector<8x32xf32>
    %153 = arith.addf %152, %25 : vector<8x32xf32>
    %154 = math.tanh %153 : vector<8x32xf32>
    %155 = arith.truncf %154 : vector<8x32xf32> to vector<8x32xbf16>
    %cst_52 = arith.constant dense<0.000000e+00> : vector<8x12xf32>
    %156 = tpu.matmul %155, %15, %cst_52 {dimension_numbers = #tpu.dot_dimension_numbers<[1], [0], [0], [1], [0, 0, 1, 1], [], []>} : vector<8x32xbf16>, vector<32x12xbf16>, vector<8x12xf32> -> vector<8x12xf32>
    %157 = arith.addf %156, %30 : vector<8x12xf32>
    %158 = arith.addf %157, %142 : vector<8x12xf32>
    %c8_i32 = arith.constant 8 : i32
    %159 = arith.truncf %158 : vector<8x12xf32> to vector<8x12xbf16>
    %cst_53 = arith.constant dense<0.000000e+00> : vector<8x32xf32>
    %160 = tpu.matmul %159, %5, %cst_53 {dimension_numbers = #tpu.dot_dimension_numbers<[1], [0], [0], [1], [0, 0, 1, 1], [], []>} : vector<8x12xbf16>, vector<12x32xbf16>, vector<8x32xf32> -> vector<8x32xf32>
    %161 = arith.addf %160, %19 : vector<8x32xf32>
    %162 = math.tanh %161 : vector<8x32xf32>
    %163 = arith.truncf %162 : vector<8x32xf32> to vector<8x32xbf16>
    %cst_54 = arith.constant dense<0.000000e+00> : vector<8x32xf32>
    %164 = tpu.matmul %163, %9, %cst_54 {dimension_numbers = #tpu.dot_dimension_numbers<[1], [0], [0], [1], [0, 0, 1, 1], [], []>} : vector<8x32xbf16>, vector<32x32xbf16>, vector<8x32xf32> -> vector<8x32xf32>
    %165 = arith.addf %164, %22 : vector<8x32xf32>
    %166 = math.tanh %165 : vector<8x32xf32>
    %167 = arith.truncf %166 : vector<8x32xf32> to vector<8x32xbf16>
    %cst_55 = arith.constant dense<0.000000e+00> : vector<8x32xf32>
    %168 = tpu.matmul %167, %11, %cst_55 {dimension_numbers = #tpu.dot_dimension_numbers<[1], [0], [0], [1], [0, 0, 1, 1], [], []>} : vector<8x32xbf16>, vector<32x32xbf16>, vector<8x32xf32> -> vector<8x32xf32>
    %169 = arith.addf %168, %25 : vector<8x32xf32>
    %170 = math.tanh %169 : vector<8x32xf32>
    %171 = arith.truncf %170 : vector<8x32xf32> to vector<8x32xbf16>
    %cst_56 = arith.constant dense<0.000000e+00> : vector<8x12xf32>
    %172 = tpu.matmul %171, %15, %cst_56 {dimension_numbers = #tpu.dot_dimension_numbers<[1], [0], [0], [1], [0, 0, 1, 1], [], []>} : vector<8x32xbf16>, vector<32x12xbf16>, vector<8x12xf32> -> vector<8x12xf32>
    %173 = arith.addf %172, %30 : vector<8x12xf32>
    %174 = arith.addf %173, %158 : vector<8x12xf32>
    %c9_i32 = arith.constant 9 : i32
    %175 = arith.truncf %174 : vector<8x12xf32> to vector<8x12xbf16>
    %cst_57 = arith.constant dense<0.000000e+00> : vector<8x32xf32>
    %176 = tpu.matmul %175, %5, %cst_57 {dimension_numbers = #tpu.dot_dimension_numbers<[1], [0], [0], [1], [0, 0, 1, 1], [], []>} : vector<8x12xbf16>, vector<12x32xbf16>, vector<8x32xf32> -> vector<8x32xf32>
    %177 = arith.addf %176, %19 : vector<8x32xf32>
    %178 = math.tanh %177 : vector<8x32xf32>
    %179 = arith.truncf %178 : vector<8x32xf32> to vector<8x32xbf16>
    %cst_58 = arith.constant dense<0.000000e+00> : vector<8x32xf32>
    %180 = tpu.matmul %179, %9, %cst_58 {dimension_numbers = #tpu.dot_dimension_numbers<[1], [0], [0], [1], [0, 0, 1, 1], [], []>} : vector<8x32xbf16>, vector<32x32xbf16>, vector<8x32xf32> -> vector<8x32xf32>
    %181 = arith.addf %180, %22 : vector<8x32xf32>
    %182 = math.tanh %181 : vector<8x32xf32>
    %183 = arith.truncf %182 : vector<8x32xf32> to vector<8x32xbf16>
    %cst_59 = arith.constant dense<0.000000e+00> : vector<8x32xf32>
    %184 = tpu.matmul %183, %11, %cst_59 {dimension_numbers = #tpu.dot_dimension_numbers<[1], [0], [0], [1], [0, 0, 1, 1], [], []>} : vector<8x32xbf16>, vector<32x32xbf16>, vector<8x32xf32> -> vector<8x32xf32>
    %185 = arith.addf %184, %25 : vector<8x32xf32>
    %186 = math.tanh %185 : vector<8x32xf32>
    %187 = arith.truncf %186 : vector<8x32xf32> to vector<8x32xbf16>
    %cst_60 = arith.constant dense<0.000000e+00> : vector<8x12xf32>
    %188 = tpu.matmul %187, %15, %cst_60 {dimension_numbers = #tpu.dot_dimension_numbers<[1], [0], [0], [1], [0, 0, 1, 1], [], []>} : vector<8x32xbf16>, vector<32x12xbf16>, vector<8x12xf32> -> vector<8x12xf32>
    %189 = arith.addf %188, %30 : vector<8x12xf32>
    %190 = arith.addf %189, %174 : vector<8x12xf32>
    %c10_i32 = arith.constant 10 : i32
    %191 = arith.truncf %190 : vector<8x12xf32> to vector<8x12xbf16>
    %cst_61 = arith.constant dense<0.000000e+00> : vector<8x32xf32>
    %192 = tpu.matmul %191, %5, %cst_61 {dimension_numbers = #tpu.dot_dimension_numbers<[1], [0], [0], [1], [0, 0, 1, 1], [], []>} : vector<8x12xbf16>, vector<12x32xbf16>, vector<8x32xf32> -> vector<8x32xf32>
    %193 = arith.addf %192, %19 : vector<8x32xf32>
    %194 = math.tanh %193 : vector<8x32xf32>
    %195 = arith.truncf %194 : vector<8x32xf32> to vector<8x32xbf16>
    %cst_62 = arith.constant dense<0.000000e+00> : vector<8x32xf32>
    %196 = tpu.matmul %195, %9, %cst_62 {dimension_numbers = #tpu.dot_dimension_numbers<[1], [0], [0], [1], [0, 0, 1, 1], [], []>} : vector<8x32xbf16>, vector<32x32xbf16>, vector<8x32xf32> -> vector<8x32xf32>
    %197 = arith.addf %196, %22 : vector<8x32xf32>
    %198 = math.tanh %197 : vector<8x32xf32>
    %199 = arith.truncf %198 : vector<8x32xf32> to vector<8x32xbf16>
    %cst_63 = arith.constant dense<0.000000e+00> : vector<8x32xf32>
    %200 = tpu.matmul %199, %11, %cst_63 {dimension_numbers = #tpu.dot_dimension_numbers<[1], [0], [0], [1], [0, 0, 1, 1], [], []>} : vector<8x32xbf16>, vector<32x32xbf16>, vector<8x32xf32> -> vector<8x32xf32>
    %201 = arith.addf %200, %25 : vector<8x32xf32>
    %202 = math.tanh %201 : vector<8x32xf32>
    %203 = arith.truncf %202 : vector<8x32xf32> to vector<8x32xbf16>
    %cst_64 = arith.constant dense<0.000000e+00> : vector<8x12xf32>
    %204 = tpu.matmul %203, %15, %cst_64 {dimension_numbers = #tpu.dot_dimension_numbers<[1], [0], [0], [1], [0, 0, 1, 1], [], []>} : vector<8x32xbf16>, vector<32x12xbf16>, vector<8x12xf32> -> vector<8x12xf32>
    %205 = arith.addf %204, %30 : vector<8x12xf32>
    %206 = arith.addf %205, %190 : vector<8x12xf32>
    %c11_i32 = arith.constant 11 : i32
    %207 = arith.truncf %206 : vector<8x12xf32> to vector<8x12xbf16>
    %cst_65 = arith.constant dense<0.000000e+00> : vector<8x32xf32>
    %208 = tpu.matmul %207, %5, %cst_65 {dimension_numbers = #tpu.dot_dimension_numbers<[1], [0], [0], [1], [0, 0, 1, 1], [], []>} : vector<8x12xbf16>, vector<12x32xbf16>, vector<8x32xf32> -> vector<8x32xf32>
    %209 = arith.addf %208, %19 : vector<8x32xf32>
    %210 = math.tanh %209 : vector<8x32xf32>
    %211 = arith.truncf %210 : vector<8x32xf32> to vector<8x32xbf16>
    %cst_66 = arith.constant dense<0.000000e+00> : vector<8x32xf32>
    %212 = tpu.matmul %211, %9, %cst_66 {dimension_numbers = #tpu.dot_dimension_numbers<[1], [0], [0], [1], [0, 0, 1, 1], [], []>} : vector<8x32xbf16>, vector<32x32xbf16>, vector<8x32xf32> -> vector<8x32xf32>
    %213 = arith.addf %212, %22 : vector<8x32xf32>
    %214 = math.tanh %213 : vector<8x32xf32>
    %215 = arith.truncf %214 : vector<8x32xf32> to vector<8x32xbf16>
    %cst_67 = arith.constant dense<0.000000e+00> : vector<8x32xf32>
    %216 = tpu.matmul %215, %11, %cst_67 {dimension_numbers = #tpu.dot_dimension_numbers<[1], [0], [0], [1], [0, 0, 1, 1], [], []>} : vector<8x32xbf16>, vector<32x32xbf16>, vector<8x32xf32> -> vector<8x32xf32>
    %217 = arith.addf %216, %25 : vector<8x32xf32>
    %218 = math.tanh %217 : vector<8x32xf32>
    %219 = arith.truncf %218 : vector<8x32xf32> to vector<8x32xbf16>
    %cst_68 = arith.constant dense<0.000000e+00> : vector<8x12xf32>
    %220 = tpu.matmul %219, %15, %cst_68 {dimension_numbers = #tpu.dot_dimension_numbers<[1], [0], [0], [1], [0, 0, 1, 1], [], []>} : vector<8x32xbf16>, vector<32x12xbf16>, vector<8x12xf32> -> vector<8x12xf32>
    %221 = arith.addf %220, %30 : vector<8x12xf32>
    %222 = arith.addf %221, %206 : vector<8x12xf32>
    %c12_i32 = arith.constant 12 : i32
    %223 = arith.truncf %222 : vector<8x12xf32> to vector<8x12xbf16>
    %cst_69 = arith.constant dense<0.000000e+00> : vector<8x32xf32>
    %224 = tpu.matmul %223, %5, %cst_69 {dimension_numbers = #tpu.dot_dimension_numbers<[1], [0], [0], [1], [0, 0, 1, 1], [], []>} : vector<8x12xbf16>, vector<12x32xbf16>, vector<8x32xf32> -> vector<8x32xf32>
    %225 = arith.addf %224, %19 : vector<8x32xf32>
    %226 = math.tanh %225 : vector<8x32xf32>
    %227 = arith.truncf %226 : vector<8x32xf32> to vector<8x32xbf16>
    %cst_70 = arith.constant dense<0.000000e+00> : vector<8x32xf32>
    %228 = tpu.matmul %227, %9, %cst_70 {dimension_numbers = #tpu.dot_dimension_numbers<[1], [0], [0], [1], [0, 0, 1, 1], [], []>} : vector<8x32xbf16>, vector<32x32xbf16>, vector<8x32xf32> -> vector<8x32xf32>
    %229 = arith.addf %228, %22 : vector<8x32xf32>
    %230 = math.tanh %229 : vector<8x32xf32>
    %231 = arith.truncf %230 : vector<8x32xf32> to vector<8x32xbf16>
    %cst_71 = arith.constant dense<0.000000e+00> : vector<8x32xf32>
    %232 = tpu.matmul %231, %11, %cst_71 {dimension_numbers = #tpu.dot_dimension_numbers<[1], [0], [0], [1], [0, 0, 1, 1], [], []>} : vector<8x32xbf16>, vector<32x32xbf16>, vector<8x32xf32> -> vector<8x32xf32>
    %233 = arith.addf %232, %25 : vector<8x32xf32>
    %234 = math.tanh %233 : vector<8x32xf32>
    %235 = arith.truncf %234 : vector<8x32xf32> to vector<8x32xbf16>
    %cst_72 = arith.constant dense<0.000000e+00> : vector<8x12xf32>
    %236 = tpu.matmul %235, %15, %cst_72 {dimension_numbers = #tpu.dot_dimension_numbers<[1], [0], [0], [1], [0, 0, 1, 1], [], []>} : vector<8x32xbf16>, vector<32x12xbf16>, vector<8x12xf32> -> vector<8x12xf32>
    %237 = arith.addf %236, %30 : vector<8x12xf32>
    %238 = arith.addf %237, %222 : vector<8x12xf32>
    %c13_i32 = arith.constant 13 : i32
    %239 = arith.truncf %238 : vector<8x12xf32> to vector<8x12xbf16>
    %cst_73 = arith.constant dense<0.000000e+00> : vector<8x32xf32>
    %240 = tpu.matmul %239, %5, %cst_73 {dimension_numbers = #tpu.dot_dimension_numbers<[1], [0], [0], [1], [0, 0, 1, 1], [], []>} : vector<8x12xbf16>, vector<12x32xbf16>, vector<8x32xf32> -> vector<8x32xf32>
    %241 = arith.addf %240, %19 : vector<8x32xf32>
    %242 = math.tanh %241 : vector<8x32xf32>
    %243 = arith.truncf %242 : vector<8x32xf32> to vector<8x32xbf16>
    %cst_74 = arith.constant dense<0.000000e+00> : vector<8x32xf32>
    %244 = tpu.matmul %243, %9, %cst_74 {dimension_numbers = #tpu.dot_dimension_numbers<[1], [0], [0], [1], [0, 0, 1, 1], [], []>} : vector<8x32xbf16>, vector<32x32xbf16>, vector<8x32xf32> -> vector<8x32xf32>
    %245 = arith.addf %244, %22 : vector<8x32xf32>
    %246 = math.tanh %245 : vector<8x32xf32>
    %247 = arith.truncf %246 : vector<8x32xf32> to vector<8x32xbf16>
    %cst_75 = arith.constant dense<0.000000e+00> : vector<8x32xf32>
    %248 = tpu.matmul %247, %11, %cst_75 {dimension_numbers = #tpu.dot_dimension_numbers<[1], [0], [0], [1], [0, 0, 1, 1], [], []>} : vector<8x32xbf16>, vector<32x32xbf16>, vector<8x32xf32> -> vector<8x32xf32>
    %249 = arith.addf %248, %25 : vector<8x32xf32>
    %250 = math.tanh %249 : vector<8x32xf32>
    %251 = arith.truncf %250 : vector<8x32xf32> to vector<8x32xbf16>
    %cst_76 = arith.constant dense<0.000000e+00> : vector<8x12xf32>
    %252 = tpu.matmul %251, %15, %cst_76 {dimension_numbers = #tpu.dot_dimension_numbers<[1], [0], [0], [1], [0, 0, 1, 1], [], []>} : vector<8x32xbf16>, vector<32x12xbf16>, vector<8x12xf32> -> vector<8x12xf32>
    %253 = arith.addf %252, %30 : vector<8x12xf32>
    %254 = arith.addf %253, %238 : vector<8x12xf32>
    %c14_i32 = arith.constant 14 : i32
    %255 = arith.truncf %254 : vector<8x12xf32> to vector<8x12xbf16>
    %cst_77 = arith.constant dense<0.000000e+00> : vector<8x32xf32>
    %256 = tpu.matmul %255, %5, %cst_77 {dimension_numbers = #tpu.dot_dimension_numbers<[1], [0], [0], [1], [0, 0, 1, 1], [], []>} : vector<8x12xbf16>, vector<12x32xbf16>, vector<8x32xf32> -> vector<8x32xf32>
    %257 = arith.addf %256, %19 : vector<8x32xf32>
    %258 = math.tanh %257 : vector<8x32xf32>
    %259 = arith.truncf %258 : vector<8x32xf32> to vector<8x32xbf16>
    %cst_78 = arith.constant dense<0.000000e+00> : vector<8x32xf32>
    %260 = tpu.matmul %259, %9, %cst_78 {dimension_numbers = #tpu.dot_dimension_numbers<[1], [0], [0], [1], [0, 0, 1, 1], [], []>} : vector<8x32xbf16>, vector<32x32xbf16>, vector<8x32xf32> -> vector<8x32xf32>
    %261 = arith.addf %260, %22 : vector<8x32xf32>
    %262 = math.tanh %261 : vector<8x32xf32>
    %263 = arith.truncf %262 : vector<8x32xf32> to vector<8x32xbf16>
    %cst_79 = arith.constant dense<0.000000e+00> : vector<8x32xf32>
    %264 = tpu.matmul %263, %11, %cst_79 {dimension_numbers = #tpu.dot_dimension_numbers<[1], [0], [0], [1], [0, 0, 1, 1], [], []>} : vector<8x32xbf16>, vector<32x32xbf16>, vector<8x32xf32> -> vector<8x32xf32>
    %265 = arith.addf %264, %25 : vector<8x32xf32>
    %266 = math.tanh %265 : vector<8x32xf32>
    %267 = arith.truncf %266 : vector<8x32xf32> to vector<8x32xbf16>
    %cst_80 = arith.constant dense<0.000000e+00> : vector<8x12xf32>
    %268 = tpu.matmul %267, %15, %cst_80 {dimension_numbers = #tpu.dot_dimension_numbers<[1], [0], [0], [1], [0, 0, 1, 1], [], []>} : vector<8x32xbf16>, vector<32x12xbf16>, vector<8x12xf32> -> vector<8x12xf32>
    %269 = arith.addf %268, %30 : vector<8x12xf32>
    %270 = arith.addf %269, %254 : vector<8x12xf32>
    %c15_i32 = arith.constant 15 : i32
    %271 = arith.truncf %270 : vector<8x12xf32> to vector<8x12xbf16>
    %cst_81 = arith.constant dense<0.000000e+00> : vector<8x32xf32>
    %272 = tpu.matmul %271, %5, %cst_81 {dimension_numbers = #tpu.dot_dimension_numbers<[1], [0], [0], [1], [0, 0, 1, 1], [], []>} : vector<8x12xbf16>, vector<12x32xbf16>, vector<8x32xf32> -> vector<8x32xf32>
    %273 = arith.addf %272, %19 : vector<8x32xf32>
    %274 = math.tanh %273 : vector<8x32xf32>
    %275 = arith.truncf %274 : vector<8x32xf32> to vector<8x32xbf16>
    %cst_82 = arith.constant dense<0.000000e+00> : vector<8x32xf32>
    %276 = tpu.matmul %275, %9, %cst_82 {dimension_numbers = #tpu.dot_dimension_numbers<[1], [0], [0], [1], [0, 0, 1, 1], [], []>} : vector<8x32xbf16>, vector<32x32xbf16>, vector<8x32xf32> -> vector<8x32xf32>
    %277 = arith.addf %276, %22 : vector<8x32xf32>
    %278 = math.tanh %277 : vector<8x32xf32>
    %279 = arith.truncf %278 : vector<8x32xf32> to vector<8x32xbf16>
    %cst_83 = arith.constant dense<0.000000e+00> : vector<8x32xf32>
    %280 = tpu.matmul %279, %11, %cst_83 {dimension_numbers = #tpu.dot_dimension_numbers<[1], [0], [0], [1], [0, 0, 1, 1], [], []>} : vector<8x32xbf16>, vector<32x32xbf16>, vector<8x32xf32> -> vector<8x32xf32>
    %281 = arith.addf %280, %25 : vector<8x32xf32>
    %282 = math.tanh %281 : vector<8x32xf32>
    %283 = arith.truncf %282 : vector<8x32xf32> to vector<8x32xbf16>
    %cst_84 = arith.constant dense<0.000000e+00> : vector<8x12xf32>
    %284 = tpu.matmul %283, %15, %cst_84 {dimension_numbers = #tpu.dot_dimension_numbers<[1], [0], [0], [1], [0, 0, 1, 1], [], []>} : vector<8x32xbf16>, vector<32x12xbf16>, vector<8x12xf32> -> vector<8x12xf32>
    %285 = arith.addf %284, %30 : vector<8x12xf32>
    %286 = arith.addf %285, %270 : vector<8x12xf32>
    %c0_85 = arith.constant 0 : index
    %c0_86 = arith.constant 0 : index
    %287 = vector.load %arg11[%c0_85, %c0_86] : memref<8x12xf32, #tpu.memory_space<vmem>>, vector<8x12xf32>
    tpu.vector_store %arg11[%c0_85, %c0_86], %286 {strides = array<i32>} : memref<8x12xf32, #tpu.memory_space<vmem>>, vector<8x12xf32>,
    return
  }
  func.func @transform_0(%arg0: i32) -> (i32, i32) {
    %c0_i32 = arith.constant 0 : i32
    %c0_i32_0 = arith.constant 0 : i32
    return %arg0, %c0_i32 : i32, i32
  }
  func.func @transform_1(%arg0: i32) -> (i32, i32) {
    %c0_i32 = arith.constant 0 : i32
    %c0_i32_0 = arith.constant 0 : i32
    return %arg0, %c0_i32 : i32, i32
  }
  func.func @transform_2(%arg0: i32) -> (i32, i32) {
    %c0_i32 = arith.constant 0 : i32
    %c0_i32_0 = arith.constant 0 : i32
    %c0_i32_1 = arith.constant 0 : i32
    return %c0_i32, %c0_i32_0 : i32, i32
  }
  func.func @transform_3(%arg0: i32) -> (i32, i32) {
    %c0_i32 = arith.constant 0 : i32
    %c0_i32_0 = arith.constant 0 : i32
    %c0_i32_1 = arith.constant 0 : i32
    return %c0_i32, %c0_i32_0 : i32, i32
  }
  func.func @transform_4(%arg0: i32) -> (i32, i32) {
    %c0_i32 = arith.constant 0 : i32
    %c0_i32_0 = arith.constant 0 : i32
    %c0_i32_1 = arith.constant 0 : i32
    return %c0_i32, %c0_i32_0 : i32, i32
  }
  func.func @transform_5(%arg0: i32) -> (i32, i32) {
    %c0_i32 = arith.constant 0 : i32
    %c0_i32_0 = arith.constant 0 : i32
    %c0_i32_1 = arith.constant 0 : i32
    return %c0_i32, %c0_i32_0 : i32, i32
  }
  func.func @transform_6(%arg0: i32) -> (i32, i32) {
    %c0_i32 = arith.constant 0 : i32
    %c0_i32_0 = arith.constant 0 : i32
    %c0_i32_1 = arith.constant 0 : i32
    return %c0_i32, %c0_i32_0 : i32, i32
  }
  func.func @transform_7(%arg0: i32) -> (i32, i32) {
    %c0_i32 = arith.constant 0 : i32
    %c0_i32_0 = arith.constant 0 : i32
    %c0_i32_1 = arith.constant 0 : i32
    return %c0_i32, %c0_i32_0 : i32, i32
  }
  func.func @transform_8(%arg0: i32) -> (i32, i32) {
    %c0_i32 = arith.constant 0 : i32
    %c0_i32_0 = arith.constant 0 : i32
    %c0_i32_1 = arith.constant 0 : i32
    return %c0_i32, %c0_i32_0 : i32, i32
  }
  func.func @transform_9(%arg0: i32) -> (i32, i32) {
    %c0_i32 = arith.constant 0 : i32
    %c0_i32_0 = arith.constant 0 : i32
    %c0_i32_1 = arith.constant 0 : i32
    return %c0_i32, %c0_i32_0 : i32, i32
  }
  func.func @transform_10(%arg0: i32) -> (i32, i32) {
    %c0_i32 = arith.constant 0 : i32
    %c0_i32_0 = arith.constant 0 : i32
    return %arg0, %c0_i32 : i32, i32
  }
}

</mosaic_0001>

<llo_original>
// kernel: tpu_custom_call.1
$region0: #{tpu_custom_call.1}
  #allocation0 [shape = 'u32[]', space=smem, size = 0x4, offset = 0x4, fixed_abs, tag = 'smem constant byte address 0x4 - core index']
  #allocation1 [shape = 'u32[144,128]{1,0:T(1,128)}', space=vmem, size = 0x12000, scoped, tag = 'internal scratch']
  %s0 = inlined_call_operand.hbm [shape: f32[8,12], index: 0, kind: input, shape index: {}]
  %s1 = inlined_call_operand.vmem [shape: f32[8,4], index: 1, kind: input, shape index: {}]
  %s2 = inlined_call_operand.hbm [shape: f32[16,32], index: 2, kind: input, shape index: {}]
  %s3 = inlined_call_operand.vmem [shape: f32[1,32], index: 3, kind: input, shape index: {}]
  %s4 = inlined_call_operand.vmem [shape: f32[32,32], index: 4, kind: input, shape index: {}]
  %s5 = inlined_call_operand.vmem [shape: f32[1,32], index: 5, kind: input, shape index: {}]
  %s6 = inlined_call_operand.vmem [shape: f32[32,32], index: 6, kind: input, shape index: {}]
  %s7 = inlined_call_operand.vmem [shape: f32[1,32], index: 7, kind: input, shape index: {}]
  %s8 = inlined_call_operand.vmem [shape: f32[32,12], index: 8, kind: input, shape index: {}]
  %s9 = inlined_call_operand.vmem [shape: f32[1,12], index: 9, kind: input, shape index: {}]
  %s10 = inlined_call_operand.hbm [shape: f32[8,12], index: 10, kind: output, shape index: {}]
  %s11 = sld [smem:[#allocation0]]
  $region58: #{tpu_custom_call.1} parent=0
    _
  %s13 = ssub.s32 1, %s11
  %s14 = scalar_select 0, %s13, %s11
  $region1: #{tpu_custom_call.1} parent=0
    #allocation2 [shape = 'u8[4096]{0}', space=vmem, size = 0x1000, scoped, tag = 'input window, operand 0, single buffered']
    #allocation3 [shape = 's32[1]{0}', space=sflag, size = 0x4, scoped, tag = 'scoped memory for tpu_custom_call.1']
    #allocation4 [shape = 's32[1]{0}', space=sflag, size = 0x4, scoped, tag = 'scoped memory for tpu_custom_call.1']
    #allocation5 [shape = 'u8[8192]{0}', space=vmem, size = 0x2000, scoped, tag = 'input window, operand 2, single buffered']
    #allocation6 [shape = 's32[1]{0}', space=sflag, size = 0x4, scoped, tag = 'scoped memory for tpu_custom_call.1']
    #allocation7 [shape = 'u8[4096]{0}', space=vmem, size = 0x1000, scoped, tag = 'output window, operand 0, single buffered']
    %15 = vsyncpa [#allocation3], 0
    %16 = vsyncpa [#allocation6], 0
    %17 = vsyncpa [#allocation4], 0
    // Predicated region
    $region2: #{tpu_custom_call.1} parent=1 // pred_check
      _
    $region3: #{tpu_custom_call.1} parent=1 // pred_check_branch
      %19 = sbr.rel (0) target = $region5
    $region4: #{tpu_custom_call.1} parent=1 // pred_region
      %s21 = ssub.s32 128, 128
      %22 = vsyncadd [#allocation3], %s21
      %s24 = sshll.u32 [#allocation2], 4
      %s25 = int_to_ptr.vmem [resolvable:$true] %s24
      %27 = dma.hbm_to_vmem [thread:$0]  %s0, 128, %s25, [#allocation3]
    $region5: #{tpu_custom_call.1} parent=1 // pred_fallthru
      _
    // Predicated region
    $region6: #{tpu_custom_call.1} parent=1 // pred_check
      _
    $region7: #{tpu_custom_call.1} parent=1 // pred_check_branch
      %29 = sbr.rel (0) target = $region9
    $region8: #{tpu_custom_call.1} parent=1 // pred_region
      _
    $region9: #{tpu_custom_call.1} parent=1 // pred_fallthru
      _
    // Predicated region
    $region10: #{tpu_custom_call.1} parent=1 // pred_check
      _
    $region11: #{tpu_custom_call.1} parent=1 // pred_check_branch
      %31 = sbr.rel (0) target = $region13
    $region12: #{tpu_custom_call.1} parent=1 // pred_region
      %s33 = ssub.s32 256, 256
      %34 = vsyncadd [#allocation6], %s33
      %s35 = sshll.u32 [#allocation5], 4
      %s36 = int_to_ptr.vmem [resolvable:$true] %s35
      %41 = dma.hbm_to_vmem [thread:$0]  %s2, 256, %s36, [#allocation6], 128, 128, 8
    $region13: #{tpu_custom_call.1} parent=1 // pred_fallthru
      _
    // Predicated region
    $region14: #{tpu_custom_call.1} parent=1 // pred_check
      _
    $region15: #{tpu_custom_call.1} parent=1 // pred_check_branch
      %43 = sbr.rel (0) target = $region17
    $region16: #{tpu_custom_call.1} parent=1 // pred_region
      _
    $region17: #{tpu_custom_call.1} parent=1 // pred_fallthru
      _
    // Predicated region
    $region18: #{tpu_custom_call.1} parent=1 // pred_check
      _
    $region19: #{tpu_custom_call.1} parent=1 // pred_check_branch
      %45 = sbr.rel (0) target = $region21
    $region20: #{tpu_custom_call.1} parent=1 // pred_region
      _
    $region21: #{tpu_custom_call.1} parent=1 // pred_fallthru
      _
    // Predicated region
    $region22: #{tpu_custom_call.1} parent=1 // pred_check
      _
    $region23: #{tpu_custom_call.1} parent=1 // pred_check_branch
      %47 = sbr.rel (0) target = $region25
    $region24: #{tpu_custom_call.1} parent=1 // pred_region
      _
    $region25: #{tpu_custom_call.1} parent=1 // pred_fallthru
      _
    // Predicated region
    $region26: #{tpu_custom_call.1} parent=1 // pred_check
      _
    $region27: #{tpu_custom_call.1} parent=1 // pred_check_branch
      %49 = sbr.rel (0) target = $region29
    $region28: #{tpu_custom_call.1} parent=1 // pred_region
      _
    $region29: #{tpu_custom_call.1} parent=1 // pred_fallthru
      _
    // Predicated region
    $region30: #{tpu_custom_call.1} parent=1 // pred_check
      _
    $region31: #{tpu_custom_call.1} parent=1 // pred_check_branch
      %51 = sbr.rel (0) target = $region33
    $region32: #{tpu_custom_call.1} parent=1 // pred_region
      _
    $region33: #{tpu_custom_call.1} parent=1 // pred_fallthru
      _
    // Predicated region
    $region34: #{tpu_custom_call.1} parent=1 // pred_check
      _
    $region35: #{tpu_custom_call.1} parent=1 // pred_check_branch
      %53 = sbr.rel (0) target = $region37
    $region36: #{tpu_custom_call.1} parent=1 // pred_region
      _
    $region37: #{tpu_custom_call.1} parent=1 // pred_fallthru
      _
    // Predicated region
    $region38: #{tpu_custom_call.1} parent=1 // pred_check
      _
    $region39: #{tpu_custom_call.1} parent=1 // pred_check_branch
      %55 = sbr.rel (0) target = $region41
    $region40: #{tpu_custom_call.1} parent=1 // pred_region
      _
    $region41: #{tpu_custom_call.1} parent=1 // pred_fallthru
      _
    // Predicated region
    $region42: #{tpu_custom_call.1} parent=1 // pred_check
      _
    $region43: #{tpu_custom_call.1} parent=1 // pred_check_branch
      %57 = sbr.rel (0) target = $region45
    $region44: #{tpu_custom_call.1} parent=1 // pred_region
      %58 = dma.done [#allocation3], 128
    $region45: #{tpu_custom_call.1} parent=1 // pred_fallthru
      _
    // Predicated region
    $region46: #{tpu_custom_call.1} parent=1 // pred_check
      _
    $region47: #{tpu_custom_call.1} parent=1 // pred_check_branch
      %60 = sbr.rel (0) target = $region49
    $region48: #{tpu_custom_call.1} parent=1 // pred_region
      %61 = dma.done [#allocation6], 256
    $region49: #{tpu_custom_call.1} parent=1 // pred_fallthru
      _
    %v63 = vld [vmem:[#allocation2] sm:$0xff]
    %v64 = vld [vmem:[%s1] sm:$0xff]
    %v65 = vpack.c.bf16 %v64, %v64
    %v66 = vld [vmem:[#allocation5] sm:$0xff]
    %v67 = vld [vmem:[#allocation5 + $0x8] sm:$0xff]
    %v68 = vpack.c.bf16 %v67, %v66
    %v69 = vpack.c.bf16 %v67, %v67
    %v70 = vld [vmem:[%s4] sm:$0xff]
    %v71 = vld [vmem:[%s4 + $0x8] sm:$0xff]
    %v72 = vld [vmem:[%s4 + $0x10] sm:$0xff]
    %v73 = vld [vmem:[%s4 + $0x18] sm:$0xff]
    %v74 = vpack.c.bf16 %v71, %v70
    %v75 = vpack.c.bf16 %v73, %v72
    %v76 = vld [vmem:[%s6] sm:$0xff]
    %v77 = vld [vmem:[%s6 + $0x8] sm:$0xff]
    %v78 = vld [vmem:[%s6 + $0x10] sm:$0xff]
    %v79 = vld [vmem:[%s6 + $0x18] sm:$0xff]
    %v80 = vpack.c.bf16 %v77, %v76
    %v81 = vpack.c.bf16 %v79, %v78
    %v82 = vld [vmem:[%s8] sm:$0xff]
    %v83 = vld [vmem:[%s8 + $0x8] sm:$0xff]
    %v84 = vld [vmem:[%s8 + $0x10] sm:$0xff]
    %v85 = vld [vmem:[%s8 + $0x18] sm:$0xff]
    %v86 = vmul.f32 %v82, 0.0625
    %v87 = vmul.f32 %v83, 0.0625
    %v88 = vmul.f32 %v84, 0.0625
    %v89 = vmul.f32 %v85, 0.0625
    %v90 = vpack.c.bf16 %v87, %v86
    %v91 = vpack.c.bf16 %v89, %v88
    %v92 = vld [vmem:[%s3] sm:$0x1]
    %v94 = vlaneseq
    %v95 = vshrl.u32 %v94, 7
    %v96 = vsub.s32 0, %v95
    %v97 = vrot.slane %v92, %v96
    %v100 = vrot.slane %v69, 2
    %vm101 = vcmask 31744
    %v103 = vsel %vm101, %v65, 0
    %vm105 = vcmask 1041408
    %v107 = vsel %vm105, %v100, 0
    %109 = vmatprep.subr.bf16.mxu0 0
    %110 = vmatpush1.bf16.msra.mxu0 %v107
    %111 = vmatprep.subr.bf16.mxu0 0
    %112 = vmatpush1.bf16.msra.mxu0 0
    %113 = vmatprep.subr.bf16.mxu0 0
    %114 = vmatpush1.bf16.msra.mxu0 0
    %115 = vmatprep.subr.bf16.mxu0 0
    %116 = vmatpush1.bf16.msra.mxu0 0
    %117 = vmatprep.subr.bf16.mxu0 0
    %118 = vmatpush1.bf16.msra.mxu0 0
    %119 = vmatprep.subr.bf16.mxu0 0
    %120 = vmatpush1.bf16.msra.mxu0 0
    %121 = vmatprep.subr.bf16.mxu0 0
    %122 = vmatpush1.bf16.msra.mxu0 0
    %123 = vmatprep.subr.bf16.mxu0 0
    %124 = vmatpush1.bf16.msra.mxu0 0
    %125 = vmatprep.subr.bf16.mxu0 0
    %126 = vmatpush1.bf16.msra.mxu0 0
    %127 = vmatprep.subr.bf16.mxu0 0
    %128 = vmatpush1.bf16.msra.mxu0 0
    %129 = vmatprep.subr.bf16.mxu0 0
    %130 = vmatpush1.bf16.msra.mxu0 0
    %131 = vmatprep.subr.bf16.mxu0 0
    %132 = vmatpush1.bf16.msra.mxu0 0
    %133 = vmatprep.subr.bf16.mxu0 0
    %134 = vmatpush1.bf16.msra.mxu0 0
    %135 = vmatprep.subr.bf16.mxu0 0
    %136 = vmatpush1.bf16.msra.mxu0 0
    %137 = vmatprep.subr.bf16.mxu0 0
    %138 = vmatpush1.bf16.msra.mxu0 0
    %139 = vmatprep.subr.bf16.mxu0 0
    %140 = vmatpush1.bf16.msra.mxu0 0
    %141 = vmatprep.mubr.bf16.mxu0 0
    %142 = vmatmul.mubr.bf16.gmra.mrb[0].mxu0 %v103
    %v143 = vpop.f32.mrb[0].mxu0
    %v144 = vadd.f32 %v97, %v143
    %v145 = vpop.f32.mrb[0].mxu0
    %v146 = vpop.f32.mrb[0].mxu0
    %v147 = vpop.f32.mrb[0].mxu0
    %148 = vdwg.mxu0
    %v149 = vld [vmem:[%s5] sm:$0x1]
    %v151 = vlaneseq
    %v152 = vshrl.u32 %v151, 7
    %v153 = vsub.s32 0, %v152
    %v154 = vrot.slane %v149, %v153
    %v156 = vld [vmem:[%s7] sm:$0x1]
    %v158 = vlaneseq
    %v159 = vshrl.u32 %v158, 7
    %v160 = vsub.s32 0, %v159
    %v161 = vrot.slane %v156, %v160
    %v163 = vld [vmem:[%s9] sm:$0x1]
    %v164 = vmul.f32 %v163, 0.0625
    %v166 = vlaneseq
    %v167 = vshrl.u32 %v166, 7
    %v168 = vsub.s32 0, %v167
    %v169 = vrot.slane %v164, %v168
    %v171 = vpack.c.bf16 %v63, %v63
    %vm172 = vcmask 97280
    %v174 = vsel %vm172, %v171, 0
    %vm176 = vcmask 1045504
    %v178 = vsel %vm176, %v68, 0
    %180 = vmatprep.subr.bf16.mxu0 0
    %181 = vmatpush1.bf16.msra.mxu0 %v178
    %182 = vmatprep.subr.bf16.mxu0 0
    %183 = vmatpush1.bf16.msra.mxu0 0
    %184 = vmatprep.subr.bf16.mxu0 0
    %185 = vmatpush1.bf16.msra.mxu0 0
    %186 = vmatprep.subr.bf16.mxu0 0
    %187 = vmatpush1.bf16.msra.mxu0 0
    %188 = vmatprep.subr.bf16.mxu0 0
    %189 = vmatpush1.bf16.msra.mxu0 0
    %190 = vmatprep.subr.bf16.mxu0 0
    %191 = vmatpush1.bf16.msra.mxu0 0
    %192 = vmatprep.subr.bf16.mxu0 0
    %193 = vmatpush1.bf16.msra.mxu0 0
    %194 = vmatprep.subr.bf16.mxu0 0
    %195 = vmatpush1.bf16.msra.mxu0 0
    %196 = vmatprep.subr.bf16.mxu0 0
    %197 = vmatpush1.bf16.msra.mxu0 0
    %198 = vmatprep.subr.bf16.mxu0 0
    %199 = vmatpush1.bf16.msra.mxu0 0
    %200 = vmatprep.subr.bf16.mxu0 0
    %201 = vmatpush1.bf16.msra.mxu0 0
    %202 = vmatprep.subr.bf16.mxu0 0
    %203 = vmatpush1.bf16.msra.mxu0 0
    %204 = vmatprep.subr.bf16.mxu0 0
    %205 = vmatpush1.bf16.msra.mxu0 0
    %206 = vmatprep.subr.bf16.mxu0 0
    %207 = vmatpush1.bf16.msra.mxu0 0
    %208 = vmatprep.subr.bf16.mxu0 0
    %209 = vmatpush1.bf16.msra.mxu0 0
    %210 = vmatprep.subr.bf16.mxu0 0
    %211 = vmatpush1.bf16.msra.mxu0 0
    %212 = vmatprep.mubr.bf16.mxu0 0
    %213 = vmatmul.mubr.bf16.gmra.mrb[0].mxu0 %v174
    %v214 = vpop.f32.mrb[0].mxu0
    %v215 = vadd.f32 %v144, %v214
    %v216 = vpop.f32.mrb[0].mxu0
    %v217 = vpop.f32.mrb[0].mxu0
    %v218 = vpop.f32.mrb[0].mxu0
    %219 = vdwg.mxu0
    %v220 = vtanh.pop %v215
    %v221 = vpack.c.bf16 %v220, %v220
    %vm222 = vcmask 261120
    %v224 = vsel %vm222, %v221, 0
    %226 = vmatprep.subr.bf16.mxu0 0
    %227 = vmatpush1.bf16.msra.mxu0 %v74
    %228 = vmatprep.subr.bf16.mxu0 0
    %229 = vmatpush1.bf16.msra.mxu0 %v75
    %230 = vmatprep.subr.bf16.mxu0 0
    %231 = vmatpush1.bf16.msra.mxu0 0
    %232 = vmatprep.subr.bf16.mxu0 0
    %233 = vmatpush1.bf16.msra.mxu0 0
    %234 = vmatprep.subr.bf16.mxu0 0
    %235 = vmatpush1.bf16.msra.mxu0 0
    %236 = vmatprep.subr.bf16.mxu0 0
    %237 = vmatpush1.bf16.msra.mxu0 0
    %238 = vmatprep.subr.bf16.mxu0 0
    %239 = vmatpush1.bf16.msra.mxu0 0
    %240 = vmatprep.subr.bf16.mxu0 0
    %241 = vmatpush1.bf16.msra.mxu0 0
    %242 = vmatprep.subr.bf16.mxu0 0
    %243 = vmatpush1.bf16.msra.mxu0 0
    %244 = vmatprep.subr.bf16.mxu0 0
    %245 = vmatpush1.bf16.msra.mxu0 0
    %246 = vmatprep.subr.bf16.mxu0 0
    %247 = vmatpush1.bf16.msra.mxu0 0
    %248 = vmatprep.subr.bf16.mxu0 0
    %249 = vmatpush1.bf16.msra.mxu0 0
    %250 = vmatprep.subr.bf16.mxu0 0
    %251 = vmatpush1.bf16.msra.mxu0 0
    %252 = vmatprep.subr.bf16.mxu0 0
    %253 = vmatpush1.bf16.msra.mxu0 0
    %254 = vmatprep.subr.bf16.mxu0 0
    %255 = vmatpush1.bf16.msra.mxu0 0
    %256 = vmatprep.subr.bf16.mxu0 0
    %257 = vmatpush1.bf16.msra.mxu0 0
    %258 = vmatprep.mubr.bf16.mxu0 0
    %259 = vmatmul.mubr.bf16.gmra.mrb[0].mxu0 %v224
    %v260 = vpop.f32.mrb[0].mxu0
    %v261 = vadd.f32 %v154, %v260
    %v262 = vpop.f32.mrb[0].mxu0
    %v263 = vpop.f32.mrb[0].mxu0
    %v264 = vpop.f32.mrb[0].mxu0
    %265 = vdwg.mxu0
    %v266 = vtanh.pop %v261
    %v267 = vpack.c.bf16 %v266, %v266
    %v269 = vsel %vm222, %v267, 0
    %271 = vmatprep.subr.bf16.mxu0 0
    %272 = vmatpush1.bf16.msra.mxu0 %v80
    %273 = vmatprep.subr.bf16.mxu0 0
    %274 = vmatpush1.bf16.msra.mxu0 %v81
    %275 = vmatprep.subr.bf16.mxu0 0
    %276 = vmatpush1.bf16.msra.mxu0 0
    %277 = vmatprep.subr.bf16.mxu0 0
    %278 = vmatpush1.bf16.msra.mxu0 0
    %279 = vmatprep.subr.bf16.mxu0 0
    %280 = vmatpush1.bf16.msra.mxu0 0
    %281 = vmatprep.subr.bf16.mxu0 0
    %282 = vmatpush1.bf16.msra.mxu0 0
    %283 = vmatprep.subr.bf16.mxu0 0
    %284 = vmatpush1.bf16.msra.mxu0 0
    %285 = vmatprep.subr.bf16.mxu0 0
    %286 = vmatpush1.bf16.msra.mxu0 0
    %287 = vmatprep.subr.bf16.mxu0 0
    %288 = vmatpush1.bf16.msra.mxu0 0
    %289 = vmatprep.subr.bf16.mxu0 0
    %290 = vmatpush1.bf16.msra.mxu0 0
    %291 = vmatprep.subr.bf16.mxu0 0
    %292 = vmatpush1.bf16.msra.mxu0 0
    %293 = vmatprep.subr.bf16.mxu0 0
    %294 = vmatpush1.bf16.msra.mxu0 0
    %295 = vmatprep.subr.bf16.mxu0 0
    %296 = vmatpush1.bf16.msra.mxu0 0
    %297 = vmatprep.subr.bf16.mxu0 0
    %298 = vmatpush1.bf16.msra.mxu0 0
    %299 = vmatprep.subr.bf16.mxu0 0
    %300 = vmatpush1.bf16.msra.mxu0 0
    %301 = vmatprep.subr.bf16.mxu0 0
    %302 = vmatpush1.bf16.msra.mxu0 0
    %303 = vmatprep.mubr.bf16.mxu0 0
    %304 = vmatmul.mubr.bf16.gmra.mrb[0].mxu0 %v269
    %v305 = vpop.f32.mrb[0].mxu0
    %v306 = vadd.f32 %v161, %v305
    %v307 = vpop.f32.mrb[0].mxu0
    %v308 = vpop.f32.mrb[0].mxu0
    %v309 = vpop.f32.mrb[0].mxu0
    %310 = vdwg.mxu0
    %v311 = vtanh.pop %v306
    %v312 = vpack.c.bf16 %v311, %v311
    %v314 = vsel %vm222, %v312, 0
    %316 = vmatprep.subr.bf16.mxu0 0
    %317 = vmatpush1.bf16.msra.mxu0 %v90
    %318 = vmatprep.subr.bf16.mxu0 0
    %319 = vmatpush1.bf16.msra.mxu0 %v91
    %320 = vmatprep.subr.bf16.mxu0 0
    %321 = vmatpush1.bf16.msra.mxu0 0
    %322 = vmatprep.subr.bf16.mxu0 0
    %323 = vmatpush1.bf16.msra.mxu0 0
    %324 = vmatprep.subr.bf16.mxu0 0
    %325 = vmatpush1.bf16.msra.mxu0 0
    %326 = vmatprep.subr.bf16.mxu0 0
    %327 = vmatpush1.bf16.msra.mxu0 0
    %328 = vmatprep.subr.bf16.mxu0 0
    %329 = vmatpush1.bf16.msra.mxu0 0
    %330 = vmatprep.subr.bf16.mxu0 0
    %331 = vmatpush1.bf16.msra.mxu0 0
    %332 = vmatprep.subr.bf16.mxu0 0
    %333 = vmatpush1.bf16.msra.mxu0 0
    %334 = vmatprep.subr.bf16.mxu0 0
    %335 = vmatpush1.bf16.msra.mxu0 0
    %336 = vmatprep.subr.bf16.mxu0 0
    %337 = vmatpush1.bf16.msra.mxu0 0
    %338 = vmatprep.subr.bf16.mxu0 0
    %339 = vmatpush1.bf16.msra.mxu0 0
    %340 = vmatprep.subr.bf16.mxu0 0
    %341 = vmatpush1.bf16.msra.mxu0 0
    %342 = vmatprep.subr.bf16.mxu0 0
    %343 = vmatpush1.bf16.msra.mxu0 0
    %344 = vmatprep.subr.bf16.mxu0 0
    %345 = vmatpush1.bf16.msra.mxu0 0
    %346 = vmatprep.subr.bf16.mxu0 0
    %347 = vmatpush1.bf16.msra.mxu0 0
    %348 = vmatprep.mubr.bf16.mxu0 0
    %349 = vmatmul.mubr.bf16.gmra.mrb[0].mxu0 %v314
    %v350 = vpop.f32.mrb[0].mxu0
    %v351 = vadd.f32 %v169, %v350
    %v352 = vpop.f32.mrb[0].mxu0
    %v353 = vpop.f32.mrb[0].mxu0
    %v354 = vpop.f32.mrb[0].mxu0
    %355 = vdwg.mxu0
    %v356 = vadd.f32 %v351, %v63
    %v357 = vpack.c.bf16 %v356, %v356
    %v359 = vsel %vm172, %v357, 0
    %361 = vmatprep.subr.bf16.mxu0 0
    %362 = vmatpush1.bf16.msra.mxu0 %v178
    %363 = vmatprep.subr.bf16.mxu0 0
    %364 = vmatpush1.bf16.msra.mxu0 0
    %365 = vmatprep.subr.bf16.mxu0 0
    %366 = vmatpush1.bf16.msra.mxu0 0
    %367 = vmatprep.subr.bf16.mxu0 0
    %368 = vmatpush1.bf16.msra.mxu0 0
    %369 = vmatprep.subr.bf16.mxu0 0
    %370 = vmatpush1.bf16.msra.mxu0 0
    %371 = vmatprep.subr.bf16.mxu0 0
    %372 = vmatpush1.bf16.msra.mxu0 0
    %373 = vmatprep.subr.bf16.mxu0 0
    %374 = vmatpush1.bf16.msra.mxu0 0
    %375 = vmatprep.subr.bf16.mxu0 0
    %376 = vmatpush1.bf16.msra.mxu0 0
    %377 = vmatprep.subr.bf16.mxu0 0
    %378 = vmatpush1.bf16.msra.mxu0 0
    %379 = vmatprep.subr.bf16.mxu0 0
    %380 = vmatpush1.bf16.msra.mxu0 0
    %381 = vmatprep.subr.bf16.mxu0 0
    %382 = vmatpush1.bf16.msra.mxu0 0
    %383 = vmatprep.subr.bf16.mxu0 0
    %384 = vmatpush1.bf16.msra.mxu0 0
    %385 = vmatprep.subr.bf16.mxu0 0
    %386 = vmatpush1.bf16.msra.mxu0 0
    %387 = vmatprep.subr.bf16.mxu0 0
    %388 = vmatpush1.bf16.msra.mxu0 0
    %389 = vmatprep.subr.bf16.mxu0 0
    %390 = vmatpush1.bf16.msra.mxu0 0
    %391 = vmatprep.subr.bf16.mxu0 0
    %392 = vmatpush1.bf16.msra.mxu0 0
    %393 = vmatprep.mubr.bf16.mxu0 0
    %394 = vmatmul.mubr.bf16.gmra.mrb[0].mxu0 %v359
    %v395 = vpop.f32.mrb[0].mxu0
    %v396 = vadd.f32 %v144, %v395
    %v397 = vpop.f32.mrb[0].mxu0
    %v398 = vpop.f32.mrb[0].mxu0
    %v399 = vpop.f32.mrb[0].mxu0
    %400 = vdwg.mxu0
    %v401 = vtanh.pop %v396
    %v402 = vpack.c.bf16 %v401, %v401
    %v404 = vsel %vm222, %v402, 0
    %406 = vmatprep.subr.bf16.mxu0 0
    %407 = vmatpush1.bf16.msra.mxu0 %v74
    %408 = vmatprep.subr.bf16.mxu0 0
    %409 = vmatpush1.bf16.msra.mxu0 %v75
    %410 = vmatprep.subr.bf16.mxu0 0
    %411 = vmatpush1.bf16.msra.mxu0 0
    %412 = vmatprep.subr.bf16.mxu0 0
    %413 = vmatpush1.bf16.msra.mxu0 0
    %414 = vmatprep.subr.bf16.mxu0 0
    %415 = vmatpush1.bf16.msra.mxu0 0
    %416 = vmatprep.subr.bf16.mxu0 0
    %417 = vmatpush1.bf16.msra.mxu0 0
    %418 = vmatprep.subr.bf16.mxu0 0
    %419 = vmatpush1.bf16.msra.mxu0 0
    %420 = vmatprep.subr.bf16.mxu0 0
    %421 = vmatpush1.bf16.msra.mxu0 0
    %422 = vmatprep.subr.bf16.mxu0 0
    %423 = vmatpush1.bf16.msra.mxu0 0
    %424 = vmatprep.subr.bf16.mxu0 0
    %425 = vmatpush1.bf16.msra.mxu0 0
    %426 = vmatprep.subr.bf16.mxu0 0
    %427 = vmatpush1.bf16.msra.mxu0 0
    %428 = vmatprep.subr.bf16.mxu0 0
    %429 = vmatpush1.bf16.msra.mxu0 0
    %430 = vmatprep.subr.bf16.mxu0 0
    %431 = vmatpush1.bf16.msra.mxu0 0
    %432 = vmatprep.subr.bf16.mxu0 0
    %433 = vmatpush1.bf16.msra.mxu0 0
    %434 = vmatprep.subr.bf16.mxu0 0
    %435 = vmatpush1.bf16.msra.mxu0 0
    %436 = vmatprep.subr.bf16.mxu0 0
    %437 = vmatpush1.bf16.msra.mxu0 0
    %438 = vmatprep.mubr.bf16.mxu0 0
    %439 = vmatmul.mubr.bf16.gmra.mrb[0].mxu0 %v404
    %v440 = vpop.f32.mrb[0].mxu0
    %v441 = vadd.f32 %v154, %v440
    %v442 = vpop.f32.mrb[0].mxu0
    %v443 = vpop.f32.mrb[0].mxu0
    %v444 = vpop.f32.mrb[0].mxu0
    %445 = vdwg.mxu0
    %v446 = vtanh.pop %v441
    %v447 = vpack.c.bf16 %v446, %v446
    %v449 = vsel %vm222, %v447, 0
    %451 = vmatprep.subr.bf16.mxu0 0
    %452 = vmatpush1.bf16.msra.mxu0 %v80
    %453 = vmatprep.subr.bf16.mxu0 0
    %454 = vmatpush1.bf16.msra.mxu0 %v81
    %455 = vmatprep.subr.bf16.mxu0 0
    %456 = vmatpush1.bf16.msra.mxu0 0
    %457 = vmatprep.subr.bf16.mxu0 0
    %458 = vmatpush1.bf16.msra.mxu0 0
    %459 = vmatprep.subr.bf16.mxu0 0
    %460 = vmatpush1.bf16.msra.mxu0 0
    %461 = vmatprep.subr.bf16.mxu0 0
    %462 = vmatpush1.bf16.msra.mxu0 0
    %463 = vmatprep.subr.bf16.mxu0 0
    %464 = vmatpush1.bf16.msra.mxu0 0
    %465 = vmatprep.subr.bf16.mxu0 0
    %466 = vmatpush1.bf16.msra.mxu0 0
    %467 = vmatprep.subr.bf16.mxu0 0
    %468 = vmatpush1.bf16.msra.mxu0 0
    %469 = vmatprep.subr.bf16.mxu0 0
    %470 = vmatpush1.bf16.msra.mxu0 0
    %471 = vmatprep.subr.bf16.mxu0 0
    %472 = vmatpush1.bf16.msra.mxu0 0
    %473 = vmatprep.subr.bf16.mxu0 0
    %474 = vmatpush1.bf16.msra.mxu0 0
    %475 = vmatprep.subr.bf16.mxu0 0
    %476 = vmatpush1.bf16.msra.mxu0 0
    %477 = vmatprep.subr.bf16.mxu0 0
    %478 = vmatpush1.bf16.msra.mxu0 0
    %479 = vmatprep.subr.bf16.mxu0 0
    %480 = vmatpush1.bf16.msra.mxu0 0
    %481 = vmatprep.subr.bf16.mxu0 0
    %482 = vmatpush1.bf16.msra.mxu0 0
    %483 = vmatprep.mubr.bf16.mxu0 0
    %484 = vmatmul.mubr.bf16.gmra.mrb[0].mxu0 %v449
    %v485 = vpop.f32.mrb[0].mxu0
    %v486 = vadd.f32 %v161, %v485
    %v487 = vpop.f32.mrb[0].mxu0
    %v488 = vpop.f32.mrb[0].mxu0
    %v489 = vpop.f32.mrb[0].mxu0
    %490 = vdwg.mxu0
    %v491 = vtanh.pop %v486
    %v492 = vpack.c.bf16 %v491, %v491
    %v494 = vsel %vm222, %v492, 0
    %496 = vmatprep.subr.bf16.mxu0 0
    %497 = vmatpush1.bf16.msra.mxu0 %v90
    %498 = vmatprep.subr.bf16.mxu0 0
    %499 = vmatpush1.bf16.msra.mxu0 %v91
    %500 = vmatprep.subr.bf16.mxu0 0
    %501 = vmatpush1.bf16.msra.mxu0 0
    %502 = vmatprep.subr.bf16.mxu0 0
    %503 = vmatpush1.bf16.msra.mxu0 0
    %504 = vmatprep.subr.bf16.mxu0 0
    %505 = vmatpush1.bf16.msra.mxu0 0
    %506 = vmatprep.subr.bf16.mxu0 0
    %507 = vmatpush1.bf16.msra.mxu0 0
    %508 = vmatprep.subr.bf16.mxu0 0
    %509 = vmatpush1.bf16.msra.mxu0 0
    %510 = vmatprep.subr.bf16.mxu0 0
    %511 = vmatpush1.bf16.msra.mxu0 0
    %512 = vmatprep.subr.bf16.mxu0 0
    %513 = vmatpush1.bf16.msra.mxu0 0
    %514 = vmatprep.subr.bf16.mxu0 0
    %515 = vmatpush1.bf16.msra.mxu0 0
    %516 = vmatprep.subr.bf16.mxu0 0
    %517 = vmatpush1.bf16.msra.mxu0 0
    %518 = vmatprep.subr.bf16.mxu0 0
    %519 = vmatpush1.bf16.msra.mxu0 0
    %520 = vmatprep.subr.bf16.mxu0 0
    %521 = vmatpush1.bf16.msra.mxu0 0
    %522 = vmatprep.subr.bf16.mxu0 0
    %523 = vmatpush1.bf16.msra.mxu0 0
    %524 = vmatprep.subr.bf16.mxu0 0
    %525 = vmatpush1.bf16.msra.mxu0 0
    %526 = vmatprep.subr.bf16.mxu0 0
    %527 = vmatpush1.bf16.msra.mxu0 0
    %528 = vmatprep.mubr.bf16.mxu0 0
    %529 = vmatmul.mubr.bf16.gmra.mrb[0].mxu0 %v494
    %v530 = vpop.f32.mrb[0].mxu0
    %v531 = vadd.f32 %v169, %v530
    %v532 = vpop.f32.mrb[0].mxu0
    %v533 = vpop.f32.mrb[0].mxu0
    %v534 = vpop.f32.mrb[0].mxu0
    %535 = vdwg.mxu0
    %v536 = vadd.f32 %v531, %v356
    %v537 = vpack.c.bf16 %v536, %v536
    %v539 = vsel %vm172, %v537, 0
    %541 = vmatprep.subr.bf16.mxu0 0
    %542 = vmatpush1.bf16.msra.mxu0 %v178
    %543 = vmatprep.subr.bf16.mxu0 0
    %544 = vmatpush1.bf16.msra.mxu0 0
    %545 = vmatprep.subr.bf16.mxu0 0
    %546 = vmatpush1.bf16.msra.mxu0 0
    %547 = vmatprep.subr.bf16.mxu0 0
    %548 = vmatpush1.bf16.msra.mxu0 0
    %549 = vmatprep.subr.bf16.mxu0 0
    %550 = vmatpush1.bf16.msra.mxu0 0
    %551 = vmatprep.subr.bf16.mxu0 0
    %552 = vmatpush1.bf16.msra.mxu0 0
    %553 = vmatprep.subr.bf16.mxu0 0
    %554 = vmatpush1.bf16.msra.mxu0 0
    %555 = vmatprep.subr.bf16.mxu0 0
    %556 = vmatpush1.bf16.msra.mxu0 0
    %557 = vmatprep.subr.bf16.mxu0 0
    %558 = vmatpush1.bf16.msra.mxu0 0
    %559 = vmatprep.subr.bf16.mxu0 0
    %560 = vmatpush1.bf16.msra.mxu0 0
    %561 = vmatprep.subr.bf16.mxu0 0
    %562 = vmatpush1.bf16.msra.mxu0 0
    %563 = vmatprep.subr.bf16.mxu0 0
    %564 = vmatpush1.bf16.msra.mxu0 0
    %565 = vmatprep.subr.bf16.mxu0 0
    %566 = vmatpush1.bf16.msra.mxu0 0
    %567 = vmatprep.subr.bf16.mxu0 0
    %568 = vmatpush1.bf16.msra.mxu0 0
    %569 = vmatprep.subr.bf16.mxu0 0
    %570 = vmatpush1.bf16.msra.mxu0 0
    %571 = vmatprep.subr.bf16.mxu0 0
    %572 = vmatpush1.bf16.msra.mxu0 0
    %573 = vmatprep.mubr.bf16.mxu0 0
    %574 = vmatmul.mubr.bf16.gmra.mrb[0].mxu0 %v539
    %v575 = vpop.f32.mrb[0].mxu0
    %v576 = vadd.f32 %v144, %v575
    %v577 = vpop.f32.mrb[0].mxu0
    %v578 = vpop.f32.mrb[0].mxu0
    %v579 = vpop.f32.mrb[0].mxu0
    %580 = vdwg.mxu0
    %v581 = vtanh.pop %v576
    %v582 = vpack.c.bf16 %v581, %v581
    %v584 = vsel %vm222, %v582, 0
    %586 = vmatprep.subr.bf16.mxu0 0
    %587 = vmatpush1.bf16.msra.mxu0 %v74
    %588 = vmatprep.subr.bf16.mxu0 0
    %589 = vmatpush1.bf16.msra.mxu0 %v75
    %590 = vmatprep.subr.bf16.mxu0 0
    %591 = vmatpush1.bf16.msra.mxu0 0
    %592 = vmatprep.subr.bf16.mxu0 0
    %593 = vmatpush1.bf16.msra.mxu0 0
    %594 = vmatprep.subr.bf16.mxu0 0
    %595 = vmatpush1.bf16.msra.mxu0 0
    %596 = vmatprep.subr.bf16.mxu0 0
    %597 = vmatpush1.bf16.msra.mxu0 0
    %598 = vmatprep.subr.bf16.mxu0 0
    %599 = vmatpush1.bf16.msra.mxu0 0
    %600 = vmatprep.subr.bf16.mxu0 0
    %601 = vmatpush1.bf16.msra.mxu0 0
    %602 = vmatprep.subr.bf16.mxu0 0
    %603 = vmatpush1.bf16.msra.mxu0 0
    %604 = vmatprep.subr.bf16.mxu0 0
    %605 = vmatpush1.bf16.msra.mxu0 0
    %606 = vmatprep.subr.bf16.mxu0 0
    %607 = vmatpush1.bf16.msra.mxu0 0
    %608 = vmatprep.subr.bf16.mxu0 0
    %609 = vmatpush1.bf16.msra.mxu0 0
    %610 = vmatprep.subr.bf16.mxu0 0
    %611 = vmatpush1.bf16.msra.mxu0 0
    %612 = vmatprep.subr.bf16.mxu0 0
    %613 = vmatpush1.bf16.msra.mxu0 0
    %614 = vmatprep.subr.bf16.mxu0 0
    %615 = vmatpush1.bf16.msra.mxu0 0
    %616 = vmatprep.subr.bf16.mxu0 0
    %617 = vmatpush1.bf16.msra.mxu0 0
    %618 = vmatprep.mubr.bf16.mxu0 0
    %619 = vmatmul.mubr.bf16.gmra.mrb[0].mxu0 %v584
    %v620 = vpop.f32.mrb[0].mxu0
    %v621 = vadd.f32 %v154, %v620
    %v622 = vpop.f32.mrb[0].mxu0
    %v623 = vpop.f32.mrb[0].mxu0
    %v624 = vpop.f32.mrb[0].mxu0
    %625 = vdwg.mxu0
    %v626 = vtanh.pop %v621
    %v627 = vpack.c.bf16 %v626, %v626
    %v629 = vsel %vm222, %v627, 0
    %631 = vmatprep.subr.bf16.mxu0 0
    %632 = vmatpush1.bf16.msra.mxu0 %v80
    %633 = vmatprep.subr.bf16.mxu0 0
    %634 = vmatpush1.bf16.msra.mxu0 %v81
    %635 = vmatprep.subr.bf16.mxu0 0
    %636 = vmatpush1.bf16.msra.mxu0 0
    %637 = vmatprep.subr.bf16.mxu0 0
    %638 = vmatpush1.bf16.msra.mxu0 0
    %639 = vmatprep.subr.bf16.mxu0 0
    %640 = vmatpush1.bf16.msra.mxu0 0
    %641 = vmatprep.subr.bf16.mxu0 0
    %642 = vmatpush1.bf16.msra.mxu0 0
    %643 = vmatprep.subr.bf16.mxu0 0
    %644 = vmatpush1.bf16.msra.mxu0 0
    %645 = vmatprep.subr.bf16.mxu0 0
    %646 = vmatpush1.bf16.msra.mxu0 0
    %647 = vmatprep.subr.bf16.mxu0 0
    %648 = vmatpush1.bf16.msra.mxu0 0
    %649 = vmatprep.subr.bf16.mxu0 0
    %650 = vmatpush1.bf16.msra.mxu0 0
    %651 = vmatprep.subr.bf16.mxu0 0
    %652 = vmatpush1.bf16.msra.mxu0 0
    %653 = vmatprep.subr.bf16.mxu0 0
    %654 = vmatpush1.bf16.msra.mxu0 0
    %655 = vmatprep.subr.bf16.mxu0 0
    %656 = vmatpush1.bf16.msra.mxu0 0
    %657 = vmatprep.subr.bf16.mxu0 0
    %658 = vmatpush1.bf16.msra.mxu0 0
    %659 = vmatprep.subr.bf16.mxu0 0
    %660 = vmatpush1.bf16.msra.mxu0 0
    %661 = vmatprep.subr.bf16.mxu0 0
    %662 = vmatpush1.bf16.msra.mxu0 0
    %663 = vmatprep.mubr.bf16.mxu0 0
    %664 = vmatmul.mubr.bf16.gmra.mrb[0].mxu0 %v629
    %v665 = vpop.f32.mrb[0].mxu0
    %v666 = vadd.f32 %v161, %v665
    %v667 = vpop.f32.mrb[0].mxu0
    %v668 = vpop.f32.mrb[0].mxu0
    %v669 = vpop.f32.mrb[0].mxu0
    %670 = vdwg.mxu0
    %v671 = vtanh.pop %v666
    %v672 = vpack.c.bf16 %v671, %v671
    %v674 = vsel %vm222, %v672, 0
    %676 = vmatprep.subr.bf16.mxu0 0
    %677 = vmatpush1.bf16.msra.mxu0 %v90
    %678 = vmatprep.subr.bf16.mxu0 0
    %679 = vmatpush1.bf16.msra.mxu0 %v91
    %680 = vmatprep.subr.bf16.mxu0 0
    %681 = vmatpush1.bf16.msra.mxu0 0
    %682 = vmatprep.subr.bf16.mxu0 0
    %683 = vmatpush1.bf16.msra.mxu0 0
    %684 = vmatprep.subr.bf16.mxu0 0
    %685 = vmatpush1.bf16.msra.mxu0 0
    %686 = vmatprep.subr.bf16.mxu0 0
    %687 = vmatpush1.bf16.msra.mxu0 0
    %688 = vmatprep.subr.bf16.mxu0 0
    %689 = vmatpush1.bf16.msra.mxu0 0
    %690 = vmatprep.subr.bf16.mxu0 0
    %691 = vmatpush1.bf16.msra.mxu0 0
    %692 = vmatprep.subr.bf16.mxu0 0
    %693 = vmatpush1.bf16.msra.mxu0 0
    %694 = vmatprep.subr.bf16.mxu0 0
    %695 = vmatpush1.bf16.msra.mxu0 0
    %696 = vmatprep.subr.bf16.mxu0 0
    %697 = vmatpush1.bf16.msra.mxu0 0
    %698 = vmatprep.subr.bf16.mxu0 0
    %699 = vmatpush1.bf16.msra.mxu0 0
    %700 = vmatprep.subr.bf16.mxu0 0
    %701 = vmatpush1.bf16.msra.mxu0 0
    %702 = vmatprep.subr.bf16.mxu0 0
    %703 = vmatpush1.bf16.msra.mxu0 0
    %704 = vmatprep.subr.bf16.mxu0 0
    %705 = vmatpush1.bf16.msra.mxu0 0
    %706 = vmatprep.subr.bf16.mxu0 0
    %707 = vmatpush1.bf16.msra.mxu0 0
    %708 = vmatprep.mubr.bf16.mxu0 0
    %709 = vmatmul.mubr.bf16.gmra.mrb[0].mxu0 %v674
    %v710 = vpop.f32.mrb[0].mxu0
    %v711 = vadd.f32 %v169, %v710
    %v712 = vpop.f32.mrb[0].mxu0
    %v713 = vpop.f32.mrb[0].mxu0
    %v714 = vpop.f32.mrb[0].mxu0
    %715 = vdwg.mxu0
    %v716 = vadd.f32 %v711, %v536
    %v717 = vpack.c.bf16 %v716, %v716
    %v719 = vsel %vm172, %v717, 0
    %721 = vmatprep.subr.bf16.mxu0 0
    %722 = vmatpush1.bf16.msra.mxu0 %v178
    %723 = vmatprep.subr.bf16.mxu0 0
    %724 = vmatpush1.bf16.msra.mxu0 0
    %725 = vmatprep.subr.bf16.mxu0 0
    %726 = vmatpush1.bf16.msra.mxu0 0
    %727 = vmatprep.subr.bf16.mxu0 0
    %728 = vmatpush1.bf16.msra.mxu0 0
    %729 = vmatprep.subr.bf16.mxu0 0
    %730 = vmatpush1.bf16.msra.mxu0 0
    %731 = vmatprep.subr.bf16.mxu0 0
    %732 = vmatpush1.bf16.msra.mxu0 0
    %733 = vmatprep.subr.bf16.mxu0 0
    %734 = vmatpush1.bf16.msra.mxu0 0
    %735 = vmatprep.subr.bf16.mxu0 0
    %736 = vmatpush1.bf16.msra.mxu0 0
    %737 = vmatprep.subr.bf16.mxu0 0
    %738 = vmatpush1.bf16.msra.mxu0 0
    %739 = vmatprep.subr.bf16.mxu0 0
    %740 = vmatpush1.bf16.msra.mxu0 0
    %741 = vmatprep.subr.bf16.mxu0 0
    %742 = vmatpush1.bf16.msra.mxu0 0
    %743 = vmatprep.subr.bf16.mxu0 0
    %744 = vmatpush1.bf16.msra.mxu0 0
    %745 = vmatprep.subr.bf16.mxu0 0
    %746 = vmatpush1.bf16.msra.mxu0 0
    %747 = vmatprep.subr.bf16.mxu0 0
    %748 = vmatpush1.bf16.msra.mxu0 0
    %749 = vmatprep.subr.bf16.mxu0 0
    %750 = vmatpush1.bf16.msra.mxu0 0
    %751 = vmatprep.subr.bf16.mxu0 0
    %752 = vmatpush1.bf16.msra.mxu0 0
    %753 = vmatprep.mubr.bf16.mxu0 0
    %754 = vmatmul.mubr.bf16.gmra.mrb[0].mxu0 %v719
    %v755 = vpop.f32.mrb[0].mxu0
    %v756 = vadd.f32 %v144, %v755
    %v757 = vpop.f32.mrb[0].mxu0
    %v758 = vpop.f32.mrb[0].mxu0
    %v759 = vpop.f32.mrb[0].mxu0
    %760 = vdwg.mxu0
    %v761 = vtanh.pop %v756
    %v762 = vpack.c.bf16 %v761, %v761
    %v764 = vsel %vm222, %v762, 0
    %766 = vmatprep.subr.bf16.mxu0 0
    %767 = vmatpush1.bf16.msra.mxu0 %v74
    %768 = vmatprep.subr.bf16.mxu0 0
    %769 = vmatpush1.bf16.msra.mxu0 %v75
    %770 = vmatprep.subr.bf16.mxu0 0
    %771 = vmatpush1.bf16.msra.mxu0 0
    %772 = vmatprep.subr.bf16.mxu0 0
    %773 = vmatpush1.bf16.msra.mxu0 0
    %774 = vmatprep.subr.bf16.mxu0 0
    %775 = vmatpush1.bf16.msra.mxu0 0
    %776 = vmatprep.subr.bf16.mxu0 0
    %777 = vmatpush1.bf16.msra.mxu0 0
    %778 = vmatprep.subr.bf16.mxu0 0
    %779 = vmatpush1.bf16.msra.mxu0 0
    %780 = vmatprep.subr.bf16.mxu0 0
    %781 = vmatpush1.bf16.msra.mxu0 0
    %782 = vmatprep.subr.bf16.mxu0 0
    %783 = vmatpush1.bf16.msra.mxu0 0
    %784 = vmatprep.subr.bf16.mxu0 0
    %785 = vmatpush1.bf16.msra.mxu0 0
    %786 = vmatprep.subr.bf16.mxu0 0
    %787 = vmatpush1.bf16.msra.mxu0 0
    %788 = vmatprep.subr.bf16.mxu0 0
    %789 = vmatpush1.bf16.msra.mxu0 0
    %790 = vmatprep.subr.bf16.mxu0 0
    %791 = vmatpush1.bf16.msra.mxu0 0
    %792 = vmatprep.subr.bf16.mxu0 0
    %793 = vmatpush1.bf16.msra.mxu0 0
    %794 = vmatprep.subr.bf16.mxu0 0
    %795 = vmatpush1.bf16.msra.mxu0 0
    %796 = vmatprep.subr.bf16.mxu0 0
    %797 = vmatpush1.bf16.msra.mxu0 0
    %798 = vmatprep.mubr.bf16.mxu0 0
    %799 = vmatmul.mubr.bf16.gmra.mrb[0].mxu0 %v764
    %v800 = vpop.f32.mrb[0].mxu0
    %v801 = vadd.f32 %v154, %v800
    %v802 = vpop.f32.mrb[0].mxu0
    %v803 = vpop.f32.mrb[0].mxu0
    %v804 = vpop.f32.mrb[0].mxu0
    %805 = vdwg.mxu0
    %v806 = vtanh.pop %v801
    %v807 = vpack.c.bf16 %v806, %v806
    %v809 = vsel %vm222, %v807, 0
    %811 = vmatprep.subr.bf16.mxu0 0
    %812 = vmatpush1.bf16.msra.mxu0 %v80
    %813 = vmatprep.subr.bf16.mxu0 0
    %814 = vmatpush1.bf16.msra.mxu0 %v81
    %815 = vmatprep.subr.bf16.mxu0 0
    %816 = vmatpush1.bf16.msra.mxu0 0
    %817 = vmatprep.subr.bf16.mxu0 0
    %818 = vmatpush1.bf16.msra.mxu0 0
    %819 = vmatprep.subr.bf16.mxu0 0
    %820 = vmatpush1.bf16.msra.mxu0 0
    %821 = vmatprep.subr.bf16.mxu0 0
    %822 = vmatpush1.bf16.msra.mxu0 0
    %823 = vmatprep.subr.bf16.mxu0 0
    %824 = vmatpush1.bf16.msra.mxu0 0
    %825 = vmatprep.subr.bf16.mxu0 0
    %826 = vmatpush1.bf16.msra.mxu0 0
    %827 = vmatprep.subr.bf16.mxu0 0
    %828 = vmatpush1.bf16.msra.mxu0 0
    %829 = vmatprep.subr.bf16.mxu0 0
    %830 = vmatpush1.bf16.msra.mxu0 0
    %831 = vmatprep.subr.bf16.mxu0 0
    %832 = vmatpush1.bf16.msra.mxu0 0
    %833 = vmatprep.subr.bf16.mxu0 0
    %834 = vmatpush1.bf16.msra.mxu0 0
    %835 = vmatprep.subr.bf16.mxu0 0
    %836 = vmatpush1.bf16.msra.mxu0 0
    %837 = vmatprep.subr.bf16.mxu0 0
    %838 = vmatpush1.bf16.msra.mxu0 0
    %839 = vmatprep.subr.bf16.mxu0 0
    %840 = vmatpush1.bf16.msra.mxu0 0
    %841 = vmatprep.subr.bf16.mxu0 0
    %842 = vmatpush1.bf16.msra.mxu0 0
    %843 = vmatprep.mubr.bf16.mxu0 0
    %844 = vmatmul.mubr.bf16.gmra.mrb[0].mxu0 %v809
    %v845 = vpop.f32.mrb[0].mxu0
    %v846 = vadd.f32 %v161, %v845
    %v847 = vpop.f32.mrb[0].mxu0
    %v848 = vpop.f32.mrb[0].mxu0
    %v849 = vpop.f32.mrb[0].mxu0
    %850 = vdwg.mxu0
    %v851 = vtanh.pop %v846
    %v852 = vpack.c.bf16 %v851, %v851
    %v854 = vsel %vm222, %v852, 0
    %856 = vmatprep.subr.bf16.mxu0 0
    %857 = vmatpush1.bf16.msra.mxu0 %v90
    %858 = vmatprep.subr.bf16.mxu0 0
    %859 = vmatpush1.bf16.msra.mxu0 %v91
    %860 = vmatprep.subr.bf16.mxu0 0
    %861 = vmatpush1.bf16.msra.mxu0 0
    %862 = vmatprep.subr.bf16.mxu0 0
    %863 = vmatpush1.bf16.msra.mxu0 0
    %864 = vmatprep.subr.bf16.mxu0 0
    %865 = vmatpush1.bf16.msra.mxu0 0
    %866 = vmatprep.subr.bf16.mxu0 0
    %867 = vmatpush1.bf16.msra.mxu0 0
    %868 = vmatprep.subr.bf16.mxu0 0
    %869 = vmatpush1.bf16.msra.mxu0 0
    %870 = vmatprep.subr.bf16.mxu0 0
    %871 = vmatpush1.bf16.msra.mxu0 0
    %872 = vmatprep.subr.bf16.mxu0 0
    %873 = vmatpush1.bf16.msra.mxu0 0
    %874 = vmatprep.subr.bf16.mxu0 0
    %875 = vmatpush1.bf16.msra.mxu0 0
    %876 = vmatprep.subr.bf16.mxu0 0
    %877 = vmatpush1.bf16.msra.mxu0 0
    %878 = vmatprep.subr.bf16.mxu0 0
    %879 = vmatpush1.bf16.msra.mxu0 0
    %880 = vmatprep.subr.bf16.mxu0 0
    %881 = vmatpush1.bf16.msra.mxu0 0
    %882 = vmatprep.subr.bf16.mxu0 0
    %883 = vmatpush1.bf16.msra.mxu0 0
    %884 = vmatprep.subr.bf16.mxu0 0
    %885 = vmatpush1.bf16.msra.mxu0 0
    %886 = vmatprep.subr.bf16.mxu0 0
    %887 = vmatpush1.bf16.msra.mxu0 0
    %888 = vmatprep.mubr.bf16.mxu0 0
    %889 = vmatmul.mubr.bf16.gmra.mrb[0].mxu0 %v854
    %v890 = vpop.f32.mrb[0].mxu0
    %v891 = vadd.f32 %v169, %v890
    %v892 = vpop.f32.mrb[0].mxu0
    %v893 = vpop.f32.mrb[0].mxu0
    %v894 = vpop.f32.mrb[0].mxu0
    %895 = vdwg.mxu0
    %v896 = vadd.f32 %v891, %v716
    %v897 = vpack.c.bf16 %v896, %v896
    %v899 = vsel %vm172, %v897, 0
    %901 = vmatprep.subr.bf16.mxu0 0
    %902 = vmatpush1.bf16.msra.mxu0 %v178
    %903 = vmatprep.subr.bf16.mxu0 0
    %904 = vmatpush1.bf16.msra.mxu0 0
    %905 = vmatprep.subr.bf16.mxu0 0
    %906 = vmatpush1.bf16.msra.mxu0 0
    %907 = vmatprep.subr.bf16.mxu0 0
    %908 = vmatpush1.bf16.msra.mxu0 0
    %909 = vmatprep.subr.bf16.mxu0 0
    %910 = vmatpush1.bf16.msra.mxu0 0
    %911 = vmatprep.subr.bf16.mxu0 0
    %912 = vmatpush1.bf16.msra.mxu0 0
    %913 = vmatprep.subr.bf16.mxu0 0
    %914 = vmatpush1.bf16.msra.mxu0 0
    %915 = vmatprep.subr.bf16.mxu0 0
    %916 = vmatpush1.bf16.msra.mxu0 0
    %917 = vmatprep.subr.bf16.mxu0 0
    %918 = vmatpush1.bf16.msra.mxu0 0
    %919 = vmatprep.subr.bf16.mxu0 0
    %920 = vmatpush1.bf16.msra.mxu0 0
    %921 = vmatprep.subr.bf16.mxu0 0
    %922 = vmatpush1.bf16.msra.mxu0 0
    %923 = vmatprep.subr.bf16.mxu0 0
    %924 = vmatpush1.bf16.msra.mxu0 0
    %925 = vmatprep.subr.bf16.mxu0 0
    %926 = vmatpush1.bf16.msra.mxu0 0
    %927 = vmatprep.subr.bf16.mxu0 0
    %928 = vmatpush1.bf16.msra.mxu0 0
    %929 = vmatprep.subr.bf16.mxu0 0
    %930 = vmatpush1.bf16.msra.mxu0 0
    %931 = vmatprep.subr.bf16.mxu0 0
    %932 = vmatpush1.bf16.msra.mxu0 0
    %933 = vmatprep.mubr.bf16.mxu0 0
    %934 = vmatmul.mubr.bf16.gmra.mrb[0].mxu0 %v899
    %v935 = vpop.f32.mrb[0].mxu0
    %v936 = vadd.f32 %v144, %v935
    %v937 = vpop.f32.mrb[0].mxu0
    %v938 = vpop.f32.mrb[0].mxu0
    %v939 = vpop.f32.mrb[0].mxu0
    %940 = vdwg.mxu0
    %v941 = vtanh.pop %v936
    %v942 = vpack.c.bf16 %v941, %v941
    %v944 = vsel %vm222, %v942, 0
    %946 = vmatprep.subr.bf16.mxu0 0
    %947 = vmatpush1.bf16.msra.mxu0 %v74
    %948 = vmatprep.subr.bf16.mxu0 0
    %949 = vmatpush1.bf16.msra.mxu0 %v75
    %950 = vmatprep.subr.bf16.mxu0 0
    %951 = vmatpush1.bf16.msra.mxu0 0
    %952 = vmatprep.subr.bf16.mxu0 0
    %953 = vmatpush1.bf16.msra.mxu0 0
    %954 = vmatprep.subr.bf16.mxu0 0
    %955 = vmatpush1.bf16.msra.mxu0 0
    %956 = vmatprep.subr.bf16.mxu0 0
    %957 = vmatpush1.bf16.msra.mxu0 0
    %958 = vmatprep.subr.bf16.mxu0 0
    %959 = vmatpush1.bf16.msra.mxu0 0
    %960 = vmatprep.subr.bf16.mxu0 0
    %961 = vmatpush1.bf16.msra.mxu0 0
    %962 = vmatprep.subr.bf16.mxu0 0
    %963 = vmatpush1.bf16.msra.mxu0 0
    %964 = vmatprep.subr.bf16.mxu0 0
    %965 = vmatpush1.bf16.msra.mxu0 0
    %966 = vmatprep.subr.bf16.mxu0 0
    %967 = vmatpush1.bf16.msra.mxu0 0
    %968 = vmatprep.subr.bf16.mxu0 0
    %969 = vmatpush1.bf16.msra.mxu0 0
    %970 = vmatprep.subr.bf16.mxu0 0
    %971 = vmatpush1.bf16.msra.mxu0 0
    %972 = vmatprep.subr.bf16.mxu0 0
    %973 = vmatpush1.bf16.msra.mxu0 0
    %974 = vmatprep.subr.bf16.mxu0 0
    %975 = vmatpush1.bf16.msra.mxu0 0
    %976 = vmatprep.subr.bf16.mxu0 0
    %977 = vmatpush1.bf16.msra.mxu0 0
    %978 = vmatprep.mubr.bf16.mxu0 0
    %979 = vmatmul.mubr.bf16.gmra.mrb[0].mxu0 %v944
    %v980 = vpop.f32.mrb[0].mxu0
    %v981 = vadd.f32 %v154, %v980
    %v982 = vpop.f32.mrb[0].mxu0
    %v983 = vpop.f32.mrb[0].mxu0
    %v984 = vpop.f32.mrb[0].mxu0
    %985 = vdwg.mxu0
    %v986 = vtanh.pop %v981
    %v987 = vpack.c.bf16 %v986, %v986
    %v989 = vsel %vm222, %v987, 0
    %991 = vmatprep.subr.bf16.mxu0 0
    %992 = vmatpush1.bf16.msra.mxu0 %v80
    %993 = vmatprep.subr.bf16.mxu0 0
    %994 = vmatpush1.bf16.msra.mxu0 %v81
    %995 = vmatprep.subr.bf16.mxu0 0
    %996 = vmatpush1.bf16.msra.mxu0 0
    %997 = vmatprep.subr.bf16.mxu0 0
    %998 = vmatpush1.bf16.msra.mxu0 0
    %999 = vmatprep.subr.bf16.mxu0 0
    %1000 = vmatpush1.bf16.msra.mxu0 0
    %1001 = vmatprep.subr.bf16.mxu0 0
    %1002 = vmatpush1.bf16.msra.mxu0 0
    %1003 = vmatprep.subr.bf16.mxu0 0
    %1004 = vmatpush1.bf16.msra.mxu0 0
    %1005 = vmatprep.subr.bf16.mxu0 0
    %1006 = vmatpush1.bf16.msra.mxu0 0
    %1007 = vmatprep.subr.bf16.mxu0 0
    %1008 = vmatpush1.bf16.msra.mxu0 0
    %1009 = vmatprep.subr.bf16.mxu0 0
    %1010 = vmatpush1.bf16.msra.mxu0 0
    %1011 = vmatprep.subr.bf16.mxu0 0
    %1012 = vmatpush1.bf16.msra.mxu0 0
    %1013 = vmatprep.subr.bf16.mxu0 0
    %1014 = vmatpush1.bf16.msra.mxu0 0
    %1015 = vmatprep.subr.bf16.mxu0 0
    %1016 = vmatpush1.bf16.msra.mxu0 0
    %1017 = vmatprep.subr.bf16.mxu0 0
    %1018 = vmatpush1.bf16.msra.mxu0 0
    %1019 = vmatprep.subr.bf16.mxu0 0
    %1020 = vmatpush1.bf16.msra.mxu0 0
    %1021 = vmatprep.subr.bf16.mxu0 0
    %1022 = vmatpush1.bf16.msra.mxu0 0
    %1023 = vmatprep.mubr.bf16.mxu0 0
    %1024 = vmatmul.mubr.bf16.gmra.mrb[0].mxu0 %v989
    %v1025 = vpop.f32.mrb[0].mxu0
    %v1026 = vadd.f32 %v161, %v1025
    %v1027 = vpop.f32.mrb[0].mxu0
    %v1028 = vpop.f32.mrb[0].mxu0
    %v1029 = vpop.f32.mrb[0].mxu0
    %1030 = vdwg.mxu0
    %v1031 = vtanh.pop %v1026
    %v1032 = vpack.c.bf16 %v1031, %v1031
    %v1034 = vsel %vm222, %v1032, 0
    %1036 = vmatprep.subr.bf16.mxu0 0
    %1037 = vmatpush1.bf16.msra.mxu0 %v90
    %1038 = vmatprep.subr.bf16.mxu0 0
    %1039 = vmatpush1.bf16.msra.mxu0 %v91
    %1040 = vmatprep.subr.bf16.mxu0 0
    %1041 = vmatpush1.bf16.msra.mxu0 0
    %1042 = vmatprep.subr.bf16.mxu0 0
    %1043 = vmatpush1.bf16.msra.mxu0 0
    %1044 = vmatprep.subr.bf16.mxu0 0
    %1045 = vmatpush1.bf16.msra.mxu0 0
    %1046 = vmatprep.subr.bf16.mxu0 0
    %1047 = vmatpush1.bf16.msra.mxu0 0
    %1048 = vmatprep.subr.bf16.mxu0 0
    %1049 = vmatpush1.bf16.msra.mxu0 0
    %1050 = vmatprep.subr.bf16.mxu0 0
    %1051 = vmatpush1.bf16.msra.mxu0 0
    %1052 = vmatprep.subr.bf16.mxu0 0
    %1053 = vmatpush1.bf16.msra.mxu0 0
    %1054 = vmatprep.subr.bf16.mxu0 0
    %1055 = vmatpush1.bf16.msra.mxu0 0
    %1056 = vmatprep.subr.bf16.mxu0 0
    %1057 = vmatpush1.bf16.msra.mxu0 0
    %1058 = vmatprep.subr.bf16.mxu0 0
    %1059 = vmatpush1.bf16.msra.mxu0 0
    %1060 = vmatprep.subr.bf16.mxu0 0
    %1061 = vmatpush1.bf16.msra.mxu0 0
    %1062 = vmatprep.subr.bf16.mxu0 0
    %1063 = vmatpush1.bf16.msra.mxu0 0
    %1064 = vmatprep.subr.bf16.mxu0 0
    %1065 = vmatpush1.bf16.msra.mxu0 0
    %1066 = vmatprep.subr.bf16.mxu0 0
    %1067 = vmatpush1.bf16.msra.mxu0 0
    %1068 = vmatprep.mubr.bf16.mxu0 0
    %1069 = vmatmul.mubr.bf16.gmra.mrb[0].mxu0 %v1034
    %v1070 = vpop.f32.mrb[0].mxu0
    %v1071 = vadd.f32 %v169, %v1070
    %v1072 = vpop.f32.mrb[0].mxu0
    %v1073 = vpop.f32.mrb[0].mxu0
    %v1074 = vpop.f32.mrb[0].mxu0
    %1075 = vdwg.mxu0
    %v1076 = vadd.f32 %v1071, %v896
    %v1077 = vpack.c.bf16 %v1076, %v1076
    %v1079 = vsel %vm172, %v1077, 0
    %1081 = vmatprep.subr.bf16.mxu0 0
    %1082 = vmatpush1.bf16.msra.mxu0 %v178
    %1083 = vmatprep.subr.bf16.mxu0 0
    %1084 = vmatpush1.bf16.msra.mxu0 0
    %1085 = vmatprep.subr.bf16.mxu0 0
    %1086 = vmatpush1.bf16.msra.mxu0 0
    %1087 = vmatprep.subr.bf16.mxu0 0
    %1088 = vmatpush1.bf16.msra.mxu0 0
    %1089 = vmatprep.subr.bf16.mxu0 0
    %1090 = vmatpush1.bf16.msra.mxu0 0
    %1091 = vmatprep.subr.bf16.mxu0 0
    %1092 = vmatpush1.bf16.msra.mxu0 0
    %1093 = vmatprep.subr.bf16.mxu0 0
    %1094 = vmatpush1.bf16.msra.mxu0 0
    %1095 = vmatprep.subr.bf16.mxu0 0
    %1096 = vmatpush1.bf16.msra.mxu0 0
    %1097 = vmatprep.subr.bf16.mxu0 0
    %1098 = vmatpush1.bf16.msra.mxu0 0
    %1099 = vmatprep.subr.bf16.mxu0 0
    %1100 = vmatpush1.bf16.msra.mxu0 0
    %1101 = vmatprep.subr.bf16.mxu0 0
    %1102 = vmatpush1.bf16.msra.mxu0 0
    %1103 = vmatprep.subr.bf16.mxu0 0
    %1104 = vmatpush1.bf16.msra.mxu0 0
    %1105 = vmatprep.subr.bf16.mxu0 0
    %1106 = vmatpush1.bf16.msra.mxu0 0
    %1107 = vmatprep.subr.bf16.mxu0 0
    %1108 = vmatpush1.bf16.msra.mxu0 0
    %1109 = vmatprep.subr.bf16.mxu0 0
    %1110 = vmatpush1.bf16.msra.mxu0 0
    %1111 = vmatprep.subr.bf16.mxu0 0
    %1112 = vmatpush1.bf16.msra.mxu0 0
    %1113 = vmatprep.mubr.bf16.mxu0 0
    %1114 = vmatmul.mubr.bf16.gmra.mrb[0].mxu0 %v1079
    %v1115 = vpop.f32.mrb[0].mxu0
    %v1116 = vadd.f32 %v144, %v1115
    %v1117 = vpop.f32.mrb[0].mxu0
    %v1118 = vpop.f32.mrb[0].mxu0
    %v1119 = vpop.f32.mrb[0].mxu0
    %1120 = vdwg.mxu0
    %v1121 = vtanh.pop %v1116
    %v1122 = vpack.c.bf16 %v1121, %v1121
    %v1124 = vsel %vm222, %v1122, 0
    %1126 = vmatprep.subr.bf16.mxu0 0
    %1127 = vmatpush1.bf16.msra.mxu0 %v74
    %1128 = vmatprep.subr.bf16.mxu0 0
    %1129 = vmatpush1.bf16.msra.mxu0 %v75
    %1130 = vmatprep.subr.bf16.mxu0 0
    %1131 = vmatpush1.bf16.msra.mxu0 0
    %1132 = vmatprep.subr.bf16.mxu0 0
    %1133 = vmatpush1.bf16.msra.mxu0 0
    %1134 = vmatprep.subr.bf16.mxu0 0
    %1135 = vmatpush1.bf16.msra.mxu0 0
    %1136 = vmatprep.subr.bf16.mxu0 0
    %1137 = vmatpush1.bf16.msra.mxu0 0
    %1138 = vmatprep.subr.bf16.mxu0 0
    %1139 = vmatpush1.bf16.msra.mxu0 0
    %1140 = vmatprep.subr.bf16.mxu0 0
    %1141 = vmatpush1.bf16.msra.mxu0 0
    %1142 = vmatprep.subr.bf16.mxu0 0
    %1143 = vmatpush1.bf16.msra.mxu0 0
    %1144 = vmatprep.subr.bf16.mxu0 0
    %1145 = vmatpush1.bf16.msra.mxu0 0
    %1146 = vmatprep.subr.bf16.mxu0 0
    %1147 = vmatpush1.bf16.msra.mxu0 0
    %1148 = vmatprep.subr.bf16.mxu0 0
    %1149 = vmatpush1.bf16.msra.mxu0 0
    %1150 = vmatprep.subr.bf16.mxu0 0
    %1151 = vmatpush1.bf16.msra.mxu0 0
    %1152 = vmatprep.subr.bf16.mxu0 0
    %1153 = vmatpush1.bf16.msra.mxu0 0
    %1154 = vmatprep.subr.bf16.mxu0 0
    %1155 = vmatpush1.bf16.msra.mxu0 0
    %1156 = vmatprep.subr.bf16.mxu0 0
    %1157 = vmatpush1.bf16.msra.mxu0 0
    %1158 = vmatprep.mubr.bf16.mxu0 0
    %1159 = vmatmul.mubr.bf16.gmra.mrb[0].mxu0 %v1124
    %v1160 = vpop.f32.mrb[0].mxu0
    %v1161 = vadd.f32 %v154, %v1160
    %v1162 = vpop.f32.mrb[0].mxu0
    %v1163 = vpop.f32.mrb[0].mxu0
    %v1164 = vpop.f32.mrb[0].mxu0
    %1165 = vdwg.mxu0
    %v1166 = vtanh.pop %v1161
    %v1167 = vpack.c.bf16 %v1166, %v1166
    %v1169 = vsel %vm222, %v1167, 0
    %1171 = vmatprep.subr.bf16.mxu0 0
    %1172 = vmatpush1.bf16.msra.mxu0 %v80
    %1173 = vmatprep.subr.bf16.mxu0 0
    %1174 = vmatpush1.bf16.msra.mxu0 %v81
    %1175 = vmatprep.subr.bf16.mxu0 0
    %1176 = vmatpush1.bf16.msra.mxu0 0
    %1177 = vmatprep.subr.bf16.mxu0 0
    %1178 = vmatpush1.bf16.msra.mxu0 0
    %1179 = vmatprep.subr.bf16.mxu0 0
    %1180 = vmatpush1.bf16.msra.mxu0 0
    %1181 = vmatprep.subr.bf16.mxu0 0
    %1182 = vmatpush1.bf16.msra.mxu0 0
    %1183 = vmatprep.subr.bf16.mxu0 0
    %1184 = vmatpush1.bf16.msra.mxu0 0
    %1185 = vmatprep.subr.bf16.mxu0 0
    %1186 = vmatpush1.bf16.msra.mxu0 0
    %1187 = vmatprep.subr.bf16.mxu0 0
    %1188 = vmatpush1.bf16.msra.mxu0 0
    %1189 = vmatprep.subr.bf16.mxu0 0
    %1190 = vmatpush1.bf16.msra.mxu0 0
    %1191 = vmatprep.subr.bf16.mxu0 0
    %1192 = vmatpush1.bf16.msra.mxu0 0
    %1193 = vmatprep.subr.bf16.mxu0 0
    %1194 = vmatpush1.bf16.msra.mxu0 0
    %1195 = vmatprep.subr.bf16.mxu0 0
    %1196 = vmatpush1.bf16.msra.mxu0 0
    %1197 = vmatprep.subr.bf16.mxu0 0
    %1198 = vmatpush1.bf16.msra.mxu0 0
    %1199 = vmatprep.subr.bf16.mxu0 0
    %1200 = vmatpush1.bf16.msra.mxu0 0
    %1201 = vmatprep.subr.bf16.mxu0 0
    %1202 = vmatpush1.bf16.msra.mxu0 0
    %1203 = vmatprep.mubr.bf16.mxu0 0
    %1204 = vmatmul.mubr.bf16.gmra.mrb[0].mxu0 %v1169
    %v1205 = vpop.f32.mrb[0].mxu0
    %v1206 = vadd.f32 %v161, %v1205
    %v1207 = vpop.f32.mrb[0].mxu0
    %v1208 = vpop.f32.mrb[0].mxu0
    %v1209 = vpop.f32.mrb[0].mxu0
    %1210 = vdwg.mxu0
    %v1211 = vtanh.pop %v1206
    %v1212 = vpack.c.bf16 %v1211, %v1211
    %v1214 = vsel %vm222, %v1212, 0
    %1216 = vmatprep.subr.bf16.mxu0 0
    %1217 = vmatpush1.bf16.msra.mxu0 %v90
    %1218 = vmatprep.subr.bf16.mxu0 0
    %1219 = vmatpush1.bf16.msra.mxu0 %v91
    %1220 = vmatprep.subr.bf16.mxu0 0
    %1221 = vmatpush1.bf16.msra.mxu0 0
    %1222 = vmatprep.subr.bf16.mxu0 0
    %1223 = vmatpush1.bf16.msra.mxu0 0
    %1224 = vmatprep.subr.bf16.mxu0 0
    %1225 = vmatpush1.bf16.msra.mxu0 0
    %1226 = vmatprep.subr.bf16.mxu0 0
    %1227 = vmatpush1.bf16.msra.mxu0 0
    %1228 = vmatprep.subr.bf16.mxu0 0
    %1229 = vmatpush1.bf16.msra.mxu0 0
    %1230 = vmatprep.subr.bf16.mxu0 0
    %1231 = vmatpush1.bf16.msra.mxu0 0
    %1232 = vmatprep.subr.bf16.mxu0 0
    %1233 = vmatpush1.bf16.msra.mxu0 0
    %1234 = vmatprep.subr.bf16.mxu0 0
    %1235 = vmatpush1.bf16.msra.mxu0 0
    %1236 = vmatprep.subr.bf16.mxu0 0
    %1237 = vmatpush1.bf16.msra.mxu0 0
    %1238 = vmatprep.subr.bf16.mxu0 0
    %1239 = vmatpush1.bf16.msra.mxu0 0
    %1240 = vmatprep.subr.bf16.mxu0 0
    %1241 = vmatpush1.bf16.msra.mxu0 0
    %1242 = vmatprep.subr.bf16.mxu0 0
    %1243 = vmatpush1.bf16.msra.mxu0 0
    %1244 = vmatprep.subr.bf16.mxu0 0
    %1245 = vmatpush1.bf16.msra.mxu0 0
    %1246 = vmatprep.subr.bf16.mxu0 0
    %1247 = vmatpush1.bf16.msra.mxu0 0
    %1248 = vmatprep.mubr.bf16.mxu0 0
    %1249 = vmatmul.mubr.bf16.gmra.mrb[0].mxu0 %v1214
    %v1250 = vpop.f32.mrb[0].mxu0
    %v1251 = vadd.f32 %v169, %v1250
    %v1252 = vpop.f32.mrb[0].mxu0
    %v1253 = vpop.f32.mrb[0].mxu0
    %v1254 = vpop.f32.mrb[0].mxu0
    %1255 = vdwg.mxu0
    %v1256 = vadd.f32 %v1251, %v1076
    %v1257 = vpack.c.bf16 %v1256, %v1256
    %v1259 = vsel %vm172, %v1257, 0
    %1261 = vmatprep.subr.bf16.mxu0 0
    %1262 = vmatpush1.bf16.msra.mxu0 %v178
    %1263 = vmatprep.subr.bf16.mxu0 0
    %1264 = vmatpush1.bf16.msra.mxu0 0
    %1265 = vmatprep.subr.bf16.mxu0 0
    %1266 = vmatpush1.bf16.msra.mxu0 0
    %1267 = vmatprep.subr.bf16.mxu0 0
    %1268 = vmatpush1.bf16.msra.mxu0 0
    %1269 = vmatprep.subr.bf16.mxu0 0
    %1270 = vmatpush1.bf16.msra.mxu0 0
    %1271 = vmatprep.subr.bf16.mxu0 0
    %1272 = vmatpush1.bf16.msra.mxu0 0
    %1273 = vmatprep.subr.bf16.mxu0 0
    %1274 = vmatpush1.bf16.msra.mxu0 0
    %1275 = vmatprep.subr.bf16.mxu0 0
    %1276 = vmatpush1.bf16.msra.mxu0 0
    %1277 = vmatprep.subr.bf16.mxu0 0
    %1278 = vmatpush1.bf16.msra.mxu0 0
    %1279 = vmatprep.subr.bf16.mxu0 0
    %1280 = vmatpush1.bf16.msra.mxu0 0
    %1281 = vmatprep.subr.bf16.mxu0 0
    %1282 = vmatpush1.bf16.msra.mxu0 0
    %1283 = vmatprep.subr.bf16.mxu0 0
    %1284 = vmatpush1.bf16.msra.mxu0 0
    %1285 = vmatprep.subr.bf16.mxu0 0
    %1286 = vmatpush1.bf16.msra.mxu0 0
    %1287 = vmatprep.subr.bf16.mxu0 0
    %1288 = vmatpush1.bf16.msra.mxu0 0
    %1289 = vmatprep.subr.bf16.mxu0 0
    %1290 = vmatpush1.bf16.msra.mxu0 0
    %1291 = vmatprep.subr.bf16.mxu0 0
    %1292 = vmatpush1.bf16.msra.mxu0 0
    %1293 = vmatprep.mubr.bf16.mxu0 0
    %1294 = vmatmul.mubr.bf16.gmra.mrb[0].mxu0 %v1259
    %v1295 = vpop.f32.mrb[0].mxu0
    %v1296 = vadd.f32 %v144, %v1295
    %v1297 = vpop.f32.mrb[0].mxu0
    %v1298 = vpop.f32.mrb[0].mxu0
    %v1299 = vpop.f32.mrb[0].mxu0
    %1300 = vdwg.mxu0
    %v1301 = vtanh.pop %v1296
    %v1302 = vpack.c.bf16 %v1301, %v1301
    %v1304 = vsel %vm222, %v1302, 0
    %1306 = vmatprep.subr.bf16.mxu0 0
    %1307 = vmatpush1.bf16.msra.mxu0 %v74
    %1308 = vmatprep.subr.bf16.mxu0 0
    %1309 = vmatpush1.bf16.msra.mxu0 %v75
    %1310 = vmatprep.subr.bf16.mxu0 0
    %1311 = vmatpush1.bf16.msra.mxu0 0
    %1312 = vmatprep.subr.bf16.mxu0 0
    %1313 = vmatpush1.bf16.msra.mxu0 0
    %1314 = vmatprep.subr.bf16.mxu0 0
    %1315 = vmatpush1.bf16.msra.mxu0 0
    %1316 = vmatprep.subr.bf16.mxu0 0
    %1317 = vmatpush1.bf16.msra.mxu0 0
    %1318 = vmatprep.subr.bf16.mxu0 0
    %1319 = vmatpush1.bf16.msra.mxu0 0
    %1320 = vmatprep.subr.bf16.mxu0 0
    %1321 = vmatpush1.bf16.msra.mxu0 0
    %1322 = vmatprep.subr.bf16.mxu0 0
    %1323 = vmatpush1.bf16.msra.mxu0 0
    %1324 = vmatprep.subr.bf16.mxu0 0
    %1325 = vmatpush1.bf16.msra.mxu0 0
    %1326 = vmatprep.subr.bf16.mxu0 0
    %1327 = vmatpush1.bf16.msra.mxu0 0
    %1328 = vmatprep.subr.bf16.mxu0 0
    %1329 = vmatpush1.bf16.msra.mxu0 0
    %1330 = vmatprep.subr.bf16.mxu0 0
    %1331 = vmatpush1.bf16.msra.mxu0 0
    %1332 = vmatprep.subr.bf16.mxu0 0
    %1333 = vmatpush1.bf16.msra.mxu0 0
    %1334 = vmatprep.subr.bf16.mxu0 0
    %1335 = vmatpush1.bf16.msra.mxu0 0
    %1336 = vmatprep.subr.bf16.mxu0 0
    %1337 = vmatpush1.bf16.msra.mxu0 0
    %1338 = vmatprep.mubr.bf16.mxu0 0
    %1339 = vmatmul.mubr.bf16.gmra.mrb[0].mxu0 %v1304
    %v1340 = vpop.f32.mrb[0].mxu0
    %v1341 = vadd.f32 %v154, %v1340
    %v1342 = vpop.f32.mrb[0].mxu0
    %v1343 = vpop.f32.mrb[0].mxu0
    %v1344 = vpop.f32.mrb[0].mxu0
    %1345 = vdwg.mxu0
    %v1346 = vtanh.pop %v1341
    %v1347 = vpack.c.bf16 %v1346, %v1346
    %v1349 = vsel %vm222, %v1347, 0
    %1351 = vmatprep.subr.bf16.mxu0 0
    %1352 = vmatpush1.bf16.msra.mxu0 %v80
    %1353 = vmatprep.subr.bf16.mxu0 0
    %1354 = vmatpush1.bf16.msra.mxu0 %v81
    %1355 = vmatprep.subr.bf16.mxu0 0
    %1356 = vmatpush1.bf16.msra.mxu0 0
    %1357 = vmatprep.subr.bf16.mxu0 0
    %1358 = vmatpush1.bf16.msra.mxu0 0
    %1359 = vmatprep.subr.bf16.mxu0 0
    %1360 = vmatpush1.bf16.msra.mxu0 0
    %1361 = vmatprep.subr.bf16.mxu0 0
    %1362 = vmatpush1.bf16.msra.mxu0 0
    %1363 = vmatprep.subr.bf16.mxu0 0
    %1364 = vmatpush1.bf16.msra.mxu0 0
    %1365 = vmatprep.subr.bf16.mxu0 0
    %1366 = vmatpush1.bf16.msra.mxu0 0
    %1367 = vmatprep.subr.bf16.mxu0 0
    %1368 = vmatpush1.bf16.msra.mxu0 0
    %1369 = vmatprep.subr.bf16.mxu0 0
    %1370 = vmatpush1.bf16.msra.mxu0 0
    %1371 = vmatprep.subr.bf16.mxu0 0
    %1372 = vmatpush1.bf16.msra.mxu0 0
    %1373 = vmatprep.subr.bf16.mxu0 0
    %1374 = vmatpush1.bf16.msra.mxu0 0
    %1375 = vmatprep.subr.bf16.mxu0 0
    %1376 = vmatpush1.bf16.msra.mxu0 0
    %1377 = vmatprep.subr.bf16.mxu0 0
    %1378 = vmatpush1.bf16.msra.mxu0 0
    %1379 = vmatprep.subr.bf16.mxu0 0
    %1380 = vmatpush1.bf16.msra.mxu0 0
    %1381 = vmatprep.subr.bf16.mxu0 0
    %1382 = vmatpush1.bf16.msra.mxu0 0
    %1383 = vmatprep.mubr.bf16.mxu0 0
    %1384 = vmatmul.mubr.bf16.gmra.mrb[0].mxu0 %v1349
    %v1385 = vpop.f32.mrb[0].mxu0
    %v1386 = vadd.f32 %v161, %v1385
    %v1387 = vpop.f32.mrb[0].mxu0
    %v1388 = vpop.f32.mrb[0].mxu0
    %v1389 = vpop.f32.mrb[0].mxu0
    %1390 = vdwg.mxu0
    %v1391 = vtanh.pop %v1386
    %v1392 = vpack.c.bf16 %v1391, %v1391
    %v1394 = vsel %vm222, %v1392, 0
    %1396 = vmatprep.subr.bf16.mxu0 0
    %1397 = vmatpush1.bf16.msra.mxu0 %v90
    %1398 = vmatprep.subr.bf16.mxu0 0
    %1399 = vmatpush1.bf16.msra.mxu0 %v91
    %1400 = vmatprep.subr.bf16.mxu0 0
    %1401 = vmatpush1.bf16.msra.mxu0 0
    %1402 = vmatprep.subr.bf16.mxu0 0
    %1403 = vmatpush1.bf16.msra.mxu0 0
    %1404 = vmatprep.subr.bf16.mxu0 0
    %1405 = vmatpush1.bf16.msra.mxu0 0
    %1406 = vmatprep.subr.bf16.mxu0 0
    %1407 = vmatpush1.bf16.msra.mxu0 0
    %1408 = vmatprep.subr.bf16.mxu0 0
    %1409 = vmatpush1.bf16.msra.mxu0 0
    %1410 = vmatprep.subr.bf16.mxu0 0
    %1411 = vmatpush1.bf16.msra.mxu0 0
    %1412 = vmatprep.subr.bf16.mxu0 0
    %1413 = vmatpush1.bf16.msra.mxu0 0
    %1414 = vmatprep.subr.bf16.mxu0 0
    %1415 = vmatpush1.bf16.msra.mxu0 0
    %1416 = vmatprep.subr.bf16.mxu0 0
    %1417 = vmatpush1.bf16.msra.mxu0 0
    %1418 = vmatprep.subr.bf16.mxu0 0
    %1419 = vmatpush1.bf16.msra.mxu0 0
    %1420 = vmatprep.subr.bf16.mxu0 0
    %1421 = vmatpush1.bf16.msra.mxu0 0
    %1422 = vmatprep.subr.bf16.mxu0 0
    %1423 = vmatpush1.bf16.msra.mxu0 0
    %1424 = vmatprep.subr.bf16.mxu0 0
    %1425 = vmatpush1.bf16.msra.mxu0 0
    %1426 = vmatprep.subr.bf16.mxu0 0
    %1427 = vmatpush1.bf16.msra.mxu0 0
    %1428 = vmatprep.mubr.bf16.mxu0 0
    %1429 = vmatmul.mubr.bf16.gmra.mrb[0].mxu0 %v1394
    %v1430 = vpop.f32.mrb[0].mxu0
    %v1431 = vadd.f32 %v169, %v1430
    %v1432 = vpop.f32.mrb[0].mxu0
    %v1433 = vpop.f32.mrb[0].mxu0
    %v1434 = vpop.f32.mrb[0].mxu0
    %1435 = vdwg.mxu0
    %v1436 = vadd.f32 %v1431, %v1256
    %v1437 = vpack.c.bf16 %v1436, %v1436
    %v1439 = vsel %vm172, %v1437, 0
    %1441 = vmatprep.subr.bf16.mxu0 0
    %1442 = vmatpush1.bf16.msra.mxu0 %v178
    %1443 = vmatprep.subr.bf16.mxu0 0
    %1444 = vmatpush1.bf16.msra.mxu0 0
    %1445 = vmatprep.subr.bf16.mxu0 0
    %1446 = vmatpush1.bf16.msra.mxu0 0
    %1447 = vmatprep.subr.bf16.mxu0 0
    %1448 = vmatpush1.bf16.msra.mxu0 0
    %1449 = vmatprep.subr.bf16.mxu0 0
    %1450 = vmatpush1.bf16.msra.mxu0 0
    %1451 = vmatprep.subr.bf16.mxu0 0
    %1452 = vmatpush1.bf16.msra.mxu0 0
    %1453 = vmatprep.subr.bf16.mxu0 0
    %1454 = vmatpush1.bf16.msra.mxu0 0
    %1455 = vmatprep.subr.bf16.mxu0 0
    %1456 = vmatpush1.bf16.msra.mxu0 0
    %1457 = vmatprep.subr.bf16.mxu0 0
    %1458 = vmatpush1.bf16.msra.mxu0 0
    %1459 = vmatprep.subr.bf16.mxu0 0
    %1460 = vmatpush1.bf16.msra.mxu0 0
    %1461 = vmatprep.subr.bf16.mxu0 0
    %1462 = vmatpush1.bf16.msra.mxu0 0
    %1463 = vmatprep.subr.bf16.mxu0 0
    %1464 = vmatpush1.bf16.msra.mxu0 0
    %1465 = vmatprep.subr.bf16.mxu0 0
    %1466 = vmatpush1.bf16.msra.mxu0 0
    %1467 = vmatprep.subr.bf16.mxu0 0
    %1468 = vmatpush1.bf16.msra.mxu0 0
    %1469 = vmatprep.subr.bf16.mxu0 0
    %1470 = vmatpush1.bf16.msra.mxu0 0
    %1471 = vmatprep.subr.bf16.mxu0 0
    %1472 = vmatpush1.bf16.msra.mxu0 0
    %1473 = vmatprep.mubr.bf16.mxu0 0
    %1474 = vmatmul.mubr.bf16.gmra.mrb[0].mxu0 %v1439
    %v1475 = vpop.f32.mrb[0].mxu0
    %v1476 = vadd.f32 %v144, %v1475
    %v1477 = vpop.f32.mrb[0].mxu0
    %v1478 = vpop.f32.mrb[0].mxu0
    %v1479 = vpop.f32.mrb[0].mxu0
    %1480 = vdwg.mxu0
    %v1481 = vtanh.pop %v1476
    %v1482 = vpack.c.bf16 %v1481, %v1481
    %v1484 = vsel %vm222, %v1482, 0
    %1486 = vmatprep.subr.bf16.mxu0 0
    %1487 = vmatpush1.bf16.msra.mxu0 %v74
    %1488 = vmatprep.subr.bf16.mxu0 0
    %1489 = vmatpush1.bf16.msra.mxu0 %v75
    %1490 = vmatprep.subr.bf16.mxu0 0
    %1491 = vmatpush1.bf16.msra.mxu0 0
    %1492 = vmatprep.subr.bf16.mxu0 0
    %1493 = vmatpush1.bf16.msra.mxu0 0
    %1494 = vmatprep.subr.bf16.mxu0 0
    %1495 = vmatpush1.bf16.msra.mxu0 0
    %1496 = vmatprep.subr.bf16.mxu0 0
    %1497 = vmatpush1.bf16.msra.mxu0 0
    %1498 = vmatprep.subr.bf16.mxu0 0
    %1499 = vmatpush1.bf16.msra.mxu0 0
    %1500 = vmatprep.subr.bf16.mxu0 0
    %1501 = vmatpush1.bf16.msra.mxu0 0
    %1502 = vmatprep.subr.bf16.mxu0 0
    %1503 = vmatpush1.bf16.msra.mxu0 0
    %1504 = vmatprep.subr.bf16.mxu0 0
    %1505 = vmatpush1.bf16.msra.mxu0 0
    %1506 = vmatprep.subr.bf16.mxu0 0
    %1507 = vmatpush1.bf16.msra.mxu0 0
    %1508 = vmatprep.subr.bf16.mxu0 0
    %1509 = vmatpush1.bf16.msra.mxu0 0
    %1510 = vmatprep.subr.bf16.mxu0 0
    %1511 = vmatpush1.bf16.msra.mxu0 0
    %1512 = vmatprep.subr.bf16.mxu0 0
    %1513 = vmatpush1.bf16.msra.mxu0 0
    %1514 = vmatprep.subr.bf16.mxu0 0
    %1515 = vmatpush1.bf16.msra.mxu0 0
    %1516 = vmatprep.subr.bf16.mxu0 0
    %1517 = vmatpush1.bf16.msra.mxu0 0
    %1518 = vmatprep.mubr.bf16.mxu0 0
    %1519 = vmatmul.mubr.bf16.gmra.mrb[0].mxu0 %v1484
    %v1520 = vpop.f32.mrb[0].mxu0
    %v1521 = vadd.f32 %v154, %v1520
    %v1522 = vpop.f32.mrb[0].mxu0
    %v1523 = vpop.f32.mrb[0].mxu0
    %v1524 = vpop.f32.mrb[0].mxu0
    %1525 = vdwg.mxu0
    %v1526 = vtanh.pop %v1521
    %v1527 = vpack.c.bf16 %v1526, %v1526
    %v1529 = vsel %vm222, %v1527, 0
    %1531 = vmatprep.subr.bf16.mxu0 0
    %1532 = vmatpush1.bf16.msra.mxu0 %v80
    %1533 = vmatprep.subr.bf16.mxu0 0
    %1534 = vmatpush1.bf16.msra.mxu0 %v81
    %1535 = vmatprep.subr.bf16.mxu0 0
    %1536 = vmatpush1.bf16.msra.mxu0 0
    %1537 = vmatprep.subr.bf16.mxu0 0
    %1538 = vmatpush1.bf16.msra.mxu0 0
    %1539 = vmatprep.subr.bf16.mxu0 0
    %1540 = vmatpush1.bf16.msra.mxu0 0
    %1541 = vmatprep.subr.bf16.mxu0 0
    %1542 = vmatpush1.bf16.msra.mxu0 0
    %1543 = vmatprep.subr.bf16.mxu0 0
    %1544 = vmatpush1.bf16.msra.mxu0 0
    %1545 = vmatprep.subr.bf16.mxu0 0
    %1546 = vmatpush1.bf16.msra.mxu0 0
    %1547 = vmatprep.subr.bf16.mxu0 0
    %1548 = vmatpush1.bf16.msra.mxu0 0
    %1549 = vmatprep.subr.bf16.mxu0 0
    %1550 = vmatpush1.bf16.msra.mxu0 0
    %1551 = vmatprep.subr.bf16.mxu0 0
    %1552 = vmatpush1.bf16.msra.mxu0 0
    %1553 = vmatprep.subr.bf16.mxu0 0
    %1554 = vmatpush1.bf16.msra.mxu0 0
    %1555 = vmatprep.subr.bf16.mxu0 0
    %1556 = vmatpush1.bf16.msra.mxu0 0
    %1557 = vmatprep.subr.bf16.mxu0 0
    %1558 = vmatpush1.bf16.msra.mxu0 0
    %1559 = vmatprep.subr.bf16.mxu0 0
    %1560 = vmatpush1.bf16.msra.mxu0 0
    %1561 = vmatprep.subr.bf16.mxu0 0
    %1562 = vmatpush1.bf16.msra.mxu0 0
    %1563 = vmatprep.mubr.bf16.mxu0 0
    %1564 = vmatmul.mubr.bf16.gmra.mrb[0].mxu0 %v1529
    %v1565 = vpop.f32.mrb[0].mxu0
    %v1566 = vadd.f32 %v161, %v1565
    %v1567 = vpop.f32.mrb[0].mxu0
    %v1568 = vpop.f32.mrb[0].mxu0
    %v1569 = vpop.f32.mrb[0].mxu0
    %1570 = vdwg.mxu0
    %v1571 = vtanh.pop %v1566
    %v1572 = vpack.c.bf16 %v1571, %v1571
    %v1574 = vsel %vm222, %v1572, 0
    %1576 = vmatprep.subr.bf16.mxu0 0
    %1577 = vmatpush1.bf16.msra.mxu0 %v90
    %1578 = vmatprep.subr.bf16.mxu0 0
    %1579 = vmatpush1.bf16.msra.mxu0 %v91
    %1580 = vmatprep.subr.bf16.mxu0 0
    %1581 = vmatpush1.bf16.msra.mxu0 0
    %1582 = vmatprep.subr.bf16.mxu0 0
    %1583 = vmatpush1.bf16.msra.mxu0 0
    %1584 = vmatprep.subr.bf16.mxu0 0
    %1585 = vmatpush1.bf16.msra.mxu0 0
    %1586 = vmatprep.subr.bf16.mxu0 0
    %1587 = vmatpush1.bf16.msra.mxu0 0
    %1588 = vmatprep.subr.bf16.mxu0 0
    %1589 = vmatpush1.bf16.msra.mxu0 0
    %1590 = vmatprep.subr.bf16.mxu0 0
    %1591 = vmatpush1.bf16.msra.mxu0 0
    %1592 = vmatprep.subr.bf16.mxu0 0
    %1593 = vmatpush1.bf16.msra.mxu0 0
    %1594 = vmatprep.subr.bf16.mxu0 0
    %1595 = vmatpush1.bf16.msra.mxu0 0
    %1596 = vmatprep.subr.bf16.mxu0 0
    %1597 = vmatpush1.bf16.msra.mxu0 0
    %1598 = vmatprep.subr.bf16.mxu0 0
    %1599 = vmatpush1.bf16.msra.mxu0 0
    %1600 = vmatprep.subr.bf16.mxu0 0
    %1601 = vmatpush1.bf16.msra.mxu0 0
    %1602 = vmatprep.subr.bf16.mxu0 0
    %1603 = vmatpush1.bf16.msra.mxu0 0
    %1604 = vmatprep.subr.bf16.mxu0 0
    %1605 = vmatpush1.bf16.msra.mxu0 0
    %1606 = vmatprep.subr.bf16.mxu0 0
    %1607 = vmatpush1.bf16.msra.mxu0 0
    %1608 = vmatprep.mubr.bf16.mxu0 0
    %1609 = vmatmul.mubr.bf16.gmra.mrb[0].mxu0 %v1574
    %v1610 = vpop.f32.mrb[0].mxu0
    %v1611 = vadd.f32 %v169, %v1610
    %v1612 = vpop.f32.mrb[0].mxu0
    %v1613 = vpop.f32.mrb[0].mxu0
    %v1614 = vpop.f32.mrb[0].mxu0
    %1615 = vdwg.mxu0
    %v1616 = vadd.f32 %v1611, %v1436
    %v1617 = vpack.c.bf16 %v1616, %v1616
    %v1619 = vsel %vm172, %v1617, 0
    %1621 = vmatprep.subr.bf16.mxu0 0
    %1622 = vmatpush1.bf16.msra.mxu0 %v178
    %1623 = vmatprep.subr.bf16.mxu0 0
    %1624 = vmatpush1.bf16.msra.mxu0 0
    %1625 = vmatprep.subr.bf16.mxu0 0
    %1626 = vmatpush1.bf16.msra.mxu0 0
    %1627 = vmatprep.subr.bf16.mxu0 0
    %1628 = vmatpush1.bf16.msra.mxu0 0
    %1629 = vmatprep.subr.bf16.mxu0 0
    %1630 = vmatpush1.bf16.msra.mxu0 0
    %1631 = vmatprep.subr.bf16.mxu0 0
    %1632 = vmatpush1.bf16.msra.mxu0 0
    %1633 = vmatprep.subr.bf16.mxu0 0
    %1634 = vmatpush1.bf16.msra.mxu0 0
    %1635 = vmatprep.subr.bf16.mxu0 0
    %1636 = vmatpush1.bf16.msra.mxu0 0
    %1637 = vmatprep.subr.bf16.mxu0 0
    %1638 = vmatpush1.bf16.msra.mxu0 0
    %1639 = vmatprep.subr.bf16.mxu0 0
    %1640 = vmatpush1.bf16.msra.mxu0 0
    %1641 = vmatprep.subr.bf16.mxu0 0
    %1642 = vmatpush1.bf16.msra.mxu0 0
    %1643 = vmatprep.subr.bf16.mxu0 0
    %1644 = vmatpush1.bf16.msra.mxu0 0
    %1645 = vmatprep.subr.bf16.mxu0 0
    %1646 = vmatpush1.bf16.msra.mxu0 0
    %1647 = vmatprep.subr.bf16.mxu0 0
    %1648 = vmatpush1.bf16.msra.mxu0 0
    %1649 = vmatprep.subr.bf16.mxu0 0
    %1650 = vmatpush1.bf16.msra.mxu0 0
    %1651 = vmatprep.subr.bf16.mxu0 0
    %1652 = vmatpush1.bf16.msra.mxu0 0
    %1653 = vmatprep.mubr.bf16.mxu0 0
    %1654 = vmatmul.mubr.bf16.gmra.mrb[0].mxu0 %v1619
    %v1655 = vpop.f32.mrb[0].mxu0
    %v1656 = vadd.f32 %v144, %v1655
    %v1657 = vpop.f32.mrb[0].mxu0
    %v1658 = vpop.f32.mrb[0].mxu0
    %v1659 = vpop.f32.mrb[0].mxu0
    %1660 = vdwg.mxu0
    %v1661 = vtanh.pop %v1656
    %v1662 = vpack.c.bf16 %v1661, %v1661
    %v1664 = vsel %vm222, %v1662, 0
    %1666 = vmatprep.subr.bf16.mxu0 0
    %1667 = vmatpush1.bf16.msra.mxu0 %v74
    %1668 = vmatprep.subr.bf16.mxu0 0
    %1669 = vmatpush1.bf16.msra.mxu0 %v75
    %1670 = vmatprep.subr.bf16.mxu0 0
    %1671 = vmatpush1.bf16.msra.mxu0 0
    %1672 = vmatprep.subr.bf16.mxu0 0
    %1673 = vmatpush1.bf16.msra.mxu0 0
    %1674 = vmatprep.subr.bf16.mxu0 0
    %1675 = vmatpush1.bf16.msra.mxu0 0
    %1676 = vmatprep.subr.bf16.mxu0 0
    %1677 = vmatpush1.bf16.msra.mxu0 0
    %1678 = vmatprep.subr.bf16.mxu0 0
    %1679 = vmatpush1.bf16.msra.mxu0 0
    %1680 = vmatprep.subr.bf16.mxu0 0
    %1681 = vmatpush1.bf16.msra.mxu0 0
    %1682 = vmatprep.subr.bf16.mxu0 0
    %1683 = vmatpush1.bf16.msra.mxu0 0
    %1684 = vmatprep.subr.bf16.mxu0 0
    %1685 = vmatpush1.bf16.msra.mxu0 0
    %1686 = vmatprep.subr.bf16.mxu0 0
    %1687 = vmatpush1.bf16.msra.mxu0 0
    %1688 = vmatprep.subr.bf16.mxu0 0
    %1689 = vmatpush1.bf16.msra.mxu0 0
    %1690 = vmatprep.subr.bf16.mxu0 0
    %1691 = vmatpush1.bf16.msra.mxu0 0
    %1692 = vmatprep.subr.bf16.mxu0 0
    %1693 = vmatpush1.bf16.msra.mxu0 0
    %1694 = vmatprep.subr.bf16.mxu0 0
    %1695 = vmatpush1.bf16.msra.mxu0 0
    %1696 = vmatprep.subr.bf16.mxu0 0
    %1697 = vmatpush1.bf16.msra.mxu0 0
    %1698 = vmatprep.mubr.bf16.mxu0 0
    %1699 = vmatmul.mubr.bf16.gmra.mrb[0].mxu0 %v1664
    %v1700 = vpop.f32.mrb[0].mxu0
    %v1701 = vadd.f32 %v154, %v1700
    %v1702 = vpop.f32.mrb[0].mxu0
    %v1703 = vpop.f32.mrb[0].mxu0
    %v1704 = vpop.f32.mrb[0].mxu0
    %1705 = vdwg.mxu0
    %v1706 = vtanh.pop %v1701
    %v1707 = vpack.c.bf16 %v1706, %v1706
    %v1709 = vsel %vm222, %v1707, 0
    %1711 = vmatprep.subr.bf16.mxu0 0
    %1712 = vmatpush1.bf16.msra.mxu0 %v80
    %1713 = vmatprep.subr.bf16.mxu0 0
    %1714 = vmatpush1.bf16.msra.mxu0 %v81
    %1715 = vmatprep.subr.bf16.mxu0 0
    %1716 = vmatpush1.bf16.msra.mxu0 0
    %1717 = vmatprep.subr.bf16.mxu0 0
    %1718 = vmatpush1.bf16.msra.mxu0 0
    %1719 = vmatprep.subr.bf16.mxu0 0
    %1720 = vmatpush1.bf16.msra.mxu0 0
    %1721 = vmatprep.subr.bf16.mxu0 0
    %1722 = vmatpush1.bf16.msra.mxu0 0
    %1723 = vmatprep.subr.bf16.mxu0 0
    %1724 = vmatpush1.bf16.msra.mxu0 0
    %1725 = vmatprep.subr.bf16.mxu0 0
    %1726 = vmatpush1.bf16.msra.mxu0 0
    %1727 = vmatprep.subr.bf16.mxu0 0
    %1728 = vmatpush1.bf16.msra.mxu0 0
    %1729 = vmatprep.subr.bf16.mxu0 0
    %1730 = vmatpush1.bf16.msra.mxu0 0
    %1731 = vmatprep.subr.bf16.mxu0 0
    %1732 = vmatpush1.bf16.msra.mxu0 0
    %1733 = vmatprep.subr.bf16.mxu0 0
    %1734 = vmatpush1.bf16.msra.mxu0 0
    %1735 = vmatprep.subr.bf16.mxu0 0
    %1736 = vmatpush1.bf16.msra.mxu0 0
    %1737 = vmatprep.subr.bf16.mxu0 0
    %1738 = vmatpush1.bf16.msra.mxu0 0
    %1739 = vmatprep.subr.bf16.mxu0 0
    %1740 = vmatpush1.bf16.msra.mxu0 0
    %1741 = vmatprep.subr.bf16.mxu0 0
    %1742 = vmatpush1.bf16.msra.mxu0 0
    %1743 = vmatprep.mubr.bf16.mxu0 0
    %1744 = vmatmul.mubr.bf16.gmra.mrb[0].mxu0 %v1709
    %v1745 = vpop.f32.mrb[0].mxu0
    %v1746 = vadd.f32 %v161, %v1745
    %v1747 = vpop.f32.mrb[0].mxu0
    %v1748 = vpop.f32.mrb[0].mxu0
    %v1749 = vpop.f32.mrb[0].mxu0
    %1750 = vdwg.mxu0
    %v1751 = vtanh.pop %v1746
    %v1752 = vpack.c.bf16 %v1751, %v1751
    %v1754 = vsel %vm222, %v1752, 0
    %1756 = vmatprep.subr.bf16.mxu0 0
    %1757 = vmatpush1.bf16.msra.mxu0 %v90
    %1758 = vmatprep.subr.bf16.mxu0 0
    %1759 = vmatpush1.bf16.msra.mxu0 %v91
    %1760 = vmatprep.subr.bf16.mxu0 0
    %1761 = vmatpush1.bf16.msra.mxu0 0
    %1762 = vmatprep.subr.bf16.mxu0 0
    %1763 = vmatpush1.bf16.msra.mxu0 0
    %1764 = vmatprep.subr.bf16.mxu0 0
    %1765 = vmatpush1.bf16.msra.mxu0 0
    %1766 = vmatprep.subr.bf16.mxu0 0
    %1767 = vmatpush1.bf16.msra.mxu0 0
    %1768 = vmatprep.subr.bf16.mxu0 0
    %1769 = vmatpush1.bf16.msra.mxu0 0
    %1770 = vmatprep.subr.bf16.mxu0 0
    %1771 = vmatpush1.bf16.msra.mxu0 0
    %1772 = vmatprep.subr.bf16.mxu0 0
    %1773 = vmatpush1.bf16.msra.mxu0 0
    %1774 = vmatprep.subr.bf16.mxu0 0
    %1775 = vmatpush1.bf16.msra.mxu0 0
    %1776 = vmatprep.subr.bf16.mxu0 0
    %1777 = vmatpush1.bf16.msra.mxu0 0
    %1778 = vmatprep.subr.bf16.mxu0 0
    %1779 = vmatpush1.bf16.msra.mxu0 0
    %1780 = vmatprep.subr.bf16.mxu0 0
    %1781 = vmatpush1.bf16.msra.mxu0 0
    %1782 = vmatprep.subr.bf16.mxu0 0
    %1783 = vmatpush1.bf16.msra.mxu0 0
    %1784 = vmatprep.subr.bf16.mxu0 0
    %1785 = vmatpush1.bf16.msra.mxu0 0
    %1786 = vmatprep.subr.bf16.mxu0 0
    %1787 = vmatpush1.bf16.msra.mxu0 0
    %1788 = vmatprep.mubr.bf16.mxu0 0
    %1789 = vmatmul.mubr.bf16.gmra.mrb[0].mxu0 %v1754
    %v1790 = vpop.f32.mrb[0].mxu0
    %v1791 = vadd.f32 %v169, %v1790
    %v1792 = vpop.f32.mrb[0].mxu0
    %v1793 = vpop.f32.mrb[0].mxu0
    %v1794 = vpop.f32.mrb[0].mxu0
    %1795 = vdwg.mxu0
    %v1796 = vadd.f32 %v1791, %v1616
    %v1797 = vpack.c.bf16 %v1796, %v1796
    %v1799 = vsel %vm172, %v1797, 0
    %1801 = vmatprep.subr.bf16.mxu0 0
    %1802 = vmatpush1.bf16.msra.mxu0 %v178
    %1803 = vmatprep.subr.bf16.mxu0 0
    %1804 = vmatpush1.bf16.msra.mxu0 0
    %1805 = vmatprep.subr.bf16.mxu0 0
    %1806 = vmatpush1.bf16.msra.mxu0 0
    %1807 = vmatprep.subr.bf16.mxu0 0
    %1808 = vmatpush1.bf16.msra.mxu0 0
    %1809 = vmatprep.subr.bf16.mxu0 0
    %1810 = vmatpush1.bf16.msra.mxu0 0
    %1811 = vmatprep.subr.bf16.mxu0 0
    %1812 = vmatpush1.bf16.msra.mxu0 0
    %1813 = vmatprep.subr.bf16.mxu0 0
    %1814 = vmatpush1.bf16.msra.mxu0 0
    %1815 = vmatprep.subr.bf16.mxu0 0
    %1816 = vmatpush1.bf16.msra.mxu0 0
    %1817 = vmatprep.subr.bf16.mxu0 0
    %1818 = vmatpush1.bf16.msra.mxu0 0
    %1819 = vmatprep.subr.bf16.mxu0 0
    %1820 = vmatpush1.bf16.msra.mxu0 0
    %1821 = vmatprep.subr.bf16.mxu0 0
    %1822 = vmatpush1.bf16.msra.mxu0 0
    %1823 = vmatprep.subr.bf16.mxu0 0
    %1824 = vmatpush1.bf16.msra.mxu0 0
    %1825 = vmatprep.subr.bf16.mxu0 0
    %1826 = vmatpush1.bf16.msra.mxu0 0
    %1827 = vmatprep.subr.bf16.mxu0 0
    %1828 = vmatpush1.bf16.msra.mxu0 0
    %1829 = vmatprep.subr.bf16.mxu0 0
    %1830 = vmatpush1.bf16.msra.mxu0 0
    %1831 = vmatprep.subr.bf16.mxu0 0
    %1832 = vmatpush1.bf16.msra.mxu0 0
    %1833 = vmatprep.mubr.bf16.mxu0 0
    %1834 = vmatmul.mubr.bf16.gmra.mrb[0].mxu0 %v1799
    %v1835 = vpop.f32.mrb[0].mxu0
    %v1836 = vadd.f32 %v144, %v1835
    %v1837 = vpop.f32.mrb[0].mxu0
    %v1838 = vpop.f32.mrb[0].mxu0
    %v1839 = vpop.f32.mrb[0].mxu0
    %1840 = vdwg.mxu0
    %v1841 = vtanh.pop %v1836
    %v1842 = vpack.c.bf16 %v1841, %v1841
    %v1844 = vsel %vm222, %v1842, 0
    %1846 = vmatprep.subr.bf16.mxu0 0
    %1847 = vmatpush1.bf16.msra.mxu0 %v74
    %1848 = vmatprep.subr.bf16.mxu0 0
    %1849 = vmatpush1.bf16.msra.mxu0 %v75
    %1850 = vmatprep.subr.bf16.mxu0 0
    %1851 = vmatpush1.bf16.msra.mxu0 0
    %1852 = vmatprep.subr.bf16.mxu0 0
    %1853 = vmatpush1.bf16.msra.mxu0 0
    %1854 = vmatprep.subr.bf16.mxu0 0
    %1855 = vmatpush1.bf16.msra.mxu0 0
    %1856 = vmatprep.subr.bf16.mxu0 0
    %1857 = vmatpush1.bf16.msra.mxu0 0
    %1858 = vmatprep.subr.bf16.mxu0 0
    %1859 = vmatpush1.bf16.msra.mxu0 0
    %1860 = vmatprep.subr.bf16.mxu0 0
    %1861 = vmatpush1.bf16.msra.mxu0 0
    %1862 = vmatprep.subr.bf16.mxu0 0
    %1863 = vmatpush1.bf16.msra.mxu0 0
    %1864 = vmatprep.subr.bf16.mxu0 0
    %1865 = vmatpush1.bf16.msra.mxu0 0
    %1866 = vmatprep.subr.bf16.mxu0 0
    %1867 = vmatpush1.bf16.msra.mxu0 0
    %1868 = vmatprep.subr.bf16.mxu0 0
    %1869 = vmatpush1.bf16.msra.mxu0 0
    %1870 = vmatprep.subr.bf16.mxu0 0
    %1871 = vmatpush1.bf16.msra.mxu0 0
    %1872 = vmatprep.subr.bf16.mxu0 0
    %1873 = vmatpush1.bf16.msra.mxu0 0
    %1874 = vmatprep.subr.bf16.mxu0 0
    %1875 = vmatpush1.bf16.msra.mxu0 0
    %1876 = vmatprep.subr.bf16.mxu0 0
    %1877 = vmatpush1.bf16.msra.mxu0 0
    %1878 = vmatprep.mubr.bf16.mxu0 0
    %1879 = vmatmul.mubr.bf16.gmra.mrb[0].mxu0 %v1844
    %v1880 = vpop.f32.mrb[0].mxu0
    %v1881 = vadd.f32 %v154, %v1880
    %v1882 = vpop.f32.mrb[0].mxu0
    %v1883 = vpop.f32.mrb[0].mxu0
    %v1884 = vpop.f32.mrb[0].mxu0
    %1885 = vdwg.mxu0
    %v1886 = vtanh.pop %v1881
    %v1887 = vpack.c.bf16 %v1886, %v1886
    %v1889 = vsel %vm222, %v1887, 0
    %1891 = vmatprep.subr.bf16.mxu0 0
    %1892 = vmatpush1.bf16.msra.mxu0 %v80
    %1893 = vmatprep.subr.bf16.mxu0 0
    %1894 = vmatpush1.bf16.msra.mxu0 %v81
    %1895 = vmatprep.subr.bf16.mxu0 0
    %1896 = vmatpush1.bf16.msra.mxu0 0
    %1897 = vmatprep.subr.bf16.mxu0 0
    %1898 = vmatpush1.bf16.msra.mxu0 0
    %1899 = vmatprep.subr.bf16.mxu0 0
    %1900 = vmatpush1.bf16.msra.mxu0 0
    %1901 = vmatprep.subr.bf16.mxu0 0
    %1902 = vmatpush1.bf16.msra.mxu0 0
    %1903 = vmatprep.subr.bf16.mxu0 0
    %1904 = vmatpush1.bf16.msra.mxu0 0
    %1905 = vmatprep.subr.bf16.mxu0 0
    %1906 = vmatpush1.bf16.msra.mxu0 0
    %1907 = vmatprep.subr.bf16.mxu0 0
    %1908 = vmatpush1.bf16.msra.mxu0 0
    %1909 = vmatprep.subr.bf16.mxu0 0
    %1910 = vmatpush1.bf16.msra.mxu0 0
    %1911 = vmatprep.subr.bf16.mxu0 0
    %1912 = vmatpush1.bf16.msra.mxu0 0
    %1913 = vmatprep.subr.bf16.mxu0 0
    %1914 = vmatpush1.bf16.msra.mxu0 0
    %1915 = vmatprep.subr.bf16.mxu0 0
    %1916 = vmatpush1.bf16.msra.mxu0 0
    %1917 = vmatprep.subr.bf16.mxu0 0
    %1918 = vmatpush1.bf16.msra.mxu0 0
    %1919 = vmatprep.subr.bf16.mxu0 0
    %1920 = vmatpush1.bf16.msra.mxu0 0
    %1921 = vmatprep.subr.bf16.mxu0 0
    %1922 = vmatpush1.bf16.msra.mxu0 0
    %1923 = vmatprep.mubr.bf16.mxu0 0
    %1924 = vmatmul.mubr.bf16.gmra.mrb[0].mxu0 %v1889
    %v1925 = vpop.f32.mrb[0].mxu0
    %v1926 = vadd.f32 %v161, %v1925
    %v1927 = vpop.f32.mrb[0].mxu0
    %v1928 = vpop.f32.mrb[0].mxu0
    %v1929 = vpop.f32.mrb[0].mxu0
    %1930 = vdwg.mxu0
    %v1931 = vtanh.pop %v1926
    %v1932 = vpack.c.bf16 %v1931, %v1931
    %v1934 = vsel %vm222, %v1932, 0
    %1936 = vmatprep.subr.bf16.mxu0 0
    %1937 = vmatpush1.bf16.msra.mxu0 %v90
    %1938 = vmatprep.subr.bf16.mxu0 0
    %1939 = vmatpush1.bf16.msra.mxu0 %v91
    %1940 = vmatprep.subr.bf16.mxu0 0
    %1941 = vmatpush1.bf16.msra.mxu0 0
    %1942 = vmatprep.subr.bf16.mxu0 0
    %1943 = vmatpush1.bf16.msra.mxu0 0
    %1944 = vmatprep.subr.bf16.mxu0 0
    %1945 = vmatpush1.bf16.msra.mxu0 0
    %1946 = vmatprep.subr.bf16.mxu0 0
    %1947 = vmatpush1.bf16.msra.mxu0 0
    %1948 = vmatprep.subr.bf16.mxu0 0
    %1949 = vmatpush1.bf16.msra.mxu0 0
    %1950 = vmatprep.subr.bf16.mxu0 0
    %1951 = vmatpush1.bf16.msra.mxu0 0
    %1952 = vmatprep.subr.bf16.mxu0 0
    %1953 = vmatpush1.bf16.msra.mxu0 0
    %1954 = vmatprep.subr.bf16.mxu0 0
    %1955 = vmatpush1.bf16.msra.mxu0 0
    %1956 = vmatprep.subr.bf16.mxu0 0
    %1957 = vmatpush1.bf16.msra.mxu0 0
    %1958 = vmatprep.subr.bf16.mxu0 0
    %1959 = vmatpush1.bf16.msra.mxu0 0
    %1960 = vmatprep.subr.bf16.mxu0 0
    %1961 = vmatpush1.bf16.msra.mxu0 0
    %1962 = vmatprep.subr.bf16.mxu0 0
    %1963 = vmatpush1.bf16.msra.mxu0 0
    %1964 = vmatprep.subr.bf16.mxu0 0
    %1965 = vmatpush1.bf16.msra.mxu0 0
    %1966 = vmatprep.subr.bf16.mxu0 0
    %1967 = vmatpush1.bf16.msra.mxu0 0
    %1968 = vmatprep.mubr.bf16.mxu0 0
    %1969 = vmatmul.mubr.bf16.gmra.mrb[0].mxu0 %v1934
    %v1970 = vpop.f32.mrb[0].mxu0
    %v1971 = vadd.f32 %v169, %v1970
    %v1972 = vpop.f32.mrb[0].mxu0
    %v1973 = vpop.f32.mrb[0].mxu0
    %v1974 = vpop.f32.mrb[0].mxu0
    %1975 = vdwg.mxu0
    %v1976 = vadd.f32 %v1971, %v1796
    %v1977 = vpack.c.bf16 %v1976, %v1976
    %v1979 = vsel %vm172, %v1977, 0
    %1981 = vmatprep.subr.bf16.mxu0 0
    %1982 = vmatpush1.bf16.msra.mxu0 %v178
    %1983 = vmatprep.subr.bf16.mxu0 0
    %1984 = vmatpush1.bf16.msra.mxu0 0
    %1985 = vmatprep.subr.bf16.mxu0 0
    %1986 = vmatpush1.bf16.msra.mxu0 0
    %1987 = vmatprep.subr.bf16.mxu0 0
    %1988 = vmatpush1.bf16.msra.mxu0 0
    %1989 = vmatprep.subr.bf16.mxu0 0
    %1990 = vmatpush1.bf16.msra.mxu0 0
    %1991 = vmatprep.subr.bf16.mxu0 0
    %1992 = vmatpush1.bf16.msra.mxu0 0
    %1993 = vmatprep.subr.bf16.mxu0 0
    %1994 = vmatpush1.bf16.msra.mxu0 0
    %1995 = vmatprep.subr.bf16.mxu0 0
    %1996 = vmatpush1.bf16.msra.mxu0 0
    %1997 = vmatprep.subr.bf16.mxu0 0
    %1998 = vmatpush1.bf16.msra.mxu0 0
    %1999 = vmatprep.subr.bf16.mxu0 0
    %2000 = vmatpush1.bf16.msra.mxu0 0
    %2001 = vmatprep.subr.bf16.mxu0 0
    %2002 = vmatpush1.bf16.msra.mxu0 0
    %2003 = vmatprep.subr.bf16.mxu0 0
    %2004 = vmatpush1.bf16.msra.mxu0 0
    %2005 = vmatprep.subr.bf16.mxu0 0
    %2006 = vmatpush1.bf16.msra.mxu0 0
    %2007 = vmatprep.subr.bf16.mxu0 0
    %2008 = vmatpush1.bf16.msra.mxu0 0
    %2009 = vmatprep.subr.bf16.mxu0 0
    %2010 = vmatpush1.bf16.msra.mxu0 0
    %2011 = vmatprep.subr.bf16.mxu0 0
    %2012 = vmatpush1.bf16.msra.mxu0 0
    %2013 = vmatprep.mubr.bf16.mxu0 0
    %2014 = vmatmul.mubr.bf16.gmra.mrb[0].mxu0 %v1979
    %v2015 = vpop.f32.mrb[0].mxu0
    %v2016 = vadd.f32 %v144, %v2015
    %v2017 = vpop.f32.mrb[0].mxu0
    %v2018 = vpop.f32.mrb[0].mxu0
    %v2019 = vpop.f32.mrb[0].mxu0
    %2020 = vdwg.mxu0
    %v2021 = vtanh.pop %v2016
    %v2022 = vpack.c.bf16 %v2021, %v2021
    %v2024 = vsel %vm222, %v2022, 0
    %2026 = vmatprep.subr.bf16.mxu0 0
    %2027 = vmatpush1.bf16.msra.mxu0 %v74
    %2028 = vmatprep.subr.bf16.mxu0 0
    %2029 = vmatpush1.bf16.msra.mxu0 %v75
    %2030 = vmatprep.subr.bf16.mxu0 0
    %2031 = vmatpush1.bf16.msra.mxu0 0
    %2032 = vmatprep.subr.bf16.mxu0 0
    %2033 = vmatpush1.bf16.msra.mxu0 0
    %2034 = vmatprep.subr.bf16.mxu0 0
    %2035 = vmatpush1.bf16.msra.mxu0 0
    %2036 = vmatprep.subr.bf16.mxu0 0
    %2037 = vmatpush1.bf16.msra.mxu0 0
    %2038 = vmatprep.subr.bf16.mxu0 0
    %2039 = vmatpush1.bf16.msra.mxu0 0
    %2040 = vmatprep.subr.bf16.mxu0 0
    %2041 = vmatpush1.bf16.msra.mxu0 0
    %2042 = vmatprep.subr.bf16.mxu0 0
    %2043 = vmatpush1.bf16.msra.mxu0 0
    %2044 = vmatprep.subr.bf16.mxu0 0
    %2045 = vmatpush1.bf16.msra.mxu0 0
    %2046 = vmatprep.subr.bf16.mxu0 0
    %2047 = vmatpush1.bf16.msra.mxu0 0
    %2048 = vmatprep.subr.bf16.mxu0 0
    %2049 = vmatpush1.bf16.msra.mxu0 0
    %2050 = vmatprep.subr.bf16.mxu0 0
    %2051 = vmatpush1.bf16.msra.mxu0 0
    %2052 = vmatprep.subr.bf16.mxu0 0
    %2053 = vmatpush1.bf16.msra.mxu0 0
    %2054 = vmatprep.subr.bf16.mxu0 0
    %2055 = vmatpush1.bf16.msra.mxu0 0
    %2056 = vmatprep.subr.bf16.mxu0 0
    %2057 = vmatpush1.bf16.msra.mxu0 0
    %2058 = vmatprep.mubr.bf16.mxu0 0
    %2059 = vmatmul.mubr.bf16.gmra.mrb[0].mxu0 %v2024
    %v2060 = vpop.f32.mrb[0].mxu0
    %v2061 = vadd.f32 %v154, %v2060
    %v2062 = vpop.f32.mrb[0].mxu0
    %v2063 = vpop.f32.mrb[0].mxu0
    %v2064 = vpop.f32.mrb[0].mxu0
    %2065 = vdwg.mxu0
    %v2066 = vtanh.pop %v2061
    %v2067 = vpack.c.bf16 %v2066, %v2066
    %v2069 = vsel %vm222, %v2067, 0
    %2071 = vmatprep.subr.bf16.mxu0 0
    %2072 = vmatpush1.bf16.msra.mxu0 %v80
    %2073 = vmatprep.subr.bf16.mxu0 0
    %2074 = vmatpush1.bf16.msra.mxu0 %v81
    %2075 = vmatprep.subr.bf16.mxu0 0
    %2076 = vmatpush1.bf16.msra.mxu0 0
    %2077 = vmatprep.subr.bf16.mxu0 0
    %2078 = vmatpush1.bf16.msra.mxu0 0
    %2079 = vmatprep.subr.bf16.mxu0 0
    %2080 = vmatpush1.bf16.msra.mxu0 0
    %2081 = vmatprep.subr.bf16.mxu0 0
    %2082 = vmatpush1.bf16.msra.mxu0 0
    %2083 = vmatprep.subr.bf16.mxu0 0
    %2084 = vmatpush1.bf16.msra.mxu0 0
    %2085 = vmatprep.subr.bf16.mxu0 0
    %2086 = vmatpush1.bf16.msra.mxu0 0
    %2087 = vmatprep.subr.bf16.mxu0 0
    %2088 = vmatpush1.bf16.msra.mxu0 0
    %2089 = vmatprep.subr.bf16.mxu0 0
    %2090 = vmatpush1.bf16.msra.mxu0 0
    %2091 = vmatprep.subr.bf16.mxu0 0
    %2092 = vmatpush1.bf16.msra.mxu0 0
    %2093 = vmatprep.subr.bf16.mxu0 0
    %2094 = vmatpush1.bf16.msra.mxu0 0
    %2095 = vmatprep.subr.bf16.mxu0 0
    %2096 = vmatpush1.bf16.msra.mxu0 0
    %2097 = vmatprep.subr.bf16.mxu0 0
    %2098 = vmatpush1.bf16.msra.mxu0 0
    %2099 = vmatprep.subr.bf16.mxu0 0
    %2100 = vmatpush1.bf16.msra.mxu0 0
    %2101 = vmatprep.subr.bf16.mxu0 0
    %2102 = vmatpush1.bf16.msra.mxu0 0
    %2103 = vmatprep.mubr.bf16.mxu0 0
    %2104 = vmatmul.mubr.bf16.gmra.mrb[0].mxu0 %v2069
    %v2105 = vpop.f32.mrb[0].mxu0
    %v2106 = vadd.f32 %v161, %v2105
    %v2107 = vpop.f32.mrb[0].mxu0
    %v2108 = vpop.f32.mrb[0].mxu0
    %v2109 = vpop.f32.mrb[0].mxu0
    %2110 = vdwg.mxu0
    %v2111 = vtanh.pop %v2106
    %v2112 = vpack.c.bf16 %v2111, %v2111
    %v2114 = vsel %vm222, %v2112, 0
    %2116 = vmatprep.subr.bf16.mxu0 0
    %2117 = vmatpush1.bf16.msra.mxu0 %v90
    %2118 = vmatprep.subr.bf16.mxu0 0
    %2119 = vmatpush1.bf16.msra.mxu0 %v91
    %2120 = vmatprep.subr.bf16.mxu0 0
    %2121 = vmatpush1.bf16.msra.mxu0 0
    %2122 = vmatprep.subr.bf16.mxu0 0
    %2123 = vmatpush1.bf16.msra.mxu0 0
    %2124 = vmatprep.subr.bf16.mxu0 0
    %2125 = vmatpush1.bf16.msra.mxu0 0
    %2126 = vmatprep.subr.bf16.mxu0 0
    %2127 = vmatpush1.bf16.msra.mxu0 0
    %2128 = vmatprep.subr.bf16.mxu0 0
    %2129 = vmatpush1.bf16.msra.mxu0 0
    %2130 = vmatprep.subr.bf16.mxu0 0
    %2131 = vmatpush1.bf16.msra.mxu0 0
    %2132 = vmatprep.subr.bf16.mxu0 0
    %2133 = vmatpush1.bf16.msra.mxu0 0
    %2134 = vmatprep.subr.bf16.mxu0 0
    %2135 = vmatpush1.bf16.msra.mxu0 0
    %2136 = vmatprep.subr.bf16.mxu0 0
    %2137 = vmatpush1.bf16.msra.mxu0 0
    %2138 = vmatprep.subr.bf16.mxu0 0
    %2139 = vmatpush1.bf16.msra.mxu0 0
    %2140 = vmatprep.subr.bf16.mxu0 0
    %2141 = vmatpush1.bf16.msra.mxu0 0
    %2142 = vmatprep.subr.bf16.mxu0 0
    %2143 = vmatpush1.bf16.msra.mxu0 0
    %2144 = vmatprep.subr.bf16.mxu0 0
    %2145 = vmatpush1.bf16.msra.mxu0 0
    %2146 = vmatprep.subr.bf16.mxu0 0
    %2147 = vmatpush1.bf16.msra.mxu0 0
    %2148 = vmatprep.mubr.bf16.mxu0 0
    %2149 = vmatmul.mubr.bf16.gmra.mrb[0].mxu0 %v2114
    %v2150 = vpop.f32.mrb[0].mxu0
    %v2151 = vadd.f32 %v169, %v2150
    %v2152 = vpop.f32.mrb[0].mxu0
    %v2153 = vpop.f32.mrb[0].mxu0
    %v2154 = vpop.f32.mrb[0].mxu0
    %2155 = vdwg.mxu0
    %v2156 = vadd.f32 %v2151, %v1976
    %v2157 = vpack.c.bf16 %v2156, %v2156
    %v2159 = vsel %vm172, %v2157, 0
    %2161 = vmatprep.subr.bf16.mxu0 0
    %2162 = vmatpush1.bf16.msra.mxu0 %v178
    %2163 = vmatprep.subr.bf16.mxu0 0
    %2164 = vmatpush1.bf16.msra.mxu0 0
    %2165 = vmatprep.subr.bf16.mxu0 0
    %2166 = vmatpush1.bf16.msra.mxu0 0
    %2167 = vmatprep.subr.bf16.mxu0 0
    %2168 = vmatpush1.bf16.msra.mxu0 0
    %2169 = vmatprep.subr.bf16.mxu0 0
    %2170 = vmatpush1.bf16.msra.mxu0 0
    %2171 = vmatprep.subr.bf16.mxu0 0
    %2172 = vmatpush1.bf16.msra.mxu0 0
    %2173 = vmatprep.subr.bf16.mxu0 0
    %2174 = vmatpush1.bf16.msra.mxu0 0
    %2175 = vmatprep.subr.bf16.mxu0 0
    %2176 = vmatpush1.bf16.msra.mxu0 0
    %2177 = vmatprep.subr.bf16.mxu0 0
    %2178 = vmatpush1.bf16.msra.mxu0 0
    %2179 = vmatprep.subr.bf16.mxu0 0
    %2180 = vmatpush1.bf16.msra.mxu0 0
    %2181 = vmatprep.subr.bf16.mxu0 0
    %2182 = vmatpush1.bf16.msra.mxu0 0
    %2183 = vmatprep.subr.bf16.mxu0 0
    %2184 = vmatpush1.bf16.msra.mxu0 0
    %2185 = vmatprep.subr.bf16.mxu0 0
    %2186 = vmatpush1.bf16.msra.mxu0 0
    %2187 = vmatprep.subr.bf16.mxu0 0
    %2188 = vmatpush1.bf16.msra.mxu0 0
    %2189 = vmatprep.subr.bf16.mxu0 0
    %2190 = vmatpush1.bf16.msra.mxu0 0
    %2191 = vmatprep.subr.bf16.mxu0 0
    %2192 = vmatpush1.bf16.msra.mxu0 0
    %2193 = vmatprep.mubr.bf16.mxu0 0
    %2194 = vmatmul.mubr.bf16.gmra.mrb[0].mxu0 %v2159
    %v2195 = vpop.f32.mrb[0].mxu0
    %v2196 = vadd.f32 %v144, %v2195
    %v2197 = vpop.f32.mrb[0].mxu0
    %v2198 = vpop.f32.mrb[0].mxu0
    %v2199 = vpop.f32.mrb[0].mxu0
    %2200 = vdwg.mxu0
    %v2201 = vtanh.pop %v2196
    %v2202 = vpack.c.bf16 %v2201, %v2201
    %v2204 = vsel %vm222, %v2202, 0
    %2206 = vmatprep.subr.bf16.mxu0 0
    %2207 = vmatpush1.bf16.msra.mxu0 %v74
    %2208 = vmatprep.subr.bf16.mxu0 0
    %2209 = vmatpush1.bf16.msra.mxu0 %v75
    %2210 = vmatprep.subr.bf16.mxu0 0
    %2211 = vmatpush1.bf16.msra.mxu0 0
    %2212 = vmatprep.subr.bf16.mxu0 0
    %2213 = vmatpush1.bf16.msra.mxu0 0
    %2214 = vmatprep.subr.bf16.mxu0 0
    %2215 = vmatpush1.bf16.msra.mxu0 0
    %2216 = vmatprep.subr.bf16.mxu0 0
    %2217 = vmatpush1.bf16.msra.mxu0 0
    %2218 = vmatprep.subr.bf16.mxu0 0
    %2219 = vmatpush1.bf16.msra.mxu0 0
    %2220 = vmatprep.subr.bf16.mxu0 0
    %2221 = vmatpush1.bf16.msra.mxu0 0
    %2222 = vmatprep.subr.bf16.mxu0 0
    %2223 = vmatpush1.bf16.msra.mxu0 0
    %2224 = vmatprep.subr.bf16.mxu0 0
    %2225 = vmatpush1.bf16.msra.mxu0 0
    %2226 = vmatprep.subr.bf16.mxu0 0
    %2227 = vmatpush1.bf16.msra.mxu0 0
    %2228 = vmatprep.subr.bf16.mxu0 0
    %2229 = vmatpush1.bf16.msra.mxu0 0
    %2230 = vmatprep.subr.bf16.mxu0 0
    %2231 = vmatpush1.bf16.msra.mxu0 0
    %2232 = vmatprep.subr.bf16.mxu0 0
    %2233 = vmatpush1.bf16.msra.mxu0 0
    %2234 = vmatprep.subr.bf16.mxu0 0
    %2235 = vmatpush1.bf16.msra.mxu0 0
    %2236 = vmatprep.subr.bf16.mxu0 0
    %2237 = vmatpush1.bf16.msra.mxu0 0
    %2238 = vmatprep.mubr.bf16.mxu0 0
    %2239 = vmatmul.mubr.bf16.gmra.mrb[0].mxu0 %v2204
    %v2240 = vpop.f32.mrb[0].mxu0
    %v2241 = vadd.f32 %v154, %v2240
    %v2242 = vpop.f32.mrb[0].mxu0
    %v2243 = vpop.f32.mrb[0].mxu0
    %v2244 = vpop.f32.mrb[0].mxu0
    %2245 = vdwg.mxu0
    %v2246 = vtanh.pop %v2241
    %v2247 = vpack.c.bf16 %v2246, %v2246
    %v2249 = vsel %vm222, %v2247, 0
    %2251 = vmatprep.subr.bf16.mxu0 0
    %2252 = vmatpush1.bf16.msra.mxu0 %v80
    %2253 = vmatprep.subr.bf16.mxu0 0
    %2254 = vmatpush1.bf16.msra.mxu0 %v81
    %2255 = vmatprep.subr.bf16.mxu0 0
    %2256 = vmatpush1.bf16.msra.mxu0 0
    %2257 = vmatprep.subr.bf16.mxu0 0
    %2258 = vmatpush1.bf16.msra.mxu0 0
    %2259 = vmatprep.subr.bf16.mxu0 0
    %2260 = vmatpush1.bf16.msra.mxu0 0
    %2261 = vmatprep.subr.bf16.mxu0 0
    %2262 = vmatpush1.bf16.msra.mxu0 0
    %2263 = vmatprep.subr.bf16.mxu0 0
    %2264 = vmatpush1.bf16.msra.mxu0 0
    %2265 = vmatprep.subr.bf16.mxu0 0
    %2266 = vmatpush1.bf16.msra.mxu0 0
    %2267 = vmatprep.subr.bf16.mxu0 0
    %2268 = vmatpush1.bf16.msra.mxu0 0
    %2269 = vmatprep.subr.bf16.mxu0 0
    %2270 = vmatpush1.bf16.msra.mxu0 0
    %2271 = vmatprep.subr.bf16.mxu0 0
    %2272 = vmatpush1.bf16.msra.mxu0 0
    %2273 = vmatprep.subr.bf16.mxu0 0
    %2274 = vmatpush1.bf16.msra.mxu0 0
    %2275 = vmatprep.subr.bf16.mxu0 0
    %2276 = vmatpush1.bf16.msra.mxu0 0
    %2277 = vmatprep.subr.bf16.mxu0 0
    %2278 = vmatpush1.bf16.msra.mxu0 0
    %2279 = vmatprep.subr.bf16.mxu0 0
    %2280 = vmatpush1.bf16.msra.mxu0 0
    %2281 = vmatprep.subr.bf16.mxu0 0
    %2282 = vmatpush1.bf16.msra.mxu0 0
    %2283 = vmatprep.mubr.bf16.mxu0 0
    %2284 = vmatmul.mubr.bf16.gmra.mrb[0].mxu0 %v2249
    %v2285 = vpop.f32.mrb[0].mxu0
    %v2286 = vadd.f32 %v161, %v2285
    %v2287 = vpop.f32.mrb[0].mxu0
    %v2288 = vpop.f32.mrb[0].mxu0
    %v2289 = vpop.f32.mrb[0].mxu0
    %2290 = vdwg.mxu0
    %v2291 = vtanh.pop %v2286
    %v2292 = vpack.c.bf16 %v2291, %v2291
    %v2294 = vsel %vm222, %v2292, 0
    %2296 = vmatprep.subr.bf16.mxu0 0
    %2297 = vmatpush1.bf16.msra.mxu0 %v90
    %2298 = vmatprep.subr.bf16.mxu0 0
    %2299 = vmatpush1.bf16.msra.mxu0 %v91
    %2300 = vmatprep.subr.bf16.mxu0 0
    %2301 = vmatpush1.bf16.msra.mxu0 0
    %2302 = vmatprep.subr.bf16.mxu0 0
    %2303 = vmatpush1.bf16.msra.mxu0 0
    %2304 = vmatprep.subr.bf16.mxu0 0
    %2305 = vmatpush1.bf16.msra.mxu0 0
    %2306 = vmatprep.subr.bf16.mxu0 0
    %2307 = vmatpush1.bf16.msra.mxu0 0
    %2308 = vmatprep.subr.bf16.mxu0 0
    %2309 = vmatpush1.bf16.msra.mxu0 0
    %2310 = vmatprep.subr.bf16.mxu0 0
    %2311 = vmatpush1.bf16.msra.mxu0 0
    %2312 = vmatprep.subr.bf16.mxu0 0
    %2313 = vmatpush1.bf16.msra.mxu0 0
    %2314 = vmatprep.subr.bf16.mxu0 0
    %2315 = vmatpush1.bf16.msra.mxu0 0
    %2316 = vmatprep.subr.bf16.mxu0 0
    %2317 = vmatpush1.bf16.msra.mxu0 0
    %2318 = vmatprep.subr.bf16.mxu0 0
    %2319 = vmatpush1.bf16.msra.mxu0 0
    %2320 = vmatprep.subr.bf16.mxu0 0
    %2321 = vmatpush1.bf16.msra.mxu0 0
    %2322 = vmatprep.subr.bf16.mxu0 0
    %2323 = vmatpush1.bf16.msra.mxu0 0
    %2324 = vmatprep.subr.bf16.mxu0 0
    %2325 = vmatpush1.bf16.msra.mxu0 0
    %2326 = vmatprep.subr.bf16.mxu0 0
    %2327 = vmatpush1.bf16.msra.mxu0 0
    %2328 = vmatprep.mubr.bf16.mxu0 0
    %2329 = vmatmul.mubr.bf16.gmra.mrb[0].mxu0 %v2294
    %v2330 = vpop.f32.mrb[0].mxu0
    %v2331 = vadd.f32 %v169, %v2330
    %v2332 = vpop.f32.mrb[0].mxu0
    %v2333 = vpop.f32.mrb[0].mxu0
    %v2334 = vpop.f32.mrb[0].mxu0
    %2335 = vdwg.mxu0
    %v2336 = vadd.f32 %v2331, %v2156
    %v2337 = vpack.c.bf16 %v2336, %v2336
    %v2339 = vsel %vm172, %v2337, 0
    %2341 = vmatprep.subr.bf16.mxu0 0
    %2342 = vmatpush1.bf16.msra.mxu0 %v178
    %2343 = vmatprep.subr.bf16.mxu0 0
    %2344 = vmatpush1.bf16.msra.mxu0 0
    %2345 = vmatprep.subr.bf16.mxu0 0
    %2346 = vmatpush1.bf16.msra.mxu0 0
    %2347 = vmatprep.subr.bf16.mxu0 0
    %2348 = vmatpush1.bf16.msra.mxu0 0
    %2349 = vmatprep.subr.bf16.mxu0 0
    %2350 = vmatpush1.bf16.msra.mxu0 0
    %2351 = vmatprep.subr.bf16.mxu0 0
    %2352 = vmatpush1.bf16.msra.mxu0 0
    %2353 = vmatprep.subr.bf16.mxu0 0
    %2354 = vmatpush1.bf16.msra.mxu0 0
    %2355 = vmatprep.subr.bf16.mxu0 0
    %2356 = vmatpush1.bf16.msra.mxu0 0
    %2357 = vmatprep.subr.bf16.mxu0 0
    %2358 = vmatpush1.bf16.msra.mxu0 0
    %2359 = vmatprep.subr.bf16.mxu0 0
    %2360 = vmatpush1.bf16.msra.mxu0 0
    %2361 = vmatprep.subr.bf16.mxu0 0
    %2362 = vmatpush1.bf16.msra.mxu0 0
    %2363 = vmatprep.subr.bf16.mxu0 0
    %2364 = vmatpush1.bf16.msra.mxu0 0
    %2365 = vmatprep.subr.bf16.mxu0 0
    %2366 = vmatpush1.bf16.msra.mxu0 0
    %2367 = vmatprep.subr.bf16.mxu0 0
    %2368 = vmatpush1.bf16.msra.mxu0 0
    %2369 = vmatprep.subr.bf16.mxu0 0
    %2370 = vmatpush1.bf16.msra.mxu0 0
    %2371 = vmatprep.subr.bf16.mxu0 0
    %2372 = vmatpush1.bf16.msra.mxu0 0
    %2373 = vmatprep.mubr.bf16.mxu0 0
    %2374 = vmatmul.mubr.bf16.gmra.mrb[0].mxu0 %v2339
    %v2375 = vpop.f32.mrb[0].mxu0
    %v2376 = vadd.f32 %v144, %v2375
    %v2377 = vpop.f32.mrb[0].mxu0
    %v2378 = vpop.f32.mrb[0].mxu0
    %v2379 = vpop.f32.mrb[0].mxu0
    %2380 = vdwg.mxu0
    %v2381 = vtanh.pop %v2376
    %v2382 = vpack.c.bf16 %v2381, %v2381
    %v2384 = vsel %vm222, %v2382, 0
    %2386 = vmatprep.subr.bf16.mxu0 0
    %2387 = vmatpush1.bf16.msra.mxu0 %v74
    %2388 = vmatprep.subr.bf16.mxu0 0
    %2389 = vmatpush1.bf16.msra.mxu0 %v75
    %2390 = vmatprep.subr.bf16.mxu0 0
    %2391 = vmatpush1.bf16.msra.mxu0 0
    %2392 = vmatprep.subr.bf16.mxu0 0
    %2393 = vmatpush1.bf16.msra.mxu0 0
    %2394 = vmatprep.subr.bf16.mxu0 0
    %2395 = vmatpush1.bf16.msra.mxu0 0
    %2396 = vmatprep.subr.bf16.mxu0 0
    %2397 = vmatpush1.bf16.msra.mxu0 0
    %2398 = vmatprep.subr.bf16.mxu0 0
    %2399 = vmatpush1.bf16.msra.mxu0 0
    %2400 = vmatprep.subr.bf16.mxu0 0
    %2401 = vmatpush1.bf16.msra.mxu0 0
    %2402 = vmatprep.subr.bf16.mxu0 0
    %2403 = vmatpush1.bf16.msra.mxu0 0
    %2404 = vmatprep.subr.bf16.mxu0 0
    %2405 = vmatpush1.bf16.msra.mxu0 0
    %2406 = vmatprep.subr.bf16.mxu0 0
    %2407 = vmatpush1.bf16.msra.mxu0 0
    %2408 = vmatprep.subr.bf16.mxu0 0
    %2409 = vmatpush1.bf16.msra.mxu0 0
    %2410 = vmatprep.subr.bf16.mxu0 0
    %2411 = vmatpush1.bf16.msra.mxu0 0
    %2412 = vmatprep.subr.bf16.mxu0 0
    %2413 = vmatpush1.bf16.msra.mxu0 0
    %2414 = vmatprep.subr.bf16.mxu0 0
    %2415 = vmatpush1.bf16.msra.mxu0 0
    %2416 = vmatprep.subr.bf16.mxu0 0
    %2417 = vmatpush1.bf16.msra.mxu0 0
    %2418 = vmatprep.mubr.bf16.mxu0 0
    %2419 = vmatmul.mubr.bf16.gmra.mrb[0].mxu0 %v2384
    %v2420 = vpop.f32.mrb[0].mxu0
    %v2421 = vadd.f32 %v154, %v2420
    %v2422 = vpop.f32.mrb[0].mxu0
    %v2423 = vpop.f32.mrb[0].mxu0
    %v2424 = vpop.f32.mrb[0].mxu0
    %2425 = vdwg.mxu0
    %v2426 = vtanh.pop %v2421
    %v2427 = vpack.c.bf16 %v2426, %v2426
    %v2429 = vsel %vm222, %v2427, 0
    %2431 = vmatprep.subr.bf16.mxu0 0
    %2432 = vmatpush1.bf16.msra.mxu0 %v80
    %2433 = vmatprep.subr.bf16.mxu0 0
    %2434 = vmatpush1.bf16.msra.mxu0 %v81
    %2435 = vmatprep.subr.bf16.mxu0 0
    %2436 = vmatpush1.bf16.msra.mxu0 0
    %2437 = vmatprep.subr.bf16.mxu0 0
    %2438 = vmatpush1.bf16.msra.mxu0 0
    %2439 = vmatprep.subr.bf16.mxu0 0
    %2440 = vmatpush1.bf16.msra.mxu0 0
    %2441 = vmatprep.subr.bf16.mxu0 0
    %2442 = vmatpush1.bf16.msra.mxu0 0
    %2443 = vmatprep.subr.bf16.mxu0 0
    %2444 = vmatpush1.bf16.msra.mxu0 0
    %2445 = vmatprep.subr.bf16.mxu0 0
    %2446 = vmatpush1.bf16.msra.mxu0 0
    %2447 = vmatprep.subr.bf16.mxu0 0
    %2448 = vmatpush1.bf16.msra.mxu0 0
    %2449 = vmatprep.subr.bf16.mxu0 0
    %2450 = vmatpush1.bf16.msra.mxu0 0
    %2451 = vmatprep.subr.bf16.mxu0 0
    %2452 = vmatpush1.bf16.msra.mxu0 0
    %2453 = vmatprep.subr.bf16.mxu0 0
    %2454 = vmatpush1.bf16.msra.mxu0 0
    %2455 = vmatprep.subr.bf16.mxu0 0
    %2456 = vmatpush1.bf16.msra.mxu0 0
    %2457 = vmatprep.subr.bf16.mxu0 0
    %2458 = vmatpush1.bf16.msra.mxu0 0
    %2459 = vmatprep.subr.bf16.mxu0 0
    %2460 = vmatpush1.bf16.msra.mxu0 0
    %2461 = vmatprep.subr.bf16.mxu0 0
    %2462 = vmatpush1.bf16.msra.mxu0 0
    %2463 = vmatprep.mubr.bf16.mxu0 0
    %2464 = vmatmul.mubr.bf16.gmra.mrb[0].mxu0 %v2429
    %v2465 = vpop.f32.mrb[0].mxu0
    %v2466 = vadd.f32 %v161, %v2465
    %v2467 = vpop.f32.mrb[0].mxu0
    %v2468 = vpop.f32.mrb[0].mxu0
    %v2469 = vpop.f32.mrb[0].mxu0
    %2470 = vdwg.mxu0
    %v2471 = vtanh.pop %v2466
    %v2472 = vpack.c.bf16 %v2471, %v2471
    %v2474 = vsel %vm222, %v2472, 0
    %2476 = vmatprep.subr.bf16.mxu0 0
    %2477 = vmatpush1.bf16.msra.mxu0 %v90
    %2478 = vmatprep.subr.bf16.mxu0 0
    %2479 = vmatpush1.bf16.msra.mxu0 %v91
    %2480 = vmatprep.subr.bf16.mxu0 0
    %2481 = vmatpush1.bf16.msra.mxu0 0
    %2482 = vmatprep.subr.bf16.mxu0 0
    %2483 = vmatpush1.bf16.msra.mxu0 0
    %2484 = vmatprep.subr.bf16.mxu0 0
    %2485 = vmatpush1.bf16.msra.mxu0 0
    %2486 = vmatprep.subr.bf16.mxu0 0
    %2487 = vmatpush1.bf16.msra.mxu0 0
    %2488 = vmatprep.subr.bf16.mxu0 0
    %2489 = vmatpush1.bf16.msra.mxu0 0
    %2490 = vmatprep.subr.bf16.mxu0 0
    %2491 = vmatpush1.bf16.msra.mxu0 0
    %2492 = vmatprep.subr.bf16.mxu0 0
    %2493 = vmatpush1.bf16.msra.mxu0 0
    %2494 = vmatprep.subr.bf16.mxu0 0
    %2495 = vmatpush1.bf16.msra.mxu0 0
    %2496 = vmatprep.subr.bf16.mxu0 0
    %2497 = vmatpush1.bf16.msra.mxu0 0
    %2498 = vmatprep.subr.bf16.mxu0 0
    %2499 = vmatpush1.bf16.msra.mxu0 0
    %2500 = vmatprep.subr.bf16.mxu0 0
    %2501 = vmatpush1.bf16.msra.mxu0 0
    %2502 = vmatprep.subr.bf16.mxu0 0
    %2503 = vmatpush1.bf16.msra.mxu0 0
    %2504 = vmatprep.subr.bf16.mxu0 0
    %2505 = vmatpush1.bf16.msra.mxu0 0
    %2506 = vmatprep.subr.bf16.mxu0 0
    %2507 = vmatpush1.bf16.msra.mxu0 0
    %2508 = vmatprep.mubr.bf16.mxu0 0
    %2509 = vmatmul.mubr.bf16.gmra.mrb[0].mxu0 %v2474
    %v2510 = vpop.f32.mrb[0].mxu0
    %v2511 = vadd.f32 %v169, %v2510
    %v2512 = vpop.f32.mrb[0].mxu0
    %v2513 = vpop.f32.mrb[0].mxu0
    %v2514 = vpop.f32.mrb[0].mxu0
    %2515 = vdwg.mxu0
    %v2516 = vadd.f32 %v2511, %v2336
    %v2517 = vpack.c.bf16 %v2516, %v2516
    %v2519 = vsel %vm172, %v2517, 0
    %2521 = vmatprep.subr.bf16.mxu0 0
    %2522 = vmatpush1.bf16.msra.mxu0 %v178
    %2523 = vmatprep.subr.bf16.mxu0 0
    %2524 = vmatpush1.bf16.msra.mxu0 0
    %2525 = vmatprep.subr.bf16.mxu0 0
    %2526 = vmatpush1.bf16.msra.mxu0 0
    %2527 = vmatprep.subr.bf16.mxu0 0
    %2528 = vmatpush1.bf16.msra.mxu0 0
    %2529 = vmatprep.subr.bf16.mxu0 0
    %2530 = vmatpush1.bf16.msra.mxu0 0
    %2531 = vmatprep.subr.bf16.mxu0 0
    %2532 = vmatpush1.bf16.msra.mxu0 0
    %2533 = vmatprep.subr.bf16.mxu0 0
    %2534 = vmatpush1.bf16.msra.mxu0 0
    %2535 = vmatprep.subr.bf16.mxu0 0
    %2536 = vmatpush1.bf16.msra.mxu0 0
    %2537 = vmatprep.subr.bf16.mxu0 0
    %2538 = vmatpush1.bf16.msra.mxu0 0
    %2539 = vmatprep.subr.bf16.mxu0 0
    %2540 = vmatpush1.bf16.msra.mxu0 0
    %2541 = vmatprep.subr.bf16.mxu0 0
    %2542 = vmatpush1.bf16.msra.mxu0 0
    %2543 = vmatprep.subr.bf16.mxu0 0
    %2544 = vmatpush1.bf16.msra.mxu0 0
    %2545 = vmatprep.subr.bf16.mxu0 0
    %2546 = vmatpush1.bf16.msra.mxu0 0
    %2547 = vmatprep.subr.bf16.mxu0 0
    %2548 = vmatpush1.bf16.msra.mxu0 0
    %2549 = vmatprep.subr.bf16.mxu0 0
    %2550 = vmatpush1.bf16.msra.mxu0 0
    %2551 = vmatprep.subr.bf16.mxu0 0
    %2552 = vmatpush1.bf16.msra.mxu0 0
    %2553 = vmatprep.mubr.bf16.mxu0 0
    %2554 = vmatmul.mubr.bf16.gmra.mrb[0].mxu0 %v2519
    %v2555 = vpop.f32.mrb[0].mxu0
    %v2556 = vadd.f32 %v144, %v2555
    %v2557 = vpop.f32.mrb[0].mxu0
    %v2558 = vpop.f32.mrb[0].mxu0
    %v2559 = vpop.f32.mrb[0].mxu0
    %2560 = vdwg.mxu0
    %v2561 = vtanh.pop %v2556
    %v2562 = vpack.c.bf16 %v2561, %v2561
    %v2564 = vsel %vm222, %v2562, 0
    %2566 = vmatprep.subr.bf16.mxu0 0
    %2567 = vmatpush1.bf16.msra.mxu0 %v74
    %2568 = vmatprep.subr.bf16.mxu0 0
    %2569 = vmatpush1.bf16.msra.mxu0 %v75
    %2570 = vmatprep.subr.bf16.mxu0 0
    %2571 = vmatpush1.bf16.msra.mxu0 0
    %2572 = vmatprep.subr.bf16.mxu0 0
    %2573 = vmatpush1.bf16.msra.mxu0 0
    %2574 = vmatprep.subr.bf16.mxu0 0
    %2575 = vmatpush1.bf16.msra.mxu0 0
    %2576 = vmatprep.subr.bf16.mxu0 0
    %2577 = vmatpush1.bf16.msra.mxu0 0
    %2578 = vmatprep.subr.bf16.mxu0 0
    %2579 = vmatpush1.bf16.msra.mxu0 0
    %2580 = vmatprep.subr.bf16.mxu0 0
    %2581 = vmatpush1.bf16.msra.mxu0 0
    %2582 = vmatprep.subr.bf16.mxu0 0
    %2583 = vmatpush1.bf16.msra.mxu0 0
    %2584 = vmatprep.subr.bf16.mxu0 0
    %2585 = vmatpush1.bf16.msra.mxu0 0
    %2586 = vmatprep.subr.bf16.mxu0 0
    %2587 = vmatpush1.bf16.msra.mxu0 0
    %2588 = vmatprep.subr.bf16.mxu0 0
    %2589 = vmatpush1.bf16.msra.mxu0 0
    %2590 = vmatprep.subr.bf16.mxu0 0
    %2591 = vmatpush1.bf16.msra.mxu0 0
    %2592 = vmatprep.subr.bf16.mxu0 0
    %2593 = vmatpush1.bf16.msra.mxu0 0
    %2594 = vmatprep.subr.bf16.mxu0 0
    %2595 = vmatpush1.bf16.msra.mxu0 0
    %2596 = vmatprep.subr.bf16.mxu0 0
    %2597 = vmatpush1.bf16.msra.mxu0 0
    %2598 = vmatprep.mubr.bf16.mxu0 0
    %2599 = vmatmul.mubr.bf16.gmra.mrb[0].mxu0 %v2564
    %v2600 = vpop.f32.mrb[0].mxu0
    %v2601 = vadd.f32 %v154, %v2600
    %v2602 = vpop.f32.mrb[0].mxu0
    %v2603 = vpop.f32.mrb[0].mxu0
    %v2604 = vpop.f32.mrb[0].mxu0
    %2605 = vdwg.mxu0
    %v2606 = vtanh.pop %v2601
    %v2607 = vpack.c.bf16 %v2606, %v2606
    %v2609 = vsel %vm222, %v2607, 0
    %2611 = vmatprep.subr.bf16.mxu0 0
    %2612 = vmatpush1.bf16.msra.mxu0 %v80
    %2613 = vmatprep.subr.bf16.mxu0 0
    %2614 = vmatpush1.bf16.msra.mxu0 %v81
    %2615 = vmatprep.subr.bf16.mxu0 0
    %2616 = vmatpush1.bf16.msra.mxu0 0
    %2617 = vmatprep.subr.bf16.mxu0 0
    %2618 = vmatpush1.bf16.msra.mxu0 0
    %2619 = vmatprep.subr.bf16.mxu0 0
    %2620 = vmatpush1.bf16.msra.mxu0 0
    %2621 = vmatprep.subr.bf16.mxu0 0
    %2622 = vmatpush1.bf16.msra.mxu0 0
    %2623 = vmatprep.subr.bf16.mxu0 0
    %2624 = vmatpush1.bf16.msra.mxu0 0
    %2625 = vmatprep.subr.bf16.mxu0 0
    %2626 = vmatpush1.bf16.msra.mxu0 0
    %2627 = vmatprep.subr.bf16.mxu0 0
    %2628 = vmatpush1.bf16.msra.mxu0 0
    %2629 = vmatprep.subr.bf16.mxu0 0
    %2630 = vmatpush1.bf16.msra.mxu0 0
    %2631 = vmatprep.subr.bf16.mxu0 0
    %2632 = vmatpush1.bf16.msra.mxu0 0
    %2633 = vmatprep.subr.bf16.mxu0 0
    %2634 = vmatpush1.bf16.msra.mxu0 0
    %2635 = vmatprep.subr.bf16.mxu0 0
    %2636 = vmatpush1.bf16.msra.mxu0 0
    %2637 = vmatprep.subr.bf16.mxu0 0
    %2638 = vmatpush1.bf16.msra.mxu0 0
    %2639 = vmatprep.subr.bf16.mxu0 0
    %2640 = vmatpush1.bf16.msra.mxu0 0
    %2641 = vmatprep.subr.bf16.mxu0 0
    %2642 = vmatpush1.bf16.msra.mxu0 0
    %2643 = vmatprep.mubr.bf16.mxu0 0
    %2644 = vmatmul.mubr.bf16.gmra.mrb[0].mxu0 %v2609
    %v2645 = vpop.f32.mrb[0].mxu0
    %v2646 = vadd.f32 %v161, %v2645
    %v2647 = vpop.f32.mrb[0].mxu0
    %v2648 = vpop.f32.mrb[0].mxu0
    %v2649 = vpop.f32.mrb[0].mxu0
    %2650 = vdwg.mxu0
    %v2651 = vtanh.pop %v2646
    %v2652 = vpack.c.bf16 %v2651, %v2651
    %v2654 = vsel %vm222, %v2652, 0
    %2656 = vmatprep.subr.bf16.mxu0 0
    %2657 = vmatpush1.bf16.msra.mxu0 %v90
    %2658 = vmatprep.subr.bf16.mxu0 0
    %2659 = vmatpush1.bf16.msra.mxu0 %v91
    %2660 = vmatprep.subr.bf16.mxu0 0
    %2661 = vmatpush1.bf16.msra.mxu0 0
    %2662 = vmatprep.subr.bf16.mxu0 0
    %2663 = vmatpush1.bf16.msra.mxu0 0
    %2664 = vmatprep.subr.bf16.mxu0 0
    %2665 = vmatpush1.bf16.msra.mxu0 0
    %2666 = vmatprep.subr.bf16.mxu0 0
    %2667 = vmatpush1.bf16.msra.mxu0 0
    %2668 = vmatprep.subr.bf16.mxu0 0
    %2669 = vmatpush1.bf16.msra.mxu0 0
    %2670 = vmatprep.subr.bf16.mxu0 0
    %2671 = vmatpush1.bf16.msra.mxu0 0
    %2672 = vmatprep.subr.bf16.mxu0 0
    %2673 = vmatpush1.bf16.msra.mxu0 0
    %2674 = vmatprep.subr.bf16.mxu0 0
    %2675 = vmatpush1.bf16.msra.mxu0 0
    %2676 = vmatprep.subr.bf16.mxu0 0
    %2677 = vmatpush1.bf16.msra.mxu0 0
    %2678 = vmatprep.subr.bf16.mxu0 0
    %2679 = vmatpush1.bf16.msra.mxu0 0
    %2680 = vmatprep.subr.bf16.mxu0 0
    %2681 = vmatpush1.bf16.msra.mxu0 0
    %2682 = vmatprep.subr.bf16.mxu0 0
    %2683 = vmatpush1.bf16.msra.mxu0 0
    %2684 = vmatprep.subr.bf16.mxu0 0
    %2685 = vmatpush1.bf16.msra.mxu0 0
    %2686 = vmatprep.subr.bf16.mxu0 0
    %2687 = vmatpush1.bf16.msra.mxu0 0
    %2688 = vmatprep.mubr.bf16.mxu0 0
    %2689 = vmatmul.mubr.bf16.gmra.mrb[0].mxu0 %v2654
    %v2690 = vpop.f32.mrb[0].mxu0
    %v2691 = vadd.f32 %v169, %v2690
    %v2692 = vpop.f32.mrb[0].mxu0
    %v2693 = vpop.f32.mrb[0].mxu0
    %v2694 = vpop.f32.mrb[0].mxu0
    %2695 = vdwg.mxu0
    %v2696 = vadd.f32 %v2691, %v2516
    %v2697 = vpack.c.bf16 %v2696, %v2696
    %v2699 = vsel %vm172, %v2697, 0
    %2701 = vmatprep.subr.bf16.mxu0 0
    %2702 = vmatpush1.bf16.msra.mxu0 %v178
    %2703 = vmatprep.subr.bf16.mxu0 0
    %2704 = vmatpush1.bf16.msra.mxu0 0
    %2705 = vmatprep.subr.bf16.mxu0 0
    %2706 = vmatpush1.bf16.msra.mxu0 0
    %2707 = vmatprep.subr.bf16.mxu0 0
    %2708 = vmatpush1.bf16.msra.mxu0 0
    %2709 = vmatprep.subr.bf16.mxu0 0
    %2710 = vmatpush1.bf16.msra.mxu0 0
    %2711 = vmatprep.subr.bf16.mxu0 0
    %2712 = vmatpush1.bf16.msra.mxu0 0
    %2713 = vmatprep.subr.bf16.mxu0 0
    %2714 = vmatpush1.bf16.msra.mxu0 0
    %2715 = vmatprep.subr.bf16.mxu0 0
    %2716 = vmatpush1.bf16.msra.mxu0 0
    %2717 = vmatprep.subr.bf16.mxu0 0
    %2718 = vmatpush1.bf16.msra.mxu0 0
    %2719 = vmatprep.subr.bf16.mxu0 0
    %2720 = vmatpush1.bf16.msra.mxu0 0
    %2721 = vmatprep.subr.bf16.mxu0 0
    %2722 = vmatpush1.bf16.msra.mxu0 0
    %2723 = vmatprep.subr.bf16.mxu0 0
    %2724 = vmatpush1.bf16.msra.mxu0 0
    %2725 = vmatprep.subr.bf16.mxu0 0
    %2726 = vmatpush1.bf16.msra.mxu0 0
    %2727 = vmatprep.subr.bf16.mxu0 0
    %2728 = vmatpush1.bf16.msra.mxu0 0
    %2729 = vmatprep.subr.bf16.mxu0 0
    %2730 = vmatpush1.bf16.msra.mxu0 0
    %2731 = vmatprep.subr.bf16.mxu0 0
    %2732 = vmatpush1.bf16.msra.mxu0 0
    %2733 = vmatprep.mubr.bf16.mxu0 0
    %2734 = vmatmul.mubr.bf16.gmra.mrb[0].mxu0 %v2699
    %v2735 = vpop.f32.mrb[0].mxu0
    %v2736 = vadd.f32 %v144, %v2735
    %v2737 = vpop.f32.mrb[0].mxu0
    %v2738 = vpop.f32.mrb[0].mxu0
    %v2739 = vpop.f32.mrb[0].mxu0
    %2740 = vdwg.mxu0
    %v2741 = vtanh.pop %v2736
    %v2742 = vpack.c.bf16 %v2741, %v2741
    %v2744 = vsel %vm222, %v2742, 0
    %2746 = vmatprep.subr.bf16.mxu0 0
    %2747 = vmatpush1.bf16.msra.mxu0 %v74
    %2748 = vmatprep.subr.bf16.mxu0 0
    %2749 = vmatpush1.bf16.msra.mxu0 %v75
    %2750 = vmatprep.subr.bf16.mxu0 0
    %2751 = vmatpush1.bf16.msra.mxu0 0
    %2752 = vmatprep.subr.bf16.mxu0 0
    %2753 = vmatpush1.bf16.msra.mxu0 0
    %2754 = vmatprep.subr.bf16.mxu0 0
    %2755 = vmatpush1.bf16.msra.mxu0 0
    %2756 = vmatprep.subr.bf16.mxu0 0
    %2757 = vmatpush1.bf16.msra.mxu0 0
    %2758 = vmatprep.subr.bf16.mxu0 0
    %2759 = vmatpush1.bf16.msra.mxu0 0
    %2760 = vmatprep.subr.bf16.mxu0 0
    %2761 = vmatpush1.bf16.msra.mxu0 0
    %2762 = vmatprep.subr.bf16.mxu0 0
    %2763 = vmatpush1.bf16.msra.mxu0 0
    %2764 = vmatprep.subr.bf16.mxu0 0
    %2765 = vmatpush1.bf16.msra.mxu0 0
    %2766 = vmatprep.subr.bf16.mxu0 0
    %2767 = vmatpush1.bf16.msra.mxu0 0
    %2768 = vmatprep.subr.bf16.mxu0 0
    %2769 = vmatpush1.bf16.msra.mxu0 0
    %2770 = vmatprep.subr.bf16.mxu0 0
    %2771 = vmatpush1.bf16.msra.mxu0 0
    %2772 = vmatprep.subr.bf16.mxu0 0
    %2773 = vmatpush1.bf16.msra.mxu0 0
    %2774 = vmatprep.subr.bf16.mxu0 0
    %2775 = vmatpush1.bf16.msra.mxu0 0
    %2776 = vmatprep.subr.bf16.mxu0 0
    %2777 = vmatpush1.bf16.msra.mxu0 0
    %2778 = vmatprep.mubr.bf16.mxu0 0
    %2779 = vmatmul.mubr.bf16.gmra.mrb[0].mxu0 %v2744
    %v2780 = vpop.f32.mrb[0].mxu0
    %v2781 = vadd.f32 %v154, %v2780
    %v2782 = vpop.f32.mrb[0].mxu0
    %v2783 = vpop.f32.mrb[0].mxu0
    %v2784 = vpop.f32.mrb[0].mxu0
    %2785 = vdwg.mxu0
    %v2786 = vtanh.pop %v2781
    %v2787 = vpack.c.bf16 %v2786, %v2786
    %v2789 = vsel %vm222, %v2787, 0
    %2791 = vmatprep.subr.bf16.mxu0 0
    %2792 = vmatpush1.bf16.msra.mxu0 %v80
    %2793 = vmatprep.subr.bf16.mxu0 0
    %2794 = vmatpush1.bf16.msra.mxu0 %v81
    %2795 = vmatprep.subr.bf16.mxu0 0
    %2796 = vmatpush1.bf16.msra.mxu0 0
    %2797 = vmatprep.subr.bf16.mxu0 0
    %2798 = vmatpush1.bf16.msra.mxu0 0
    %2799 = vmatprep.subr.bf16.mxu0 0
    %2800 = vmatpush1.bf16.msra.mxu0 0
    %2801 = vmatprep.subr.bf16.mxu0 0
    %2802 = vmatpush1.bf16.msra.mxu0 0
    %2803 = vmatprep.subr.bf16.mxu0 0
    %2804 = vmatpush1.bf16.msra.mxu0 0
    %2805 = vmatprep.subr.bf16.mxu0 0
    %2806 = vmatpush1.bf16.msra.mxu0 0
    %2807 = vmatprep.subr.bf16.mxu0 0
    %2808 = vmatpush1.bf16.msra.mxu0 0
    %2809 = vmatprep.subr.bf16.mxu0 0
    %2810 = vmatpush1.bf16.msra.mxu0 0
    %2811 = vmatprep.subr.bf16.mxu0 0
    %2812 = vmatpush1.bf16.msra.mxu0 0
    %2813 = vmatprep.subr.bf16.mxu0 0
    %2814 = vmatpush1.bf16.msra.mxu0 0
    %2815 = vmatprep.subr.bf16.mxu0 0
    %2816 = vmatpush1.bf16.msra.mxu0 0
    %2817 = vmatprep.subr.bf16.mxu0 0
    %2818 = vmatpush1.bf16.msra.mxu0 0
    %2819 = vmatprep.subr.bf16.mxu0 0
    %2820 = vmatpush1.bf16.msra.mxu0 0
    %2821 = vmatprep.subr.bf16.mxu0 0
    %2822 = vmatpush1.bf16.msra.mxu0 0
    %2823 = vmatprep.mubr.bf16.mxu0 0
    %2824 = vmatmul.mubr.bf16.gmra.mrb[0].mxu0 %v2789
    %v2825 = vpop.f32.mrb[0].mxu0
    %v2826 = vadd.f32 %v161, %v2825
    %v2827 = vpop.f32.mrb[0].mxu0
    %v2828 = vpop.f32.mrb[0].mxu0
    %v2829 = vpop.f32.mrb[0].mxu0
    %2830 = vdwg.mxu0
    %v2831 = vtanh.pop %v2826
    %v2832 = vpack.c.bf16 %v2831, %v2831
    %v2834 = vsel %vm222, %v2832, 0
    %2836 = vmatprep.subr.bf16.mxu0 0
    %2837 = vmatpush1.bf16.msra.mxu0 %v90
    %2838 = vmatprep.subr.bf16.mxu0 0
    %2839 = vmatpush1.bf16.msra.mxu0 %v91
    %2840 = vmatprep.subr.bf16.mxu0 0
    %2841 = vmatpush1.bf16.msra.mxu0 0
    %2842 = vmatprep.subr.bf16.mxu0 0
    %2843 = vmatpush1.bf16.msra.mxu0 0
    %2844 = vmatprep.subr.bf16.mxu0 0
    %2845 = vmatpush1.bf16.msra.mxu0 0
    %2846 = vmatprep.subr.bf16.mxu0 0
    %2847 = vmatpush1.bf16.msra.mxu0 0
    %2848 = vmatprep.subr.bf16.mxu0 0
    %2849 = vmatpush1.bf16.msra.mxu0 0
    %2850 = vmatprep.subr.bf16.mxu0 0
    %2851 = vmatpush1.bf16.msra.mxu0 0
    %2852 = vmatprep.subr.bf16.mxu0 0
    %2853 = vmatpush1.bf16.msra.mxu0 0
    %2854 = vmatprep.subr.bf16.mxu0 0
    %2855 = vmatpush1.bf16.msra.mxu0 0
    %2856 = vmatprep.subr.bf16.mxu0 0
    %2857 = vmatpush1.bf16.msra.mxu0 0
    %2858 = vmatprep.subr.bf16.mxu0 0
    %2859 = vmatpush1.bf16.msra.mxu0 0
    %2860 = vmatprep.subr.bf16.mxu0 0
    %2861 = vmatpush1.bf16.msra.mxu0 0
    %2862 = vmatprep.subr.bf16.mxu0 0
    %2863 = vmatpush1.bf16.msra.mxu0 0
    %2864 = vmatprep.subr.bf16.mxu0 0
    %2865 = vmatpush1.bf16.msra.mxu0 0
    %2866 = vmatprep.subr.bf16.mxu0 0
    %2867 = vmatpush1.bf16.msra.mxu0 0
    %2868 = vmatprep.mubr.bf16.mxu0 0
    %2869 = vmatmul.mubr.bf16.gmra.mrb[0].mxu0 %v2834
    %v2870 = vpop.f32.mrb[0].mxu0
    %v2871 = vadd.f32 %v169, %v2870
    %v2872 = vpop.f32.mrb[0].mxu0
    %v2873 = vpop.f32.mrb[0].mxu0
    %v2874 = vpop.f32.mrb[0].mxu0
    %2875 = vdwg.mxu0
    %v2876 = vadd.f32 %v2871, %v2696
    %v2877 = vpack.c.bf16 %v2876, %v2876
    %v2879 = vsel %vm172, %v2877, 0
    %2881 = vmatprep.subr.bf16.mxu0 0
    %2882 = vmatpush1.bf16.msra.mxu0 %v178
    %2883 = vmatprep.subr.bf16.mxu0 0
    %2884 = vmatpush1.bf16.msra.mxu0 0
    %2885 = vmatprep.subr.bf16.mxu0 0
    %2886 = vmatpush1.bf16.msra.mxu0 0
    %2887 = vmatprep.subr.bf16.mxu0 0
    %2888 = vmatpush1.bf16.msra.mxu0 0
    %2889 = vmatprep.subr.bf16.mxu0 0
    %2890 = vmatpush1.bf16.msra.mxu0 0
    %2891 = vmatprep.subr.bf16.mxu0 0
    %2892 = vmatpush1.bf16.msra.mxu0 0
    %2893 = vmatprep.subr.bf16.mxu0 0
    %2894 = vmatpush1.bf16.msra.mxu0 0
    %2895 = vmatprep.subr.bf16.mxu0 0
    %2896 = vmatpush1.bf16.msra.mxu0 0
    %2897 = vmatprep.subr.bf16.mxu0 0
    %2898 = vmatpush1.bf16.msra.mxu0 0
    %2899 = vmatprep.subr.bf16.mxu0 0
    %2900 = vmatpush1.bf16.msra.mxu0 0
    %2901 = vmatprep.subr.bf16.mxu0 0
    %2902 = vmatpush1.bf16.msra.mxu0 0
    %2903 = vmatprep.subr.bf16.mxu0 0
    %2904 = vmatpush1.bf16.msra.mxu0 0
    %2905 = vmatprep.subr.bf16.mxu0 0
    %2906 = vmatpush1.bf16.msra.mxu0 0
    %2907 = vmatprep.subr.bf16.mxu0 0
    %2908 = vmatpush1.bf16.msra.mxu0 0
    %2909 = vmatprep.subr.bf16.mxu0 0
    %2910 = vmatpush1.bf16.msra.mxu0 0
    %2911 = vmatprep.subr.bf16.mxu0 0
    %2912 = vmatpush1.bf16.msra.mxu0 0
    %2913 = vmatprep.mubr.bf16.mxu0 0
    %2914 = vmatmul.mubr.bf16.gmra.mrb[0].mxu0 %v2879
    %v2915 = vpop.f32.mrb[0].mxu0
    %v2916 = vadd.f32 %v144, %v2915
    %v2917 = vpop.f32.mrb[0].mxu0
    %v2918 = vpop.f32.mrb[0].mxu0
    %v2919 = vpop.f32.mrb[0].mxu0
    %2920 = vdwg.mxu0
    %v2921 = vtanh.pop %v2916
    %v2922 = vpack.c.bf16 %v2921, %v2921
    %v2924 = vsel %vm222, %v2922, 0
    %2926 = vmatprep.subr.bf16.mxu0 0
    %2927 = vmatpush1.bf16.msra.mxu0 %v74
    %2928 = vmatprep.subr.bf16.mxu0 0
    %2929 = vmatpush1.bf16.msra.mxu0 %v75
    %2930 = vmatprep.subr.bf16.mxu0 0
    %2931 = vmatpush1.bf16.msra.mxu0 0
    %2932 = vmatprep.subr.bf16.mxu0 0
    %2933 = vmatpush1.bf16.msra.mxu0 0
    %2934 = vmatprep.subr.bf16.mxu0 0
    %2935 = vmatpush1.bf16.msra.mxu0 0
    %2936 = vmatprep.subr.bf16.mxu0 0
    %2937 = vmatpush1.bf16.msra.mxu0 0
    %2938 = vmatprep.subr.bf16.mxu0 0
    %2939 = vmatpush1.bf16.msra.mxu0 0
    %2940 = vmatprep.subr.bf16.mxu0 0
    %2941 = vmatpush1.bf16.msra.mxu0 0
    %2942 = vmatprep.subr.bf16.mxu0 0
    %2943 = vmatpush1.bf16.msra.mxu0 0
    %2944 = vmatprep.subr.bf16.mxu0 0
    %2945 = vmatpush1.bf16.msra.mxu0 0
    %2946 = vmatprep.subr.bf16.mxu0 0
    %2947 = vmatpush1.bf16.msra.mxu0 0
    %2948 = vmatprep.subr.bf16.mxu0 0
    %2949 = vmatpush1.bf16.msra.mxu0 0
    %2950 = vmatprep.subr.bf16.mxu0 0
    %2951 = vmatpush1.bf16.msra.mxu0 0
    %2952 = vmatprep.subr.bf16.mxu0 0
    %2953 = vmatpush1.bf16.msra.mxu0 0
    %2954 = vmatprep.subr.bf16.mxu0 0
    %2955 = vmatpush1.bf16.msra.mxu0 0
    %2956 = vmatprep.subr.bf16.mxu0 0
    %2957 = vmatpush1.bf16.msra.mxu0 0
    %2958 = vmatprep.mubr.bf16.mxu0 0
    %2959 = vmatmul.mubr.bf16.gmra.mrb[0].mxu0 %v2924
    %v2960 = vpop.f32.mrb[0].mxu0
    %v2961 = vadd.f32 %v154, %v2960
    %v2962 = vpop.f32.mrb[0].mxu0
    %v2963 = vpop.f32.mrb[0].mxu0
    %v2964 = vpop.f32.mrb[0].mxu0
    %2965 = vdwg.mxu0
    %v2966 = vtanh.pop %v2961
    %v2967 = vpack.c.bf16 %v2966, %v2966
    %v2969 = vsel %vm222, %v2967, 0
    %2971 = vmatprep.subr.bf16.mxu0 0
    %2972 = vmatpush1.bf16.msra.mxu0 %v80
    %2973 = vmatprep.subr.bf16.mxu0 0
    %2974 = vmatpush1.bf16.msra.mxu0 %v81
    %2975 = vmatprep.subr.bf16.mxu0 0
    %2976 = vmatpush1.bf16.msra.mxu0 0
    %2977 = vmatprep.subr.bf16.mxu0 0
    %2978 = vmatpush1.bf16.msra.mxu0 0
    %2979 = vmatprep.subr.bf16.mxu0 0
    %2980 = vmatpush1.bf16.msra.mxu0 0
    %2981 = vmatprep.subr.bf16.mxu0 0
    %2982 = vmatpush1.bf16.msra.mxu0 0
    %2983 = vmatprep.subr.bf16.mxu0 0
    %2984 = vmatpush1.bf16.msra.mxu0 0
    %2985 = vmatprep.subr.bf16.mxu0 0
    %2986 = vmatpush1.bf16.msra.mxu0 0
    %2987 = vmatprep.subr.bf16.mxu0 0
    %2988 = vmatpush1.bf16.msra.mxu0 0
    %2989 = vmatprep.subr.bf16.mxu0 0
    %2990 = vmatpush1.bf16.msra.mxu0 0
    %2991 = vmatprep.subr.bf16.mxu0 0
    %2992 = vmatpush1.bf16.msra.mxu0 0
    %2993 = vmatprep.subr.bf16.mxu0 0
    %2994 = vmatpush1.bf16.msra.mxu0 0
    %2995 = vmatprep.subr.bf16.mxu0 0
    %2996 = vmatpush1.bf16.msra.mxu0 0
    %2997 = vmatprep.subr.bf16.mxu0 0
    %2998 = vmatpush1.bf16.msra.mxu0 0
    %2999 = vmatprep.subr.bf16.mxu0 0
    %3000 = vmatpush1.bf16.msra.mxu0 0
    %3001 = vmatprep.subr.bf16.mxu0 0
    %3002 = vmatpush1.bf16.msra.mxu0 0
    %3003 = vmatprep.mubr.bf16.mxu0 0
    %3004 = vmatmul.mubr.bf16.gmra.mrb[0].mxu0 %v2969
    %v3005 = vpop.f32.mrb[0].mxu0
    %v3006 = vadd.f32 %v161, %v3005
    %v3007 = vpop.f32.mrb[0].mxu0
    %v3008 = vpop.f32.mrb[0].mxu0
    %v3009 = vpop.f32.mrb[0].mxu0
    %3010 = vdwg.mxu0
    %v3011 = vtanh.pop %v3006
    %v3012 = vpack.c.bf16 %v3011, %v3011
    %v3014 = vsel %vm222, %v3012, 0
    %3016 = vmatprep.subr.bf16.mxu0 0
    %3017 = vmatpush1.bf16.msra.mxu0 %v90
    %3018 = vmatprep.subr.bf16.mxu0 0
    %3019 = vmatpush1.bf16.msra.mxu0 %v91
    %3020 = vmatprep.subr.bf16.mxu0 0
    %3021 = vmatpush1.bf16.msra.mxu0 0
    %3022 = vmatprep.subr.bf16.mxu0 0
    %3023 = vmatpush1.bf16.msra.mxu0 0
    %3024 = vmatprep.subr.bf16.mxu0 0
    %3025 = vmatpush1.bf16.msra.mxu0 0
    %3026 = vmatprep.subr.bf16.mxu0 0
    %3027 = vmatpush1.bf16.msra.mxu0 0
    %3028 = vmatprep.subr.bf16.mxu0 0
    %3029 = vmatpush1.bf16.msra.mxu0 0
    %3030 = vmatprep.subr.bf16.mxu0 0
    %3031 = vmatpush1.bf16.msra.mxu0 0
    %3032 = vmatprep.subr.bf16.mxu0 0
    %3033 = vmatpush1.bf16.msra.mxu0 0
    %3034 = vmatprep.subr.bf16.mxu0 0
    %3035 = vmatpush1.bf16.msra.mxu0 0
    %3036 = vmatprep.subr.bf16.mxu0 0
    %3037 = vmatpush1.bf16.msra.mxu0 0
    %3038 = vmatprep.subr.bf16.mxu0 0
    %3039 = vmatpush1.bf16.msra.mxu0 0
    %3040 = vmatprep.subr.bf16.mxu0 0
    %3041 = vmatpush1.bf16.msra.mxu0 0
    %3042 = vmatprep.subr.bf16.mxu0 0
    %3043 = vmatpush1.bf16.msra.mxu0 0
    %3044 = vmatprep.subr.bf16.mxu0 0
    %3045 = vmatpush1.bf16.msra.mxu0 0
    %3046 = vmatprep.subr.bf16.mxu0 0
    %3047 = vmatpush1.bf16.msra.mxu0 0
    %3048 = vmatprep.mubr.bf16.mxu0 0
    %3049 = vmatmul.mubr.bf16.gmra.mrb[0].mxu0 %v3014
    %v3050 = vpop.f32.mrb[0].mxu0
    %v3051 = vadd.f32 %v169, %v3050
    %v3052 = vpop.f32.mrb[0].mxu0
    %v3053 = vpop.f32.mrb[0].mxu0
    %v3054 = vpop.f32.mrb[0].mxu0
    %3055 = vdwg.mxu0
    %v3056 = vadd.f32 %v3051, %v2876
    %3057 = vst.msk [vmem:[#allocation7] sm:$0xff] %vm172, %v3056
    // Predicated region
    $region50: #{tpu_custom_call.1} parent=1 // pred_check
      _
    $region51: #{tpu_custom_call.1} parent=1 // pred_check_branch
      %3059 = sbr.rel (0) target = $region53
    $region52: #{tpu_custom_call.1} parent=1 // pred_region
      %s3061 = ssub.s32 128, 128
      %3062 = vsyncadd [#allocation4], %s3061
      %s3064 = sshll.u32 [#allocation7], 4
      %s3065 = int_to_ptr.vmem [resolvable:$true] %s3064
      %3067 = dma.vmem_to_hbm [thread:$0]  %s3065, 128, %s10, [#allocation4]
    $region53: #{tpu_custom_call.1} parent=1 // pred_fallthru
      _
    // Predicated region
    $region54: #{tpu_custom_call.1} parent=1 // pred_check
      _
    $region55: #{tpu_custom_call.1} parent=1 // pred_check_branch
      %3069 = sbr.rel (0) target = $region57
    $region56: #{tpu_custom_call.1} parent=1 // pred_region
      %3070 = dma.done [#allocation4], 128
    $region57: #{tpu_custom_call.1} parent=1 // pred_fallthru
      _
    %3071 = vsyncpa [#allocation3], 1
    %3072 = vsyncpa [#allocation6], 1
    %3073 = vsyncpa [#allocation4], 1

</llo_original>
